<compile_context>
chip_gen: v6e
topology: v6e:2x2x1
jax: 0.10.0
libtpu: 0.0.40
codegen_flags: <defaults>
</compile_context>

<pallas_src>
import functools

import jax
import jax.numpy as jnp
import numpy as np
from jax.experimental import pallas as pl
from jax.experimental.pallas import tpu as pltpu

_VMEM_LIMIT = 48 * 1024 * 1024   # sized for v7x (64 MiB physical); v5e/v6e have ample headroom
_EPS = 1e-24                     # squared-norm clamp == F.normalize(eps=1e-12) on the norm


def _l2norm(y):
    ss = jnp.sum(y * y, axis=-1, keepdims=True)
    return y * jax.lax.rsqrt(jnp.maximum(ss, _EPS))


# ----------------------------------------------------------------------------- kernels

def _encoder_kernel(p_ref, w_ref, b_ref, o_ref, *, hw_true, hw_chunk):
    """Stand-in encoder hot path for a block of images of one view.

    p_ref: (block_b, HW_pad, K) bf16   im2col patches (K = 9 taps * 2 channels)
    w_ref: (K, D) bf16                 conv weights in matmul form
    b_ref: (1, D) f32                  conv bias
    o_ref: (block_b, D) bf16           pooled features
    """
    block_b, hw_pad, kk = p_ref.shape
    d = o_ref.shape[-1]
    w = w_ref[...]
    bias = b_ref[...]
    rows = block_b * hw_chunk
    inv_hw = 1.0 / float(hw_true)
    n_chunks = hw_pad // hw_chunk

    # Hoisted iotas for the block-diagonal pooling matrix (built once, reused per chunk).
    b_idx = jax.lax.broadcasted_iota(jnp.int32, (block_b, rows), 0) * hw_chunk
    r_idx = jax.lax.broadcasted_iota(jnp.int32, (block_b, rows), 1)

    def body(ci, acc):
        off = pl.multiple_of(ci * hw_chunk, hw_chunk)
        pc = p_ref[:, pl.ds(off, hw_chunk), :]                       # (B, hc, K) bf16
        pc2 = pc.reshape(rows, kk)
        conv = jnp.dot(pc2, w, preferred_element_type=jnp.float32) + bias   # (rows, D) f32
        act = jnp.maximum(conv, 0.0)
        # Pooling matmul: block-diagonal (B, rows) with 1/hw on valid pixels, 0 on HW padding.
        valid = jnp.clip(hw_true - off, 0, hw_chunk)
        pool = jnp.where((r_idx >= b_idx) & (r_idx < b_idx + valid),
                         inv_hw, 0.0).astype(jnp.float32)
        # contraction = block_b*hw_chunk = 256 -> full MXU depth; rides MXU, frees VPU/XLU.
        return acc + jnp.dot(pool, act, preferred_element_type=jnp.float32)

    acc = jax.lax.fori_loop(0, n_chunks, body,
                            jnp.zeros((block_b, d), jnp.float32))
    o_ref[...] = acc.astype(o_ref.dtype)


def _heads_kernel(xm_ref, xj_ref, hw_ref, hb_ref, w1_ref, b1_ref,
                  g_ref, w2_ref, b2_ref, feat_ref, jig_out_ref, *, k):
    """Fused linear head + JigsawHead for one view (grid axis = view).

    xm_ref: (N, dim_in) bf16           main-batch encoder features
    xj_ref: (bsz, dim_in) bf16         jigsaw-patch encoder features (bsz = n_img * k)
    hw_ref/w1_ref: (dim_in, feat) bf16, hb_ref/b1_ref: (1, feat) f32
    g_ref : (k, n_img, bsz) bf16       one-hot gather matrices (shuffle + regroup)
    w2_ref: (k*feat, feat) bf16, b2_ref: (1, feat) f32
    feat_ref: (N, feat) f32, jig_out_ref: (n_img, feat) f32
    """
    # ---- linear head: Linear(dim_in, feat) + Normalize(2)
    y = jnp.dot(xm_ref[...], hw_ref[...],
                preferred_element_type=jnp.float32) + hb_ref[...]
    feat_ref[...] = _l2norm(y)

    # ---- jigsaw head: fc1 -> shuffle -> view(n_img, k*feat) -> fc2 -> Normalize(2)
    y1 = jnp.dot(xj_ref[...], w1_ref[...],
                 preferred_element_type=jnp.float32) + b1_ref[...]          # (bsz, feat)
    y1b = y1.astype(jnp.bfloat16)
    # Shuffle + regroup: k tiny one-hot gathers produce 128-wide lane-aligned column blocks.
    blocks = [jnp.dot(g_ref[j], y1b, preferred_element_type=jnp.float32)
              for j in range(k)]                                            # k x (n_img, feat)
    z = jnp.concatenate(blocks, axis=-1).astype(jnp.bfloat16)               # (n_img, k*feat)
    # Single fc2 matmul with contraction k*feat (=1152): full MXU depth.
    out = jnp.dot(z, w2_ref[...],
                  preferred_element_type=jnp.float32) + b2_ref[...]
    jig_out_ref[...] = _l2norm(out)


def _linear_head_kernel(x_ref, w_ref, b_ref, o_ref):
    """Linear + L2-normalize only (used for mode==1)."""
    y = jnp.dot(x_ref[...], w_ref[...],
                preferred_element_type=jnp.float32) + b_ref[...]
    o_ref[...] = _l2norm(y)


# ----------------------------------------------------------------------------- wrappers

def _im2col_3x3(x_nhwc):
    """3x3, stride 1, pad 1 patch extraction (wrapper glue, plain JAX)."""
    n, h, w, c = x_nhwc.shape
    xp = jnp.pad(x_nhwc, ((0, 0), (1, 1), (1, 1), (0, 0)))
    cols = [xp[:, dy:dy + h, dx:dx + w, :] for dy in range(3) for dx in range(3)]
    p = jnp.stack(cols, axis=3)                                   # (N, H, W, 9, C)
    return p.reshape(n, h * w, 9 * c)                             # (N, HW, 9C)


def encoder_forward(patches, enc_w, enc_b, *, block_b=16, hw_chunk=16):
    """Both views / all images (main + jigsaw) in ONE pallas_call.

    patches: (2, N_tot, HW, K) bf16 -> (2, N_tot, dim_in) bf16 features.
    """
    v, n_tot, hw, kk = patches.shape
    d = enc_w.shape[-1]
    n_pad = pl.cdiv(n_tot, block_b) * block_b
    hw_pad = pl.cdiv(hw, hw_chunk) * hw_chunk
    if (n_pad, hw_pad) != (n_tot, hw):
        patches = jnp.pad(patches,
                          ((0, 0), (0, n_pad - n_tot), (0, hw_pad - hw), (0, 0)))
    out = pl.pallas_call(
        functools.partial(_encoder_kernel, hw_true=hw, hw_chunk=hw_chunk),
        out_shape=jax.ShapeDtypeStruct((v, n_pad, d), jnp.bfloat16),
        grid=(v, n_pad // block_b),   # image-tile axis last -> weights stay VMEM-resident
        in_specs=[
            pl.BlockSpec((None, block_b, hw_pad, kk), lambda vi, ti: (vi, ti, 0, 0)),
            pl.BlockSpec((None, kk, d), lambda vi, ti: (vi, 0, 0)),
            pl.BlockSpec((None, 1, d), lambda vi, ti: (vi, 0, 0)),
        ],
        out_specs=pl.BlockSpec((None, block_b, d), lambda vi, ti: (vi, ti, 0)),
        compiler_params=pltpu.CompilerParams(
            dimension_semantics=("parallel", "parallel"),
            vmem_limit_bytes=_VMEM_LIMIT),
    )(patches, enc_w, enc_b)
    return out[:, :n_tot]


def heads_jigsaw_forward(feats_main, feats_jig, params):
    """head1/head2 + head1_jig/head2_jig fused into ONE pallas_call (grid over views)."""
    v, n, d_in = feats_main.shape
    _, bsz, _ = feats_jig.shape
    k = params["jig_g"].shape[1]
    n_img = bsz // k
    feat_dim = params["head_w"].shape[-1]

    def full(*dims):
        nd = len(dims)
        return pl.BlockSpec((None,) + dims, lambda vi, _nd=nd: (vi,) + (0,) * _nd)

    feat, feat_jig = pl.pallas_call(
        functools.partial(_heads_kernel, k=k),
        out_shape=(jax.ShapeDtypeStruct((v, n, feat_dim), jnp.float32),
                   jax.ShapeDtypeStruct((v, n_img, feat_dim), jnp.float32)),
        grid=(v,),
        in_specs=[
            full(n, d_in), full(bsz, d_in),
            full(d_in, feat_dim), full(1, feat_dim),          # linear head
            full(d_in, feat_dim), full(1, feat_dim),          # jigsaw fc1
            full(k, n_img, bsz),                              # one-hot shuffle (bf16)
            full(k * feat_dim, feat_dim), full(1, feat_dim),  # jigsaw fc2 (flat)
        ],
        out_specs=(full(n, feat_dim), full(n_img, feat_dim)),
        compiler_params=pltpu.CompilerParams(
            dimension_semantics=("parallel",),
            vmem_limit_bytes=_VMEM_LIMIT),
    )(feats_main, feats_jig,
      params["head_w"], params["head_b"],
      params["jig_w1"], params["jig_b1"], params["jig_g"],
      params["jig_w2"], params["jig_b2"])
    return feat, feat_jig


def linear_heads_forward(feats, w, b):
    """mode==1 path: linear heads only, both views in one call."""
    v, n, d_in = feats.shape
    feat_dim = w.shape[-1]
    return pl.pallas_call(
        _linear_head_kernel,
        out_shape=jax.ShapeDtypeStruct((v, n, feat_dim), jnp.float32),
        grid=(v,),
        in_specs=[pl.BlockSpec((None, n, d_in), lambda vi: (vi, 0, 0)),
                  pl.BlockSpec((None, d_in, feat_dim), lambda vi: (vi, 0, 0)),
                  pl.BlockSpec((None, 1, feat_dim), lambda vi: (vi, 0, 0))],
        out_specs=pl.BlockSpec((None, n, feat_dim), lambda vi: (vi, 0, 0)),
        compiler_params=pltpu.CompilerParams(
            dimension_semantics=("parallel",),
            vmem_limit_bytes=_VMEM_LIMIT),
    )(feats, w, b)


def _pad_to_2ch(x_1ch):
    return jnp.concatenate([x_1ch, jnp.zeros_like(x_1ch)], axis=1)


def cmc_multiheads_forward(params, x, x_jig=None, mode=0):
    """Faithful port of CMCMultiHeads.forward (mode must be static)."""
    n = x.shape[0]
    x1 = _pad_to_2ch(x[:, 0:1])                 # split([1, 2], dim=1); view0 channel-padded
    x2 = x[:, 1:3]
    if mode == 0:
        n_jig = x_jig.shape[0]
        xj1 = _pad_to_2ch(x_jig[:, 0:1])
        xj2 = x_jig[:, 1:3]
        v0 = jnp.concatenate([x1, xj1], axis=0)  # main + jigsaw share one encoder call
        v1 = jnp.concatenate([x2, xj2], axis=0)
    else:
        v0, v1 = x1, x2

    p0 = _im2col_3x3(jnp.transpose(v0, (0, 2, 3, 1)).astype(jnp.float32))
    p1 = _im2col_3x3(jnp.transpose(v1, (0, 2, 3, 1)).astype(jnp.float32))
    patches = jnp.stack([p0, p1], axis=0).astype(jnp.bfloat16)   # (2, N_tot, HW, 18)

    enc = encoder_forward(patches, params["enc_w"], params["enc_b"])   # (2, N_tot, dim_in) bf16
    feats_main = enc[:, :n]

    if mode == 0:
        feats_jig = enc[:, n:n + n_jig]
        h, hj = heads_jigsaw_forward(feats_main, feats_jig, params)
        feat = jnp.concatenate([h[0], h[1]], axis=1)
        feat_jig = jnp.concatenate([hj[0], hj[1]], axis=1)
        return feat, feat_jig
    elif mode == 1:
        h = linear_heads_forward(feats_main, params["head_w"], params["head_b"])
        return jnp.concatenate([h[0], h[1]], axis=1)
    else:
        return jnp.concatenate([feats_main[0], feats_main[1]], axis=1).astype(jnp.float32)


# ----------------------------------------------------------------------------- params

def _uniform(key, shape, fan_in):
    bound = 1.0 / np.sqrt(fan_in)
    return jax.random.uniform(key, shape, jnp.float32, -bound, bound)


def _make_gather_onehot(key, n_img, k):
    """One-hot matrices G[j, i, src]=1 encoding y_shuffled[i*k+j] = y[i*k + perm_i[j]]."""
    g = np.zeros((k, n_img, n_img * k), np.float32)
    for i in range(n_img):
        key, sub = jax.random.split(key)
        perm = np.asarray(jax.random.permutation(sub, k)) + i * k
        for j in range(k):
            g[j, i, perm[j]] = 1.0
    return jnp.asarray(g)


def init_params(key, *, dim_in, feat_dim, jig_bsz, k=9):
    n_img = jig_bsz // k
    ks = jax.random.split(key, 16)
    # stand-in encoders: 3x3 conv weights (im2col form); view0 channel-padded 1 -> 2 with zeros
    enc_w, enc_b = [], []
    for v, in_ch in enumerate((1, 2)):
        fan_in = 9 * in_ch
        w = _uniform(ks[2 * v], (9, in_ch, dim_in), fan_in)
        if in_ch < 2:
            w = jnp.pad(w, ((0, 0), (0, 2 - in_ch), (0, 0)))
        enc_w.append(w.reshape(9 * 2, dim_in))
        enc_b.append(_uniform(ks[2 * v + 1], (1, dim_in), fan_in))
    # linear heads: Linear(dim_in, feat_dim) + Normalize(2)
    head_w = [_uniform(ks[4 + v], (dim_in, feat_dim), dim_in) for v in range(2)]
    head_b = [_uniform(ks[6 + v], (1, feat_dim), dim_in) for v in range(2)]
    # jigsaw heads: fc1 Linear(dim_in, feat_dim); fc2 Linear(k*feat_dim, feat_dim); Normalize(2)
    jig_w1 = [_uniform(ks[8 + v], (dim_in, feat_dim), dim_in) for v in range(2)]
    jig_b1 = [_uniform(ks[10 + v], (1, feat_dim), dim_in) for v in range(2)]
    jig_w2 = [_uniform(ks[12 + v], (k * feat_dim, feat_dim), k * feat_dim) for v in range(2)]
    jig_b2 = [_uniform(ks[14 + v], (1, feat_dim), k * feat_dim) for v in range(2)]
    jig_g = [_make_gather_onehot(jax.random.fold_in(key, 100 + v), n_img, k) for v in range(2)]

    stack = lambda xs, dt: jnp.stack(xs, axis=0).astype(dt)
    return {
        "enc_w": stack(enc_w, jnp.bfloat16), "enc_b": stack(enc_b, jnp.float32),
        "head_w": stack(head_w, jnp.bfloat16), "head_b": stack(head_b, jnp.float32),
        "jig_w1": stack(jig_w1, jnp.bfloat16), "jig_b1": stack(jig_b1, jnp.float32),
        "jig_w2": stack(jig_w2, jnp.bfloat16), "jig_b2": stack(jig_b2, jnp.float32),
        "jig_g": stack(jig_g, jnp.bfloat16),   # 0/1 exact in bf16; halves gather DMA
    }


# ----------------------------------------------------------------------------- main

if __name__ == "__main__":
    # name='resnet50' -> width=0.5 -> dim_in = int(2048 * 0.5) = 1024 ; head='linear' ; feat_dim=128
    DIM_IN, FEAT_DIM, K = 1024, 128, 9
    N, H, W = 2, 16, 16
    JIG_BSZ = N * K  # 18 jigsaw patches

    key = jax.random.PRNGKey(0)
    k_x, k_xj, k_p = jax.random.split(key, 3)
    x = jax.random.normal(k_x, (N, 3, H, W), jnp.float32)
    x_jig = jax.random.normal(k_xj, (JIG_BSZ, 3, H, W), jnp.float32)

    params = init_params(k_p, dim_in=DIM_IN, feat_dim=FEAT_DIM, jig_bsz=JIG_BSZ, k=K)

    fwd = jax.jit(cmc_multiheads_forward, static_argnames=("mode",))
    feat, feat_jig = fwd(params, x, x_jig, mode=0)
    jax.block_until_ready((feat, feat_jig))

    assert feat.shape == (N, 2 * FEAT_DIM), feat.shape
    assert feat_jig.shape == (JIG_BSZ // K, 2 * FEAT_DIM), feat_jig.shape
    # rows of each half are L2-normalized -> full row norm ~ sqrt(2)
    assert np.allclose(np.linalg.norm(np.asarray(feat), axis=1), np.sqrt(2.0), atol=1e-3)
    assert np.allclose(np.linalg.norm(np.asarray(feat_jig), axis=1), np.sqrt(2.0), atol=1e-3)

    print("KERNEL_OK")
</pallas_src>

<mosaic_0001>
module attributes {stable_mosaic.version = 11 : i64} {
  func.func @_encoder_kernel(%arg0: i32, %arg1: i32, %arg2: memref<1x16x256x18xbf16, #tpu.memory_space<vmem>>, %arg3: memref<1x18x1024xbf16, #tpu.memory_space<vmem>>, %arg4: memref<1x1x1024xf32, #tpu.memory_space<vmem>>, %arg5: memref<1x16x1024xbf16, #tpu.memory_space<vmem>>) attributes {dimension_semantics = [#tpu.dimension_semantics<parallel>, #tpu.dimension_semantics<parallel>], iteration_bounds = array<i64: 2, 2>, scalar_prefetch = 0 : i64, scratch_operands = 0 : i64, tpu.core_type = #tpu.core_type<tc>, window_params = [{transform_indices = @transform_0, window_bounds = array<i64: 1, 16, 256, 18>}, {transform_indices = @transform_1, window_bounds = array<i64: 1, 18, 1024>}, {transform_indices = @transform_2, window_bounds = array<i64: 1, 1, 1024>}, {transform_indices = @transform_3, window_bounds = array<i64: 1, 16, 1024>}]} {
    %c0 = arith.constant 0 : index
    %c0_0 = arith.constant 0 : index
    %c0_1 = arith.constant 0 : index
    %0 = vector.load %arg3[%c0, %c0_0, %c0_1] : memref<1x18x1024xbf16, #tpu.memory_space<vmem>>, vector<1x18x1024xbf16>
    %1 = vector.shape_cast %0 : vector<1x18x1024xbf16> to vector<18x1024xbf16>
    %c0_2 = arith.constant 0 : index
    %c0_3 = arith.constant 0 : index
    %c0_4 = arith.constant 0 : index
    %2 = vector.load %arg4[%c0_2, %c0_3, %c0_4] : memref<1x1x1024xf32, #tpu.memory_space<vmem>>, vector<1x1x1024xf32>
    %3 = vector.shape_cast %2 : vector<1x1x1024xf32> to vector<1x1024xf32>
    %4 = tpu.iota {dimensions = array<i32: 0>} : vector<16x256xi32>
    %c16_i32 = arith.constant 16 : i32
    %5 = vector.broadcast %c16_i32 : i32 to vector<16x256xi32>
    %6 = arith.muli %4, %5 : vector<16x256xi32>
    %7 = tpu.iota {dimensions = array<i32: 1>} : vector<16x256xi32>
    %cst = arith.constant 0.000000e+00 : f32
    %8 = vector.broadcast %cst : f32 to vector<16x1024xf32>
    %c0_i32 = arith.constant 0 : i32
    %c16_i32_5 = arith.constant 16 : i32
    %9 = arith.addi %c0_i32, %c16_i32_5 : i32
    %c1_i32 = arith.constant 1 : i32
    %10 = scf.for %arg6 = %c0_i32 to %9 step %c1_i32 iter_args(%arg7 = %8) -> (vector<16x1024xf32>)  : i32 {
      %c16_i32_10 = arith.constant 16 : i32
      %15 = arith.muli %arg6, %c16_i32_10 : i32
      %16 = tpu.assume_multiple %15, 16 : i32
      %c0_11 = arith.constant 0 : index
      %c0_12 = arith.constant 0 : index
      %17 = arith.index_cast %16 : i32 to index
      %c0_13 = arith.constant 0 : index
      %18 = vector.load %arg2[%c0_11, %c0_12, %17, %c0_13] : memref<1x16x256x18xbf16, #tpu.memory_space<vmem>>, vector<1x16x16x18xbf16>
      %19 = vector.shape_cast %18 : vector<1x16x16x18xbf16> to vector<16x16x18xbf16>
      %20 = vector.shape_cast %19 : vector<16x16x18xbf16> to vector<256x18xbf16>
      %cst_14 = arith.constant dense<0.000000e+00> : vector<256x1024xf32>
      %21 = tpu.matmul %20, %1, %cst_14 {dimension_numbers = #tpu.dot_dimension_numbers<[1], [0], [0], [1], [0, 0, 1, 1], [], []>} : vector<256x18xbf16>, vector<18x1024xbf16>, vector<256x1024xf32> -> vector<256x1024xf32>
      %22 = vector.broadcast %3 : vector<1x1024xf32> to vector<256x1024xf32>
      %23 = arith.addf %21, %22 : vector<256x1024xf32>
      %cst_15 = arith.constant 0.000000e+00 : f32
      %24 = vector.broadcast %cst_15 : f32 to vector<256x1024xf32>
      %25 = arith.maximumf %23, %24 : vector<256x1024xf32>
      %c256_i32 = arith.constant 256 : i32
      %26 = arith.subi %c256_i32, %16 : i32
      %c0_i32_16 = arith.constant 0 : i32
      %c16_i32_17 = arith.constant 16 : i32
      %27 = arith.maxsi %c0_i32_16, %26 : i32
      %28 = arith.minsi %c16_i32_17, %27 : i32
      %29 = arith.cmpi sge, %7, %6 : vector<16x256xi32>
      %30 = vector.broadcast %28 : i32 to vector<16x256xi32>
      %31 = arith.addi %6, %30 : vector<16x256xi32>
      %32 = arith.cmpi slt, %7, %31 : vector<16x256xi32>
      %33 = arith.andi %29, %32 : vector<16x256xi1>
      %cst_18 = arith.constant 3.906250e-03 : f32
      %cst_19 = arith.constant 0.000000e+00 : f32
      %34 = vector.broadcast %cst_18 : f32 to vector<16x256xf32>
      %35 = vector.broadcast %cst_19 : f32 to vector<16x256xf32>
      %36 = arith.select %33, %34, %35 : vector<16x256xi1>, vector<16x256xf32>
      %cst_20 = arith.constant dense<0.000000e+00> : vector<16x1024xf32>
      %37 = tpu.matmul %36, %25, %cst_20 {dimension_numbers = #tpu.dot_dimension_numbers<[1], [0], [0], [1], [0, 0, 1, 1], [], []>} : vector<16x256xf32>, vector<256x1024xf32>, vector<16x1024xf32> -> vector<16x1024xf32>
      %38 = arith.addf %arg7, %37 : vector<16x1024xf32>
      scf.yield %38 : vector<16x1024xf32>
    }
    %c16_i32_6 = arith.constant 16 : i32
    %11 = arith.truncf %10 : vector<16x1024xf32> to vector<16x1024xbf16>
    %c0_7 = arith.constant 0 : index
    %c0_8 = arith.constant 0 : index
    %c0_9 = arith.constant 0 : index
    %12 = vector.load %arg5[%c0_7, %c0_8, %c0_9] : memref<1x16x1024xbf16, #tpu.memory_space<vmem>>, vector<1x16x1024xbf16>
    %13 = vector.shape_cast %12 : vector<1x16x1024xbf16> to vector<16x1024xbf16>
    %14 = vector.shape_cast %11 : vector<16x1024xbf16> to vector<1x16x1024xbf16>
    tpu.vector_store %arg5[%c0_7, %c0_8, %c0_9], %14 {strides = array<i32>} : memref<1x16x1024xbf16, #tpu.memory_space<vmem>>, vector<1x16x1024xbf16>,
    return
  }
  func.func @transform_0(%arg0: i32, %arg1: i32) -> (i32, i32, i32, i32) {
    %c0_i32 = arith.constant 0 : i32
    %c0_i32_0 = arith.constant 0 : i32
    %c0_i32_1 = arith.constant 0 : i32
    return %arg0, %arg1, %c0_i32, %c0_i32_0 : i32, i32, i32, i32
  }
  func.func @transform_1(%arg0: i32, %arg1: i32) -> (i32, i32, i32) {
    %c0_i32 = arith.constant 0 : i32
    %c0_i32_0 = arith.constant 0 : i32
    %c0_i32_1 = arith.constant 0 : i32
    return %arg0, %c0_i32, %c0_i32_0 : i32, i32, i32
  }
  func.func @transform_2(%arg0: i32, %arg1: i32) -> (i32, i32, i32) {
    %c0_i32 = arith.constant 0 : i32
    %c0_i32_0 = arith.constant 0 : i32
    %c0_i32_1 = arith.constant 0 : i32
    return %arg0, %c0_i32, %c0_i32_0 : i32, i32, i32
  }
  func.func @transform_3(%arg0: i32, %arg1: i32) -> (i32, i32, i32) {
    %c0_i32 = arith.constant 0 : i32
    %c0_i32_0 = arith.constant 0 : i32
    return %arg0, %arg1, %c0_i32 : i32, i32, i32
  }
}

module attributes {stable_mosaic.version = 11 : i64} {
  func.func @_heads_kernel(%arg0: i32, %arg1: memref<1x2x1024xbf16, #tpu.memory_space<vmem>>, %arg2: memref<1x18x1024xbf16, #tpu.memory_space<vmem>>, %arg3: memref<1x1024x128xbf16, #tpu.memory_space<vmem>>, %arg4: memref<1x1x128xf32, #tpu.memory_space<vmem>>, %arg5: memref<1x1024x128xbf16, #tpu.memory_space<vmem>>, %arg6: memref<1x1x128xf32, #tpu.memory_space<vmem>>, %arg7: memref<1x9x2x18xbf16, #tpu.memory_space<vmem>>, %arg8: memref<1x1152x128xbf16, #tpu.memory_space<vmem>>, %arg9: memref<1x1x128xf32, #tpu.memory_space<vmem>>, %arg10: memref<1x2x128xf32, #tpu.memory_space<vmem>>, %arg11: memref<1x2x128xf32, #tpu.memory_space<vmem>>) attributes {dimension_semantics = [#tpu.dimension_semantics<parallel>], iteration_bounds = array<i64: 2>, scalar_prefetch = 0 : i64, scratch_operands = 0 : i64, tpu.core_type = #tpu.core_type<tc>, window_params = [{transform_indices = @transform_0, window_bounds = array<i64: 1, 2, 1024>}, {transform_indices = @transform_1, window_bounds = array<i64: 1, 18, 1024>}, {transform_indices = @transform_2, window_bounds = array<i64: 1, 1024, 128>}, {transform_indices = @transform_3, window_bounds = array<i64: 1, 1, 128>}, {transform_indices = @transform_4, window_bounds = array<i64: 1, 1024, 128>}, {transform_indices = @transform_5, window_bounds = array<i64: 1, 1, 128>}, {transform_indices = @transform_6, window_bounds = array<i64: 1, 9, 2, 18>}, {transform_indices = @transform_7, window_bounds = array<i64: 1, 1152, 128>}, {transform_indices = @transform_8, window_bounds = array<i64: 1, 1, 128>}, {transform_indices = @transform_9, window_bounds = array<i64: 1, 2, 128>}, {transform_indices = @transform_10, window_bounds = array<i64: 1, 2, 128>}]} {
    %c0 = arith.constant 0 : index
    %c0_0 = arith.constant 0 : index
    %c0_1 = arith.constant 0 : index
    %0 = vector.load %arg1[%c0, %c0_0, %c0_1] : memref<1x2x1024xbf16, #tpu.memory_space<vmem>>, vector<1x2x1024xbf16>
    %1 = vector.shape_cast %0 : vector<1x2x1024xbf16> to vector<2x1024xbf16>
    %c0_2 = arith.constant 0 : index
    %c0_3 = arith.constant 0 : index
    %c0_4 = arith.constant 0 : index
    %2 = vector.load %arg3[%c0_2, %c0_3, %c0_4] : memref<1x1024x128xbf16, #tpu.memory_space<vmem>>, vector<1x1024x128xbf16>
    %3 = vector.shape_cast %2 : vector<1x1024x128xbf16> to vector<1024x128xbf16>
    %cst = arith.constant dense<0.000000e+00> : vector<2x128xf32>
    %4 = tpu.matmul %1, %3, %cst {dimension_numbers = #tpu.dot_dimension_numbers<[1], [0], [0], [1], [0, 0, 1, 1], [], []>} : vector<2x1024xbf16>, vector<1024x128xbf16>, vector<2x128xf32> -> vector<2x128xf32>
    %c0_5 = arith.constant 0 : index
    %c0_6 = arith.constant 0 : index
    %c0_7 = arith.constant 0 : index
    %5 = vector.load %arg4[%c0_5, %c0_6, %c0_7] : memref<1x1x128xf32, #tpu.memory_space<vmem>>, vector<1x1x128xf32>
    %6 = vector.shape_cast %5 : vector<1x1x128xf32> to vector<1x128xf32>
    %7 = vector.broadcast %6 : vector<1x128xf32> to vector<2x128xf32>
    %8 = arith.addf %4, %7 : vector<2x128xf32>
    %9 = arith.mulf %8, %8 : vector<2x128xf32>
    %cst_8 = arith.constant dense<0.000000e+00> : vector<2xf32>
    %10 = vector.multi_reduction <add>, %9, %cst_8 [1] : vector<2x128xf32> to vector<2xf32>
    %11 = vector.shape_cast %10 : vector<2xf32> to vector<2x1xf32>
    %cst_9 = arith.constant 1.000000e-24 : f32
    %12 = vector.broadcast %cst_9 : f32 to vector<2x1xf32>
    %13 = arith.maximumf %11, %12 : vector<2x1xf32>
    %14 = math.rsqrt %13 : vector<2x1xf32>
    %15 = vector.broadcast %14 : vector<2x1xf32> to vector<2x128xf32>
    %16 = arith.mulf %8, %15 : vector<2x128xf32>
    %c0_10 = arith.constant 0 : index
    %c0_11 = arith.constant 0 : index
    %c0_12 = arith.constant 0 : index
    %17 = vector.load %arg10[%c0_10, %c0_11, %c0_12] : memref<1x2x128xf32, #tpu.memory_space<vmem>>, vector<1x2x128xf32>
    %18 = vector.shape_cast %17 : vector<1x2x128xf32> to vector<2x128xf32>
    %19 = vector.shape_cast %16 : vector<2x128xf32> to vector<1x2x128xf32>
    tpu.vector_store %arg10[%c0_10, %c0_11, %c0_12], %19 {strides = array<i32>} : memref<1x2x128xf32, #tpu.memory_space<vmem>>, vector<1x2x128xf32>,
    %c0_13 = arith.constant 0 : index
    %c0_14 = arith.constant 0 : index
    %c0_15 = arith.constant 0 : index
    %20 = vector.load %arg2[%c0_13, %c0_14, %c0_15] : memref<1x18x1024xbf16, #tpu.memory_space<vmem>>, vector<1x18x1024xbf16>
    %21 = vector.shape_cast %20 : vector<1x18x1024xbf16> to vector<18x1024xbf16>
    %c0_16 = arith.constant 0 : index
    %c0_17 = arith.constant 0 : index
    %c0_18 = arith.constant 0 : index
    %22 = vector.load %arg5[%c0_16, %c0_17, %c0_18] : memref<1x1024x128xbf16, #tpu.memory_space<vmem>>, vector<1x1024x128xbf16>
    %23 = vector.shape_cast %22 : vector<1x1024x128xbf16> to vector<1024x128xbf16>
    %cst_19 = arith.constant dense<0.000000e+00> : vector<18x128xf32>
    %24 = tpu.matmul %21, %23, %cst_19 {dimension_numbers = #tpu.dot_dimension_numbers<[1], [0], [0], [1], [0, 0, 1, 1], [], []>} : vector<18x1024xbf16>, vector<1024x128xbf16>, vector<18x128xf32> -> vector<18x128xf32>
    %c0_20 = arith.constant 0 : index
    %c0_21 = arith.constant 0 : index
    %c0_22 = arith.constant 0 : index
    %25 = vector.load %arg6[%c0_20, %c0_21, %c0_22] : memref<1x1x128xf32, #tpu.memory_space<vmem>>, vector<1x1x128xf32>
    %26 = vector.shape_cast %25 : vector<1x1x128xf32> to vector<1x128xf32>
    %27 = vector.broadcast %26 : vector<1x128xf32> to vector<18x128xf32>
    %28 = arith.addf %24, %27 : vector<18x128xf32>
    %29 = arith.truncf %28 : vector<18x128xf32> to vector<18x128xbf16>
    %c0_23 = arith.constant 0 : index
    %c0_24 = arith.constant 0 : index
    %c0_25 = arith.constant 0 : index
    %c0_26 = arith.constant 0 : index
    %30 = vector.load %arg7[%c0_23, %c0_24, %c0_25, %c0_26] : memref<1x9x2x18xbf16, #tpu.memory_space<vmem>>, vector<1x1x2x18xbf16>
    %31 = vector.shape_cast %30 : vector<1x1x2x18xbf16> to vector<2x18xbf16>
    %cst_27 = arith.constant dense<0.000000e+00> : vector<2x128xf32>
    %32 = tpu.matmul %31, %29, %cst_27 {dimension_numbers = #tpu.dot_dimension_numbers<[1], [0], [0], [1], [0, 0, 1, 1], [], []>} : vector<2x18xbf16>, vector<18x128xbf16>, vector<2x128xf32> -> vector<2x128xf32>
    %c0_28 = arith.constant 0 : index
    %c1 = arith.constant 1 : index
    %c0_29 = arith.constant 0 : index
    %c0_30 = arith.constant 0 : index
    %33 = vector.load %arg7[%c0_28, %c1, %c0_29, %c0_30] : memref<1x9x2x18xbf16, #tpu.memory_space<vmem>>, vector<1x1x2x18xbf16>
    %34 = vector.shape_cast %33 : vector<1x1x2x18xbf16> to vector<2x18xbf16>
    %cst_31 = arith.constant dense<0.000000e+00> : vector<2x128xf32>
    %35 = tpu.matmul %34, %29, %cst_31 {dimension_numbers = #tpu.dot_dimension_numbers<[1], [0], [0], [1], [0, 0, 1, 1], [], []>} : vector<2x18xbf16>, vector<18x128xbf16>, vector<2x128xf32> -> vector<2x128xf32>
    %c0_32 = arith.constant 0 : index
    %c2 = arith.constant 2 : index
    %c0_33 = arith.constant 0 : index
    %c0_34 = arith.constant 0 : index
    %36 = vector.load %arg7[%c0_32, %c2, %c0_33, %c0_34] : memref<1x9x2x18xbf16, #tpu.memory_space<vmem>>, vector<1x1x2x18xbf16>
    %37 = vector.shape_cast %36 : vector<1x1x2x18xbf16> to vector<2x18xbf16>
    %cst_35 = arith.constant dense<0.000000e+00> : vector<2x128xf32>
    %38 = tpu.matmul %37, %29, %cst_35 {dimension_numbers = #tpu.dot_dimension_numbers<[1], [0], [0], [1], [0, 0, 1, 1], [], []>} : vector<2x18xbf16>, vector<18x128xbf16>, vector<2x128xf32> -> vector<2x128xf32>
    %c0_36 = arith.constant 0 : index
    %c3 = arith.constant 3 : index
    %c0_37 = arith.constant 0 : index
    %c0_38 = arith.constant 0 : index
    %39 = vector.load %arg7[%c0_36, %c3, %c0_37, %c0_38] : memref<1x9x2x18xbf16, #tpu.memory_space<vmem>>, vector<1x1x2x18xbf16>
    %40 = vector.shape_cast %39 : vector<1x1x2x18xbf16> to vector<2x18xbf16>
    %cst_39 = arith.constant dense<0.000000e+00> : vector<2x128xf32>
    %41 = tpu.matmul %40, %29, %cst_39 {dimension_numbers = #tpu.dot_dimension_numbers<[1], [0], [0], [1], [0, 0, 1, 1], [], []>} : vector<2x18xbf16>, vector<18x128xbf16>, vector<2x128xf32> -> vector<2x128xf32>
    %c0_40 = arith.constant 0 : index
    %c4 = arith.constant 4 : index
    %c0_41 = arith.constant 0 : index
    %c0_42 = arith.constant 0 : index
    %42 = vector.load %arg7[%c0_40, %c4, %c0_41, %c0_42] : memref<1x9x2x18xbf16, #tpu.memory_space<vmem>>, vector<1x1x2x18xbf16>
    %43 = vector.shape_cast %42 : vector<1x1x2x18xbf16> to vector<2x18xbf16>
    %cst_43 = arith.constant dense<0.000000e+00> : vector<2x128xf32>
    %44 = tpu.matmul %43, %29, %cst_43 {dimension_numbers = #tpu.dot_dimension_numbers<[1], [0], [0], [1], [0, 0, 1, 1], [], []>} : vector<2x18xbf16>, vector<18x128xbf16>, vector<2x128xf32> -> vector<2x128xf32>
    %c0_44 = arith.constant 0 : index
    %c5 = arith.constant 5 : index
    %c0_45 = arith.constant 0 : index
    %c0_46 = arith.constant 0 : index
    %45 = vector.load %arg7[%c0_44, %c5, %c0_45, %c0_46] : memref<1x9x2x18xbf16, #tpu.memory_space<vmem>>, vector<1x1x2x18xbf16>
    %46 = vector.shape_cast %45 : vector<1x1x2x18xbf16> to vector<2x18xbf16>
    %cst_47 = arith.constant dense<0.000000e+00> : vector<2x128xf32>
    %47 = tpu.matmul %46, %29, %cst_47 {dimension_numbers = #tpu.dot_dimension_numbers<[1], [0], [0], [1], [0, 0, 1, 1], [], []>} : vector<2x18xbf16>, vector<18x128xbf16>, vector<2x128xf32> -> vector<2x128xf32>
    %c0_48 = arith.constant 0 : index
    %c6 = arith.constant 6 : index
    %c0_49 = arith.constant 0 : index
    %c0_50 = arith.constant 0 : index
    %48 = vector.load %arg7[%c0_48, %c6, %c0_49, %c0_50] : memref<1x9x2x18xbf16, #tpu.memory_space<vmem>>, vector<1x1x2x18xbf16>
    %49 = vector.shape_cast %48 : vector<1x1x2x18xbf16> to vector<2x18xbf16>
    %cst_51 = arith.constant dense<0.000000e+00> : vector<2x128xf32>
    %50 = tpu.matmul %49, %29, %cst_51 {dimension_numbers = #tpu.dot_dimension_numbers<[1], [0], [0], [1], [0, 0, 1, 1], [], []>} : vector<2x18xbf16>, vector<18x128xbf16>, vector<2x128xf32> -> vector<2x128xf32>
    %c0_52 = arith.constant 0 : index
    %c7 = arith.constant 7 : index
    %c0_53 = arith.constant 0 : index
    %c0_54 = arith.constant 0 : index
    %51 = vector.load %arg7[%c0_52, %c7, %c0_53, %c0_54] : memref<1x9x2x18xbf16, #tpu.memory_space<vmem>>, vector<1x1x2x18xbf16>
    %52 = vector.shape_cast %51 : vector<1x1x2x18xbf16> to vector<2x18xbf16>
    %cst_55 = arith.constant dense<0.000000e+00> : vector<2x128xf32>
    %53 = tpu.matmul %52, %29, %cst_55 {dimension_numbers = #tpu.dot_dimension_numbers<[1], [0], [0], [1], [0, 0, 1, 1], [], []>} : vector<2x18xbf16>, vector<18x128xbf16>, vector<2x128xf32> -> vector<2x128xf32>
    %c0_56 = arith.constant 0 : index
    %c8 = arith.constant 8 : index
    %c0_57 = arith.constant 0 : index
    %c0_58 = arith.constant 0 : index
    %54 = vector.load %arg7[%c0_56, %c8, %c0_57, %c0_58] : memref<1x9x2x18xbf16, #tpu.memory_space<vmem>>, vector<1x1x2x18xbf16>
    %55 = vector.shape_cast %54 : vector<1x1x2x18xbf16> to vector<2x18xbf16>
    %cst_59 = arith.constant dense<0.000000e+00> : vector<2x128xf32>
    %56 = tpu.matmul %55, %29, %cst_59 {dimension_numbers = #tpu.dot_dimension_numbers<[1], [0], [0], [1], [0, 0, 1, 1], [], []>} : vector<2x18xbf16>, vector<18x128xbf16>, vector<2x128xf32> -> vector<2x128xf32>
    %57 = tpu.concatenate %32, %35, %38, %41, %44, %47, %50, %53, %56 in 1 : vector<2x128xf32>, vector<2x128xf32>, vector<2x128xf32>, vector<2x128xf32>, vector<2x128xf32>, vector<2x128xf32>, vector<2x128xf32>, vector<2x128xf32>, vector<2x128xf32> -> vector<2x1152xf32>
    %58 = arith.truncf %57 : vector<2x1152xf32> to vector<2x1152xbf16>
    %c0_60 = arith.constant 0 : index
    %c0_61 = arith.constant 0 : index
    %c0_62 = arith.constant 0 : index
    %59 = vector.load %arg8[%c0_60, %c0_61, %c0_62] : memref<1x1152x128xbf16, #tpu.memory_space<vmem>>, vector<1x1152x128xbf16>
    %60 = vector.shape_cast %59 : vector<1x1152x128xbf16> to vector<1152x128xbf16>
    %cst_63 = arith.constant dense<0.000000e+00> : vector<2x128xf32>
    %61 = tpu.matmul %58, %60, %cst_63 {dimension_numbers = #tpu.dot_dimension_numbers<[1], [0], [0], [1], [0, 0, 1, 1], [], []>} : vector<2x1152xbf16>, vector<1152x128xbf16>, vector<2x128xf32> -> vector<2x128xf32>
    %c0_64 = arith.constant 0 : index
    %c0_65 = arith.constant 0 : index
    %c0_66 = arith.constant 0 : index
    %62 = vector.load %arg9[%c0_64, %c0_65, %c0_66] : memref<1x1x128xf32, #tpu.memory_space<vmem>>, vector<1x1x128xf32>
    %63 = vector.shape_cast %62 : vector<1x1x128xf32> to vector<1x128xf32>
    %64 = vector.broadcast %63 : vector<1x128xf32> to vector<2x128xf32>
    %65 = arith.addf %61, %64 : vector<2x128xf32>
    %66 = arith.mulf %65, %65 : vector<2x128xf32>
    %cst_67 = arith.constant dense<0.000000e+00> : vector<2xf32>
    %67 = vector.multi_reduction <add>, %66, %cst_67 [1] : vector<2x128xf32> to vector<2xf32>
    %68 = vector.shape_cast %67 : vector<2xf32> to vector<2x1xf32>
    %cst_68 = arith.constant 1.000000e-24 : f32
    %69 = vector.broadcast %cst_68 : f32 to vector<2x1xf32>
    %70 = arith.maximumf %68, %69 : vector<2x1xf32>
    %71 = math.rsqrt %70 : vector<2x1xf32>
    %72 = vector.broadcast %71 : vector<2x1xf32> to vector<2x128xf32>
    %73 = arith.mulf %65, %72 : vector<2x128xf32>
    %c0_69 = arith.constant 0 : index
    %c0_70 = arith.constant 0 : index
    %c0_71 = arith.constant 0 : index
    %74 = vector.load %arg11[%c0_69, %c0_70, %c0_71] : memref<1x2x128xf32, #tpu.memory_space<vmem>>, vector<1x2x128xf32>
    %75 = vector.shape_cast %74 : vector<1x2x128xf32> to vector<2x128xf32>
    %76 = vector.shape_cast %73 : vector<2x128xf32> to vector<1x2x128xf32>
    tpu.vector_store %arg11[%c0_69, %c0_70, %c0_71], %76 {strides = array<i32>} : memref<1x2x128xf32, #tpu.memory_space<vmem>>, vector<1x2x128xf32>,
    return
  }
  func.func @transform_0(%arg0: i32) -> (i32, i32, i32) {
    %c0_i32 = arith.constant 0 : i32
    %c0_i32_0 = arith.constant 0 : i32
    %c0_i32_1 = arith.constant 0 : i32
    return %arg0, %c0_i32, %c0_i32_0 : i32, i32, i32
  }
  func.func @transform_1(%arg0: i32) -> (i32, i32, i32) {
    %c0_i32 = arith.constant 0 : i32
    %c0_i32_0 = arith.constant 0 : i32
    %c0_i32_1 = arith.constant 0 : i32
    return %arg0, %c0_i32, %c0_i32_0 : i32, i32, i32
  }
  func.func @transform_2(%arg0: i32) -> (i32, i32, i32) {
    %c0_i32 = arith.constant 0 : i32
    %c0_i32_0 = arith.constant 0 : i32
    %c0_i32_1 = arith.constant 0 : i32
    return %arg0, %c0_i32, %c0_i32_0 : i32, i32, i32
  }
  func.func @transform_3(%arg0: i32) -> (i32, i32, i32) {
    %c0_i32 = arith.constant 0 : i32
    %c0_i32_0 = arith.constant 0 : i32
    %c0_i32_1 = arith.constant 0 : i32
    return %arg0, %c0_i32, %c0_i32_0 : i32, i32, i32
  }
  func.func @transform_4(%arg0: i32) -> (i32, i32, i32) {
    %c0_i32 = arith.constant 0 : i32
    %c0_i32_0 = arith.constant 0 : i32
    %c0_i32_1 = arith.constant 0 : i32
    return %arg0, %c0_i32, %c0_i32_0 : i32, i32, i32
  }
  func.func @transform_5(%arg0: i32) -> (i32, i32, i32) {
    %c0_i32 = arith.constant 0 : i32
    %c0_i32_0 = arith.constant 0 : i32
    %c0_i32_1 = arith.constant 0 : i32
    return %arg0, %c0_i32, %c0_i32_0 : i32, i32, i32
  }
  func.func @transform_6(%arg0: i32) -> (i32, i32, i32, i32) {
    %c0_i32 = arith.constant 0 : i32
    %c0_i32_0 = arith.constant 0 : i32
    %c0_i32_1 = arith.constant 0 : i32
    %c0_i32_2 = arith.constant 0 : i32
    return %arg0, %c0_i32, %c0_i32_0, %c0_i32_1 : i32, i32, i32, i32
  }
  func.func @transform_7(%arg0: i32) -> (i32, i32, i32) {
    %c0_i32 = arith.constant 0 : i32
    %c0_i32_0 = arith.constant 0 : i32
    %c0_i32_1 = arith.constant 0 : i32
    return %arg0, %c0_i32, %c0_i32_0 : i32, i32, i32
  }
  func.func @transform_8(%arg0: i32) -> (i32, i32, i32) {
    %c0_i32 = arith.constant 0 : i32
    %c0_i32_0 = arith.constant 0 : i32
    %c0_i32_1 = arith.constant 0 : i32
    return %arg0, %c0_i32, %c0_i32_0 : i32, i32, i32
  }
  func.func @transform_9(%arg0: i32) -> (i32, i32, i32) {
    %c0_i32 = arith.constant 0 : i32
    %c0_i32_0 = arith.constant 0 : i32
    %c0_i32_1 = arith.constant 0 : i32
    return %arg0, %c0_i32, %c0_i32_0 : i32, i32, i32
  }
  func.func @transform_10(%arg0: i32) -> (i32, i32, i32) {
    %c0_i32 = arith.constant 0 : i32
    %c0_i32_0 = arith.constant 0 : i32
    %c0_i32_1 = arith.constant 0 : i32
    return %arg0, %c0_i32, %c0_i32_0 : i32, i32, i32
  }
}

</mosaic_0001>

<llo_original>
// kernel: cmc_multiheads_forward.2
$region0: #{cmc_multiheads_forward.2}
  #allocation0 [shape = 'u32[]', space=smem, size = 0x4, offset = 0x4, fixed_abs, tag = 'smem constant byte address 0x4 - core index']
  #allocation1 [shape = 'u32[144,128]{1,0:T(1,128)}', space=vmem, size = 0x12000, scoped, tag = 'internal scratch']
  %s0 = inlined_call_operand.vmem [shape: bf16[2,32,256,18], index: 0, kind: input, shape index: {}]
  %s1 = inlined_call_operand.vmem [shape: bf16[2,18,1024], index: 1, kind: input, shape index: {}]
  %s2 = inlined_call_operand.vmem [shape: f32[2,1,1024], index: 2, kind: input, shape index: {}]
  %s3 = inlined_call_operand.vmem [shape: bf16[2,32,1024], index: 3, kind: output, shape index: {}]
  %s4 = sld [smem:[#allocation0]]
  $region52: #{cmc_multiheads_forward.2} parent=0
    _
  %s6 = ssub.s32 1, %s4
  %s7 = scalar_select 0, %s6, %s4
  loop: start=0, step=1, limit=6
  $region2: #{cmc_multiheads_forward.2} parent=0 // loop_pre_header
    _
  $region3: #{cmc_multiheads_forward.2} parent=0 // loop_header
    %s9 = sphi 0, %s13
    %p10 = scmp.ge.s32.totalorder %s9, 6
    %s16 = sphi 0, %s28
    %s17 = sphi 0, %s24
    %s18 = sphi 0, %s16
    %s19 = sphi 0, %s17
    %s20 = sphi 0, %s18
    %s21 = sphi 0, %s19
    %s33 = sphi 0, %s35
    %s36 = sphi 0, %s33
    %s37 = sphi 0, %s36
    %s53 = sphi 0, %s37
    %s59 = sphi 0, %s61
    %s62 = sphi 0, %s59
    %s63 = sphi 0, %s62
    %s79 = sphi 0, %s63
    %s85 = sphi 0, %s87
    %s88 = sphi 0, %s85
    %s89 = sphi 0, %s88
    %s105 = sphi 0, %s89
    %s113 = sphi 0, %s115
    %s116 = sphi 0, %s113
    %s117 = sphi 0, %s116
    %s133 = sphi 0, %s117
  $region4: #{cmc_multiheads_forward.2} parent=0 // loop_header_branch
    %12 = sbr.rel (%p10) target = $region8
  $region5: #{cmc_multiheads_forward.2} parent=0 // loop_body
    %s14 = ssub.s32 %s9, 1
    %s15 = ssub.s32 %s9, 2
    %s22 = sadd.s32 1, %s17
    %p23 = scmp.ge.s32.totalorder %s22, 2
    %s24 = scalar_select %p23, 0, %s22
    %s25 = sadd.s32 1, %s16
    %s26 = scalar_select %p23, %s25, %s16
    %p27 = scmp.ge.s32.totalorder %s26, 2
    %s28 = scalar_select %p27, 0, %s26
    %s29 = ssub.s32 %s16, %s28
    %s30 = ssub.s32 %s17, %s24
    %s31 = sor.u32 %s29, %s30
    %p32 = scmp.eq.s32.totalorder %s31, 0
    %s34 = sadd.s32 %s33, 1
    %s35 = scalar_select %p32, %s33, %s34
    %p38 = pneg %p32
    %p39 = scmp.eq.s32.totalorder %s9, 3
    %p40 = por %p38, %p39
    %p41 = scmp.ne.s32.totalorder %s33, %s36
    %p42 = scmp.eq.s32.totalorder %s9, 0
    %p43 = por %p41, %p42
    %p44 = scmp.ne.s32.totalorder %s33, %s36
    %p45 = scmp.eq.s32.totalorder %s14, 3
    %p46 = por %p44, %p45
    %p47 = scmp.ne.s32.totalorder %s36, %s37
    %p48 = scmp.eq.s32.totalorder %s14, 0
    %p49 = por %p47, %p48
    %p50 = scmp.ne.s32.totalorder %s36, %s37
    %p51 = scmp.eq.s32.totalorder %s15, 3
    %p52 = por %p50, %p51
    %p54 = scmp.ne.s32.totalorder %s37, %s53
    %p55 = scmp.eq.s32.totalorder %s15, 0
    %p56 = por %p54, %p55
    %s57 = ssub.s32 %s16, %s28
    %p58 = scmp.eq.s32.totalorder %s57, 0
    %s60 = sadd.s32 %s59, 1
    %s61 = scalar_select %p58, %s59, %s60
    %p64 = pneg %p58
    %p65 = scmp.eq.s32.totalorder %s9, 3
    %p66 = por %p64, %p65
    %p67 = scmp.ne.s32.totalorder %s59, %s62
    %p68 = scmp.eq.s32.totalorder %s9, 0
    %p69 = por %p67, %p68
    %p70 = scmp.ne.s32.totalorder %s59, %s62
    %p71 = scmp.eq.s32.totalorder %s14, 3
    %p72 = por %p70, %p71
    %p73 = scmp.ne.s32.totalorder %s62, %s63
    %p74 = scmp.eq.s32.totalorder %s14, 0
    %p75 = por %p73, %p74
    %p76 = scmp.ne.s32.totalorder %s62, %s63
    %p77 = scmp.eq.s32.totalorder %s15, 3
    %p78 = por %p76, %p77
    %p80 = scmp.ne.s32.totalorder %s63, %s79
    %p81 = scmp.eq.s32.totalorder %s15, 0
    %p82 = por %p80, %p81
    %s83 = ssub.s32 %s16, %s28
    %p84 = scmp.eq.s32.totalorder %s83, 0
    %s86 = sadd.s32 %s85, 1
    %s87 = scalar_select %p84, %s85, %s86
    %p90 = pneg %p84
    %p91 = scmp.eq.s32.totalorder %s9, 3
    %p92 = por %p90, %p91
    %p93 = scmp.ne.s32.totalorder %s85, %s88
    %p94 = scmp.eq.s32.totalorder %s9, 0
    %p95 = por %p93, %p94
    %p96 = scmp.ne.s32.totalorder %s85, %s88
    %p97 = scmp.eq.s32.totalorder %s14, 3
    %p98 = por %p96, %p97
    %p99 = scmp.ne.s32.totalorder %s88, %s89
    %p100 = scmp.eq.s32.totalorder %s14, 0
    %p101 = por %p99, %p100
    %p102 = scmp.ne.s32.totalorder %s88, %s89
    %p103 = scmp.eq.s32.totalorder %s15, 3
    %p104 = por %p102, %p103
    %p106 = scmp.ne.s32.totalorder %s89, %s105
    %p107 = scmp.eq.s32.totalorder %s15, 0
    %p108 = por %p106, %p107
    %s109 = ssub.s32 %s16, %s28
    %s110 = ssub.s32 %s17, %s24
    %s111 = sor.u32 %s109, %s110
    %p112 = scmp.eq.s32.totalorder %s111, 0
    %s114 = sadd.s32 %s113, 1
    %s115 = scalar_select %p112, %s113, %s114
    %p118 = pneg %p112
    %p119 = scmp.eq.s32.totalorder %s9, 3
    %p120 = por %p118, %p119
    %p121 = scmp.ne.s32.totalorder %s113, %s116
    %p122 = scmp.eq.s32.totalorder %s9, 0
    %p123 = por %p121, %p122
    %p124 = scmp.ne.s32.totalorder %s113, %s116
    %p125 = scmp.eq.s32.totalorder %s14, 3
    %p126 = por %p124, %p125
    %p127 = scmp.ne.s32.totalorder %s116, %s117
    %p128 = scmp.eq.s32.totalorder %s14, 0
    %p129 = por %p127, %p128
    %p130 = scmp.ne.s32.totalorder %s116, %s117
    %p131 = scmp.eq.s32.totalorder %s15, 3
    %p132 = por %p130, %p131
    %p134 = scmp.ne.s32.totalorder %s117, %s133
    %p135 = scmp.eq.s32.totalorder %s15, 0
    %p136 = por %p134, %p135
    %p137 = scmp.le.s32.totalorder 1, %s9
    %p138 = scmp.lt.s32.totalorder %s9, 5
    %p139 = pnand %p137, %p138
    %p140 = pneg %p139
    // Predicated region
    $region9: #{cmc_multiheads_forward.2} parent=5 // pred_check
      _
    $region10: #{cmc_multiheads_forward.2} parent=5 // pred_check_branch
      %142 = sbr.rel (%p139) target = $region12
    $region11: #{cmc_multiheads_forward.2} parent=5 // pred_region
      %s143 = ssub.s32 %s9, 1
    $region12: #{cmc_multiheads_forward.2} parent=5 // pred_fallthru
      _
    %p144 = scmp.lt.s32.totalorder %s9, 4
    // Predicated region
    $region13: #{cmc_multiheads_forward.2} parent=5 // pred_check
      %p145 = pneg %p144
    $region14: #{cmc_multiheads_forward.2} parent=5 // pred_check_branch
      %147 = sbr.rel (%p145) target = $region16
    $region15: #{cmc_multiheads_forward.2} parent=5 // pred_region
      // Predicated region
      $region17: #{cmc_multiheads_forward.2} parent=15 // pred_check
        %p148 = pneg %p43
      $region18: #{cmc_multiheads_forward.2} parent=15 // pred_check_branch
        %150 = sbr.rel (%p148) target = $region20
      $region19: #{cmc_multiheads_forward.2} parent=15 // pred_region
        %s151 = smul.u32 16, %s17
        %p152 = scmp.lt.s32.totalorder %s16, 1
        %s153 = scalar_select %p152, %s16, 1
        %p154 = scmp.lt.s32.totalorder %s151, 31
        %s155 = scalar_select %p154, %s151, 31
        %s156 = smul.addr %s155, 32
        %s157 = smul.addr %s153, 1024
        %s158 = sadd.s32 %s156, %s157
        %s159 = smul.addr %s158, 4
        %s160 = scalar_lea.vmem %s0, %s159
        %s161 = smul.u32 16, %s17
      $region20: #{cmc_multiheads_forward.2} parent=15 // pred_fallthru
        _
      // Predicated region
      $region21: #{cmc_multiheads_forward.2} parent=15 // pred_check
        %p162 = pneg %p69
      $region22: #{cmc_multiheads_forward.2} parent=15 // pred_check_branch
        %164 = sbr.rel (%p162) target = $region24
      $region23: #{cmc_multiheads_forward.2} parent=15 // pred_region
        %p165 = scmp.lt.s32.totalorder %s16, 1
        %s166 = scalar_select %p165, %s16, 1
        %s167 = smul.addr %s166, 24
        %s168 = smul.addr %s167, 4
        %s169 = scalar_lea.vmem %s1, %s168
      $region24: #{cmc_multiheads_forward.2} parent=15 // pred_fallthru
        _
      // Predicated region
      $region25: #{cmc_multiheads_forward.2} parent=15 // pred_check
        %p170 = pneg %p95
      $region26: #{cmc_multiheads_forward.2} parent=15 // pred_check_branch
        %172 = sbr.rel (%p170) target = $region28
      $region27: #{cmc_multiheads_forward.2} parent=15 // pred_region
        %p173 = scmp.lt.s32.totalorder %s16, 1
        %s174 = scalar_select %p173, %s16, 1
        %s175 = smul.addr %s174, 8
        %s176 = scalar_lea.vmem %s2, %s175
      $region28: #{cmc_multiheads_forward.2} parent=15 // pred_fallthru
        _
    $region16: #{cmc_multiheads_forward.2} parent=5 // pred_fallthru
      _
    %p177 = scmp.le.s32.totalorder 1, %s9
    %p178 = scmp.lt.s32.totalorder %s9, 5
    %p179 = pnand %p177, %p178
    %p180 = pneg %p179
    // Predicated region
    $region29: #{cmc_multiheads_forward.2} parent=5 // pred_check
      _
    $region30: #{cmc_multiheads_forward.2} parent=5 // pred_check_branch
      %182 = sbr.rel (%p179) target = $region32
    $region31: #{cmc_multiheads_forward.2} parent=5 // pred_region
      %s183 = ssub.s32 %s9, 1
      %s184 = smul.u32 16, %s19
      %p185 = scmp.lt.s32.totalorder %s18, 1
      %s186 = scalar_select %p185, %s18, 1
      %p187 = scmp.lt.s32.totalorder %s184, 31
      %s188 = scalar_select %p187, %s184, 31
      %s189 = smul.addr %s188, 32
      %s190 = smul.addr %s186, 1024
      %s191 = sadd.s32 %s189, %s190
      %s192 = smul.addr %s191, 4
      %s193 = scalar_lea.vmem %s0, %s192
      %p194 = pneg %p49
      %p195 = pneg %p46
      %p196 = scmp.lt.s32.totalorder %s18, 1
      %s197 = scalar_select %p196, %s18, 1
      %s198 = smul.addr %s197, 24
      %s199 = smul.addr %s198, 4
      %s200 = scalar_lea.vmem %s1, %s199
      %p201 = pneg %p75
      %p202 = pneg %p72
      %p203 = scmp.lt.s32.totalorder %s18, 1
      %s204 = scalar_select %p203, %s18, 1
      %s205 = smul.addr %s204, 8
      %s206 = scalar_lea.vmem %s2, %s205
      %p207 = pneg %p101
      %p208 = pneg %p98
      %p209 = pneg %p129
      %p210 = pneg %p126
      %s211 = smul.u32 2, %s19
      %p212 = scmp.lt.s32.totalorder %s18, 1
      %s213 = scalar_select %p212, %s18, 1
      %p214 = scmp.lt.s32.totalorder %s211, 3
      %s215 = scalar_select %p214, %s211, 3
      %s216 = smul.addr %s215, 8
      %s217 = smul.addr %s213, 32
      %s218 = sadd.s32 %s216, %s217
      %s219 = smul.addr %s218, 4
      %s220 = scalar_lea.vmem %s3, %s219
      %s221 = smul.u32 16, %s19
      %p222 = scmp.lt.s32.totalorder %s18, 1
      %s223 = scalar_select %p222, %s18, 1
      %p224 = scmp.lt.s32.totalorder %s221, 31
      %s225 = scalar_select %p224, %s221, 31
      %s226 = smul.addr %s225, 32
      %s227 = smul.addr %s223, 1024
      %s228 = sadd.s32 %s226, %s227
      %s229 = smul.addr %s228, 4
      %s230 = scalar_lea.vmem %s0, %s229
      %s231 = smul.u32 16, %s19
      %p232 = scmp.lt.s32.totalorder %s18, 1
      %s233 = scalar_select %p232, %s18, 1
      %s234 = smul.addr %s233, 24
      %s235 = smul.addr %s234, 4
      %s236 = scalar_lea.vmem %s1, %s235
      %p237 = scmp.lt.s32.totalorder %s18, 1
      %s238 = scalar_select %p237, %s18, 1
      %s239 = smul.addr %s238, 8
      %s240 = scalar_lea.vmem %s2, %s239
      %s241 = smul.u32 2, %s19
      %p242 = scmp.lt.s32.totalorder %s18, 1
      %s243 = scalar_select %p242, %s18, 1
      %p244 = scmp.lt.s32.totalorder %s241, 3
      %s245 = scalar_select %p244, %s241, 3
      %s246 = smul.addr %s245, 8
      %s247 = smul.addr %s243, 32
      %s248 = sadd.s32 %s246, %s247
      %s249 = smul.addr %s248, 4
      %s250 = scalar_lea.vmem %s3, %s249
      %s251 = smul.u32 2, %s19
      %v253 = vld [vmem:[%s236] sm:$0xff]
      %v254 = vld [vmem:[%s236 + $0x8] sm:$0xff]
      %v255 = vld [vmem:[%s236 + $0x10] sm:$0xff]
      %v256 = vld [vmem:[%s236 + $0x18] sm:$0xff]
      %v257 = vld [vmem:[%s236 + $0x20] sm:$0xff]
      %v258 = vld [vmem:[%s236 + $0x28] sm:$0xff]
      %v259 = vld [vmem:[%s236 + $0x30] sm:$0xff]
      %v260 = vld [vmem:[%s236 + $0x38] sm:$0xff]
      %v261 = vld [vmem:[%s236 + $0x40] sm:$0x11]
      %v262 = vld [vmem:[%s236 + $0x48] sm:$0x11]
      %v263 = vld [vmem:[%s236 + $0x50] sm:$0x11]
      %v264 = vld [vmem:[%s236 + $0x58] sm:$0x11]
      %v265 = vld [vmem:[%s240] sm:$0xff]
      %v266 = vlaneseq
      %v267 = vshrl.u32 %v266, 7
      %v268 = vadd.s32 %v267, 8
      %v269 = vmul.u32 %v267, 16
      %v270 = vmul.u32 %v268, 16
      %v271 = vlaneseq
      %v272 = vand.u32 %v271, 127
      %v273 = vadd.s32 %v272, 128
      loop: start=0, step=1, limit=16
      $region33: #{cmc_multiheads_forward.2} parent=31 // loop_pre_header
        _
      $region34: #{cmc_multiheads_forward.2} parent=31 // loop_header
        %s275 = sphi 0, %s279
        %p276 = scmp.ge.s32.totalorder %s275, 16
        %v280 = vphi 0.0, %v1948
        %v281 = vphi 0.0, %v1949
        %v282 = vphi 0.0, %v1950
        %v283 = vphi 0.0, %v1951
        %v284 = vphi 0.0, %v1952
        %v285 = vphi 0.0, %v1953
        %v286 = vphi 0.0, %v1954
        %v287 = vphi 0.0, %v1955
        %v288 = vphi 0.0, %v1956
        %v289 = vphi 0.0, %v1957
        %v290 = vphi 0.0, %v1958
        %v291 = vphi 0.0, %v1959
        %v292 = vphi 0.0, %v1960
        %v293 = vphi 0.0, %v1961
        %v294 = vphi 0.0, %v1962
        %v295 = vphi 0.0, %v1963
      $region35: #{cmc_multiheads_forward.2} parent=31 // loop_header_branch
        %278 = sbr.rel (%p276) target = $region39
      $region36: #{cmc_multiheads_forward.2} parent=31 // loop_body
        %s296 = smul.u32 %s275, 16
        %s297 = sshra.s32 %s296, 3
        %s298 = sand.u32 %s296, 7
        %s299 = smul.addr %s297, 4
        %s300 = scalar_lea.vmem %s230, %s299
        %v301 = vld [vmem:[%s300] sm:$0xf]
        %v302 = vld [vmem:[%s300 + $0x4] sm:$0xf]
        %v303 = vld [vmem:[%s300 + $0x80] sm:$0xf]
        %v304 = vld [vmem:[%s300 + $0x84] sm:$0xf]
        %v305 = vld [vmem:[%s300 + $0x100] sm:$0xf]
        %v306 = vld [vmem:[%s300 + $0x104] sm:$0xf]
        %v307 = vld [vmem:[%s300 + $0x180] sm:$0xf]
        %v308 = vld [vmem:[%s300 + $0x184] sm:$0xf]
        %v309 = vld [vmem:[%s300 + $0x200] sm:$0xf]
        %v310 = vld [vmem:[%s300 + $0x204] sm:$0xf]
        %v311 = vld [vmem:[%s300 + $0x280] sm:$0xf]
        %v312 = vld [vmem:[%s300 + $0x284] sm:$0xf]
        %v313 = vld [vmem:[%s300 + $0x300] sm:$0xf]
        %v314 = vld [vmem:[%s300 + $0x304] sm:$0xf]
        %v315 = vld [vmem:[%s300 + $0x380] sm:$0xf]
        %v316 = vld [vmem:[%s300 + $0x384] sm:$0xf]
        %v317 = vld [vmem:[%s300 + $0x400] sm:$0xf]
        %v318 = vld [vmem:[%s300 + $0x404] sm:$0xf]
        %v319 = vld [vmem:[%s300 + $0x480] sm:$0xf]
        %v320 = vld [vmem:[%s300 + $0x484] sm:$0xf]
        %v321 = vld [vmem:[%s300 + $0x500] sm:$0xf]
        %v322 = vld [vmem:[%s300 + $0x504] sm:$0xf]
        %v323 = vld [vmem:[%s300 + $0x580] sm:$0xf]
        %v324 = vld [vmem:[%s300 + $0x584] sm:$0xf]
        %v325 = vld [vmem:[%s300 + $0x600] sm:$0xf]
        %v326 = vld [vmem:[%s300 + $0x604] sm:$0xf]
        %v327 = vld [vmem:[%s300 + $0x680] sm:$0xf]
        %v328 = vld [vmem:[%s300 + $0x684] sm:$0xf]
        %v329 = vld [vmem:[%s300 + $0x700] sm:$0xf]
        %v330 = vld [vmem:[%s300 + $0x704] sm:$0xf]
        %v331 = vld [vmem:[%s300 + $0x780] sm:$0xf]
        %v332 = vld [vmem:[%s300 + $0x784] sm:$0xf]
        %v334 = vlaneseq
        %v335 = vshrl.u32 %v334, 7
        %v336 = vsub.s32 0, %v335
        %v337 = vrot.slane %v265, %v336
        %v338 = vlaneseq
        %v339 = vshrl.u32 %v338, 7
        %v340 = vsub.s32 1, %v339
        %v341 = vrot.slane %v265, %v340
        %v342 = vlaneseq
        %v343 = vshrl.u32 %v342, 7
        %v344 = vsub.s32 2, %v343
        %v345 = vrot.slane %v265, %v344
        %v346 = vlaneseq
        %v347 = vshrl.u32 %v346, 7
        %v348 = vsub.s32 3, %v347
        %v349 = vrot.slane %v265, %v348
        %v350 = vlaneseq
        %v351 = vshrl.u32 %v350, 7
        %v352 = vsub.s32 4, %v351
        %v353 = vrot.slane %v265, %v352
        %v354 = vlaneseq
        %v355 = vshrl.u32 %v354, 7
        %v356 = vsub.s32 5, %v355
        %v357 = vrot.slane %v265, %v356
        %v358 = vlaneseq
        %v359 = vshrl.u32 %v358, 7
        %v360 = vsub.s32 6, %v359
        %v361 = vrot.slane %v265, %v360
        %v362 = vlaneseq
        %v363 = vshrl.u32 %v362, 7
        %v364 = vsub.s32 7, %v363
        %v365 = vrot.slane %v265, %v364
        %v406 = vunpack.c.l.b16 %v301
        %v407 = vunpack.c.l.b16 %v302
        %v408 = vunpack.c.l.b16 %v303
        %v409 = vunpack.c.l.b16 %v304
        %v410 = vunpack.c.l.b16 %v305
        %v411 = vunpack.c.l.b16 %v306
        %v412 = vunpack.c.l.b16 %v307
        %v413 = vunpack.c.l.b16 %v308
        %v414 = vunpack.c.l.b16 %v309
        %v415 = vunpack.c.l.b16 %v310
        %v416 = vunpack.c.l.b16 %v311
        %v417 = vunpack.c.l.b16 %v312
        %v418 = vunpack.c.l.b16 %v313
        %v419 = vunpack.c.l.b16 %v314
        %v420 = vunpack.c.l.b16 %v315
        %v421 = vunpack.c.l.b16 %v316
        %v422 = vunpack.c.l.b16 %v317
        %v423 = vunpack.c.l.b16 %v318
        %v424 = vunpack.c.l.b16 %v319
        %v425 = vunpack.c.l.b16 %v320
        %v426 = vunpack.c.l.b16 %v321
        %v427 = vunpack.c.l.b16 %v322
        %v428 = vunpack.c.l.b16 %v323
        %v429 = vunpack.c.l.b16 %v324
        %v430 = vunpack.c.l.b16 %v325
        %v431 = vunpack.c.l.b16 %v326
        %v432 = vunpack.c.l.b16 %v327
        %v433 = vunpack.c.l.b16 %v328
        %v434 = vunpack.c.l.b16 %v329
        %v435 = vunpack.c.l.b16 %v330
        %v436 = vunpack.c.l.b16 %v331
        %v437 = vunpack.c.l.b16 %v332
        %v438 = vpack.c.b16 %v407, %v406
        %v439 = vpack.c.b16 %v409, %v408
        %v440 = vpack.c.b16 %v411, %v410
        %v441 = vpack.c.b16 %v413, %v412
        %v442 = vpack.c.b16 %v415, %v414
        %v443 = vpack.c.b16 %v417, %v416
        %v444 = vpack.c.b16 %v419, %v418
        %v445 = vpack.c.b16 %v421, %v420
        %v446 = vpack.c.b16 %v423, %v422
        %v447 = vpack.c.b16 %v425, %v424
        %v448 = vpack.c.b16 %v427, %v426
        %v449 = vpack.c.b16 %v429, %v428
        %v450 = vpack.c.b16 %v431, %v430
        %v451 = vpack.c.b16 %v433, %v432
        %v452 = vpack.c.b16 %v435, %v434
        %v453 = vpack.c.b16 %v437, %v436
        %v466 = vunpack.c.l.b16 %v253
        %v467 = vunpack.c.h.b16 %v253
        %v468 = vunpack.c.l.b16 %v254
        %v469 = vunpack.c.h.b16 %v254
        %v470 = vunpack.c.l.b16 %v255
        %v471 = vunpack.c.h.b16 %v255
        %v472 = vunpack.c.l.b16 %v256
        %v473 = vunpack.c.h.b16 %v256
        %v474 = vunpack.c.l.b16 %v257
        %v475 = vunpack.c.h.b16 %v257
        %v476 = vunpack.c.l.b16 %v258
        %v477 = vunpack.c.h.b16 %v258
        %v478 = vunpack.c.l.b16 %v259
        %v479 = vunpack.c.h.b16 %v259
        %v480 = vunpack.c.l.b16 %v260
        %v481 = vunpack.c.h.b16 %v260
        %v482 = vunpack.c.l.b16 %v261
        %v483 = vunpack.c.h.b16 %v261
        %v484 = vunpack.c.l.b16 %v262
        %v485 = vunpack.c.h.b16 %v262
        %v486 = vunpack.c.l.b16 %v263
        %v487 = vunpack.c.h.b16 %v263
        %v488 = vunpack.c.l.b16 %v264
        %v489 = vunpack.c.h.b16 %v264
        %v490 = vpack.c.b16 %v474, %v466
        %v491 = vpack.c.b16 %v475, %v467
        %v492 = vpack.c.b16 %v476, %v468
        %v493 = vpack.c.b16 %v477, %v469
        %v494 = vpack.c.b16 %v478, %v470
        %v495 = vpack.c.b16 %v479, %v471
        %v496 = vpack.c.b16 %v480, %v472
        %v497 = vpack.c.b16 %v481, %v473
        %v498 = vpack.c.b16 %v482, %v482
        %v499 = vpack.c.b16 %v483, %v483
        %v500 = vpack.c.b16 %v484, %v484
        %v501 = vpack.c.b16 %v485, %v485
        %v502 = vpack.c.b16 %v486, %v486
        %v503 = vpack.c.b16 %v487, %v487
        %v504 = vpack.c.b16 %v488, %v488
        %v505 = vpack.c.b16 %v489, %v489
        %vm514 = vcmask 146432
        %v516 = vsel %vm514, %v438, 0
        %v519 = vsel %vm514, %v439, 0
        %v522 = vsel %vm514, %v440, 0
        %v525 = vsel %vm514, %v441, 0
        %v528 = vsel %vm514, %v442, 0
        %v531 = vsel %vm514, %v443, 0
        %v534 = vsel %vm514, %v444, 0
        %v537 = vsel %vm514, %v445, 0
        %v540 = vsel %vm514, %v446, 0
        %v543 = vsel %vm514, %v447, 0
        %v546 = vsel %vm514, %v448, 0
        %v549 = vsel %vm514, %v449, 0
        %v552 = vsel %vm514, %v450, 0
        %v555 = vsel %vm514, %v451, 0
        %v558 = vsel %vm514, %v452, 0
        %v561 = vsel %vm514, %v453, 0
        %vm563 = vcmask 1040384
        %v565 = vsel %vm563, %v498, 0
        %v568 = vsel %vm563, %v499, 0
        %v571 = vsel %vm563, %v500, 0
        %v574 = vsel %vm563, %v501, 0
        %v577 = vsel %vm563, %v502, 0
        %v580 = vsel %vm563, %v503, 0
        %v583 = vsel %vm563, %v504, 0
        %v586 = vsel %vm563, %v505, 0
        %588 = vmatprep.subr.bf16.mxu0 0
        %589 = vmatpush1.bf16.msra.mxu0 0
        %590 = vmatprep.subr.bf16.mxu0 0
        %591 = vmatpush1.bf16.msra.mxu0 0
        %592 = vmatprep.subr.bf16.mxu0 0
        %593 = vmatpush1.bf16.msra.mxu0 0
        %594 = vmatprep.subr.bf16.mxu0 0
        %595 = vmatpush1.bf16.msra.mxu0 0
        %596 = vmatprep.subr.bf16.mxu0 0
        %597 = vmatpush1.bf16.msra.mxu0 0
        %598 = vmatprep.subr.bf16.mxu0 0
        %599 = vmatpush1.bf16.msra.mxu0 0
        %600 = vmatprep.subr.bf16.mxu0 %v568
        %601 = vmatpush1.bf16.msra.mxu0 %v565
        %602 = vmatprep.subr.bf16.mxu0 %v491
        %603 = vmatpush1.bf16.msra.mxu0 %v490
        %604 = vmatprep.subr.bf16.mxu0 0
        %605 = vmatpush2.bf16.msra.mxu0 0
        %606 = vmatprep.subr.bf16.mxu0 0
        %607 = vmatpush2.bf16.msra.mxu0 0
        %608 = vmatprep.subr.bf16.mxu0 0
        %609 = vmatpush2.bf16.msra.mxu0 0
        %610 = vmatprep.subr.bf16.mxu0 0
        %611 = vmatpush2.bf16.msra.mxu0 0
        %612 = vmatprep.subr.bf16.mxu0 0
        %613 = vmatpush2.bf16.msra.mxu0 0
        %614 = vmatprep.subr.bf16.mxu0 0
        %615 = vmatpush2.bf16.msra.mxu0 0
        %616 = vmatprep.subr.bf16.mxu0 0
        %617 = vmatpush2.bf16.msra.mxu0 0
        %618 = vmatprep.subr.bf16.mxu0 0
        %619 = vmatpush2.bf16.msra.mxu0 0
        %620 = vmatprep.mubr.bf16.mxu0 0
        %621 = vmatmul.mubr.bf16.gmra.mxu0 %v516
        %v622 = vpop.f32.mrf.mxu0
        %v623 = vadd.f32 %v337, %v622
        %v624 = vpop.f32.mrf.mxu0
        %v625 = vadd.f32 %v341, %v624
        %v626 = vpop.f32.mrf.mxu0
        %v627 = vadd.f32 %v337, %v626
        %v628 = vpop.f32.mrf.mxu0
        %v629 = vadd.f32 %v341, %v628
        %630 = vmatprep.mubr.bf16.mxu0 0
        %631 = vmatmul.mubr.bf16.gmra.mxu0 %v519
        %v632 = vpop.f32.mrf.mxu0
        %v633 = vadd.f32 %v337, %v632
        %v634 = vpop.f32.mrf.mxu0
        %v635 = vadd.f32 %v341, %v634
        %v636 = vpop.f32.mrf.mxu0
        %v637 = vadd.f32 %v337, %v636
        %v638 = vpop.f32.mrf.mxu0
        %v639 = vadd.f32 %v341, %v638
        %640 = vmatprep.mubr.bf16.mxu0 0
        %641 = vmatmul.mubr.bf16.gmra.mxu0 %v522
        %v642 = vpop.f32.mrf.mxu0
        %v643 = vadd.f32 %v337, %v642
        %v644 = vpop.f32.mrf.mxu0
        %v645 = vadd.f32 %v341, %v644
        %v646 = vpop.f32.mrf.mxu0
        %v647 = vadd.f32 %v337, %v646
        %v648 = vpop.f32.mrf.mxu0
        %v649 = vadd.f32 %v341, %v648
        %650 = vmatprep.mubr.bf16.mxu0 0
        %651 = vmatmul.mubr.bf16.gmra.mxu0 %v525
        %v652 = vpop.f32.mrf.mxu0
        %v653 = vadd.f32 %v337, %v652
        %v654 = vpop.f32.mrf.mxu0
        %v655 = vadd.f32 %v341, %v654
        %v656 = vpop.f32.mrf.mxu0
        %v657 = vadd.f32 %v337, %v656
        %v658 = vpop.f32.mrf.mxu0
        %v659 = vadd.f32 %v341, %v658
        %660 = vmatprep.mubr.bf16.mxu0 0
        %661 = vmatmul.mubr.bf16.gmra.mxu0 %v528
        %v662 = vpop.f32.mrf.mxu0
        %v663 = vadd.f32 %v337, %v662
        %v664 = vpop.f32.mrf.mxu0
        %v665 = vadd.f32 %v341, %v664
        %v666 = vpop.f32.mrf.mxu0
        %v667 = vadd.f32 %v337, %v666
        %v668 = vpop.f32.mrf.mxu0
        %v669 = vadd.f32 %v341, %v668
        %670 = vmatprep.mubr.bf16.mxu0 0
        %671 = vmatmul.mubr.bf16.gmra.mxu0 %v531
        %v672 = vpop.f32.mrf.mxu0
        %v673 = vadd.f32 %v337, %v672
        %v674 = vpop.f32.mrf.mxu0
        %v675 = vadd.f32 %v341, %v674
        %v676 = vpop.f32.mrf.mxu0
        %v677 = vadd.f32 %v337, %v676
        %v678 = vpop.f32.mrf.mxu0
        %v679 = vadd.f32 %v341, %v678
        %680 = vmatprep.mubr.bf16.mxu0 0
        %681 = vmatmul.mubr.bf16.gmra.mxu0 %v534
        %v682 = vpop.f32.mrf.mxu0
        %v683 = vadd.f32 %v337, %v682
        %v684 = vpop.f32.mrf.mxu0
        %v685 = vadd.f32 %v341, %v684
        %v686 = vpop.f32.mrf.mxu0
        %v687 = vadd.f32 %v337, %v686
        %v688 = vpop.f32.mrf.mxu0
        %v689 = vadd.f32 %v341, %v688
        %690 = vmatprep.mubr.bf16.mxu0 0
        %691 = vmatmul.mubr.bf16.gmra.mxu0 %v537
        %v692 = vpop.f32.mrf.mxu0
        %v693 = vadd.f32 %v337, %v692
        %v694 = vpop.f32.mrf.mxu0
        %v695 = vadd.f32 %v341, %v694
        %v696 = vpop.f32.mrf.mxu0
        %v697 = vadd.f32 %v337, %v696
        %v698 = vpop.f32.mrf.mxu0
        %v699 = vadd.f32 %v341, %v698
        %700 = vmatprep.mubr.bf16.mxu0 0
        %701 = vmatmul.mubr.bf16.gmra.mxu0 %v540
        %v702 = vpop.f32.mrf.mxu0
        %v703 = vadd.f32 %v337, %v702
        %v704 = vpop.f32.mrf.mxu0
        %v705 = vadd.f32 %v341, %v704
        %v706 = vpop.f32.mrf.mxu0
        %v707 = vadd.f32 %v337, %v706
        %v708 = vpop.f32.mrf.mxu0
        %v709 = vadd.f32 %v341, %v708
        %710 = vmatprep.mubr.bf16.mxu0 0
        %711 = vmatmul.mubr.bf16.gmra.mxu0 %v543
        %v712 = vpop.f32.mrf.mxu0
        %v713 = vadd.f32 %v337, %v712
        %v714 = vpop.f32.mrf.mxu0
        %v715 = vadd.f32 %v341, %v714
        %v716 = vpop.f32.mrf.mxu0
        %v717 = vadd.f32 %v337, %v716
        %v718 = vpop.f32.mrf.mxu0
        %v719 = vadd.f32 %v341, %v718
        %720 = vmatprep.mubr.bf16.mxu0 0
        %721 = vmatmul.mubr.bf16.gmra.mxu0 %v546
        %v722 = vpop.f32.mrf.mxu0
        %v723 = vadd.f32 %v337, %v722
        %v724 = vpop.f32.mrf.mxu0
        %v725 = vadd.f32 %v341, %v724
        %v726 = vpop.f32.mrf.mxu0
        %v727 = vadd.f32 %v337, %v726
        %v728 = vpop.f32.mrf.mxu0
        %v729 = vadd.f32 %v341, %v728
        %730 = vmatprep.mubr.bf16.mxu0 0
        %731 = vmatmul.mubr.bf16.gmra.mxu0 %v549
        %v732 = vpop.f32.mrf.mxu0
        %v733 = vadd.f32 %v337, %v732
        %v734 = vpop.f32.mrf.mxu0
        %v735 = vadd.f32 %v341, %v734
        %v736 = vpop.f32.mrf.mxu0
        %v737 = vadd.f32 %v337, %v736
        %v738 = vpop.f32.mrf.mxu0
        %v739 = vadd.f32 %v341, %v738
        %740 = vmatprep.mubr.bf16.mxu0 0
        %741 = vmatmul.mubr.bf16.gmra.mxu0 %v552
        %v742 = vpop.f32.mrf.mxu0
        %v743 = vadd.f32 %v337, %v742
        %v744 = vpop.f32.mrf.mxu0
        %v745 = vadd.f32 %v341, %v744
        %v746 = vpop.f32.mrf.mxu0
        %v747 = vadd.f32 %v337, %v746
        %v748 = vpop.f32.mrf.mxu0
        %v749 = vadd.f32 %v341, %v748
        %750 = vmatprep.mubr.bf16.mxu0 0
        %751 = vmatmul.mubr.bf16.gmra.mxu0 %v555
        %v752 = vpop.f32.mrf.mxu0
        %v753 = vadd.f32 %v337, %v752
        %v754 = vpop.f32.mrf.mxu0
        %v755 = vadd.f32 %v341, %v754
        %v756 = vpop.f32.mrf.mxu0
        %v757 = vadd.f32 %v337, %v756
        %v758 = vpop.f32.mrf.mxu0
        %v759 = vadd.f32 %v341, %v758
        %760 = vmatprep.mubr.bf16.mxu0 0
        %761 = vmatmul.mubr.bf16.gmra.mxu0 %v558
        %v762 = vpop.f32.mrf.mxu0
        %v763 = vadd.f32 %v337, %v762
        %v764 = vpop.f32.mrf.mxu0
        %v765 = vadd.f32 %v341, %v764
        %v766 = vpop.f32.mrf.mxu0
        %v767 = vadd.f32 %v337, %v766
        %v768 = vpop.f32.mrf.mxu0
        %v769 = vadd.f32 %v341, %v768
        %770 = vmatprep.mubr.bf16.mxu0 0
        %771 = vmatmul.mubr.bf16.gmra.mxu0 %v561
        %v772 = vpop.f32.mrf.mxu0
        %v773 = vadd.f32 %v337, %v772
        %v774 = vpop.f32.mrf.mxu0
        %v775 = vadd.f32 %v341, %v774
        %v776 = vpop.f32.mrf.mxu0
        %v777 = vadd.f32 %v337, %v776
        %v778 = vpop.f32.mrf.mxu0
        %v779 = vadd.f32 %v341, %v778
        %780 = vdwg.mxu0
        %781 = vmatprep.subr.bf16.mxu0 0
        %782 = vmatpush1.bf16.msra.mxu0 0
        %783 = vmatprep.subr.bf16.mxu0 0
        %784 = vmatpush1.bf16.msra.mxu0 0
        %785 = vmatprep.subr.bf16.mxu0 0
        %786 = vmatpush1.bf16.msra.mxu0 0
        %787 = vmatprep.subr.bf16.mxu0 0
        %788 = vmatpush1.bf16.msra.mxu0 0
        %789 = vmatprep.subr.bf16.mxu0 0
        %790 = vmatpush1.bf16.msra.mxu0 0
        %791 = vmatprep.subr.bf16.mxu0 0
        %792 = vmatpush1.bf16.msra.mxu0 0
        %793 = vmatprep.subr.bf16.mxu0 %v574
        %794 = vmatpush1.bf16.msra.mxu0 %v571
        %795 = vmatprep.subr.bf16.mxu0 %v493
        %796 = vmatpush1.bf16.msra.mxu0 %v492
        %797 = vmatprep.subr.bf16.mxu0 0
        %798 = vmatpush2.bf16.msra.mxu0 0
        %799 = vmatprep.subr.bf16.mxu0 0
        %800 = vmatpush2.bf16.msra.mxu0 0
        %801 = vmatprep.subr.bf16.mxu0 0
        %802 = vmatpush2.bf16.msra.mxu0 0
        %803 = vmatprep.subr.bf16.mxu0 0
        %804 = vmatpush2.bf16.msra.mxu0 0
        %805 = vmatprep.subr.bf16.mxu0 0
        %806 = vmatpush2.bf16.msra.mxu0 0
        %807 = vmatprep.subr.bf16.mxu0 0
        %808 = vmatpush2.bf16.msra.mxu0 0
        %809 = vmatprep.subr.bf16.mxu0 0
        %810 = vmatpush2.bf16.msra.mxu0 0
        %811 = vmatprep.subr.bf16.mxu0 0
        %812 = vmatpush2.bf16.msra.mxu0 0
        %813 = vmatprep.mubr.bf16.mxu0 0
        %814 = vmatmul.mubr.bf16.gmra.mxu0 %v516
        %v815 = vpop.f32.mrf.mxu0
        %v816 = vadd.f32 %v345, %v815
        %v817 = vpop.f32.mrf.mxu0
        %v818 = vadd.f32 %v349, %v817
        %v819 = vpop.f32.mrf.mxu0
        %v820 = vadd.f32 %v345, %v819
        %v821 = vpop.f32.mrf.mxu0
        %v822 = vadd.f32 %v349, %v821
        %823 = vmatprep.mubr.bf16.mxu0 0
        %824 = vmatmul.mubr.bf16.gmra.mxu0 %v519
        %v825 = vpop.f32.mrf.mxu0
        %v826 = vadd.f32 %v345, %v825
        %v827 = vpop.f32.mrf.mxu0
        %v828 = vadd.f32 %v349, %v827
        %v829 = vpop.f32.mrf.mxu0
        %v830 = vadd.f32 %v345, %v829
        %v831 = vpop.f32.mrf.mxu0
        %v832 = vadd.f32 %v349, %v831
        %833 = vmatprep.mubr.bf16.mxu0 0
        %834 = vmatmul.mubr.bf16.gmra.mxu0 %v522
        %v835 = vpop.f32.mrf.mxu0
        %v836 = vadd.f32 %v345, %v835
        %v837 = vpop.f32.mrf.mxu0
        %v838 = vadd.f32 %v349, %v837
        %v839 = vpop.f32.mrf.mxu0
        %v840 = vadd.f32 %v345, %v839
        %v841 = vpop.f32.mrf.mxu0
        %v842 = vadd.f32 %v349, %v841
        %843 = vmatprep.mubr.bf16.mxu0 0
        %844 = vmatmul.mubr.bf16.gmra.mxu0 %v525
        %v845 = vpop.f32.mrf.mxu0
        %v846 = vadd.f32 %v345, %v845
        %v847 = vpop.f32.mrf.mxu0
        %v848 = vadd.f32 %v349, %v847
        %v849 = vpop.f32.mrf.mxu0
        %v850 = vadd.f32 %v345, %v849
        %v851 = vpop.f32.mrf.mxu0
        %v852 = vadd.f32 %v349, %v851
        %853 = vmatprep.mubr.bf16.mxu0 0
        %854 = vmatmul.mubr.bf16.gmra.mxu0 %v528
        %v855 = vpop.f32.mrf.mxu0
        %v856 = vadd.f32 %v345, %v855
        %v857 = vpop.f32.mrf.mxu0
        %v858 = vadd.f32 %v349, %v857
        %v859 = vpop.f32.mrf.mxu0
        %v860 = vadd.f32 %v345, %v859
        %v861 = vpop.f32.mrf.mxu0
        %v862 = vadd.f32 %v349, %v861
        %863 = vmatprep.mubr.bf16.mxu0 0
        %864 = vmatmul.mubr.bf16.gmra.mxu0 %v531
        %v865 = vpop.f32.mrf.mxu0
        %v866 = vadd.f32 %v345, %v865
        %v867 = vpop.f32.mrf.mxu0
        %v868 = vadd.f32 %v349, %v867
        %v869 = vpop.f32.mrf.mxu0
        %v870 = vadd.f32 %v345, %v869
        %v871 = vpop.f32.mrf.mxu0
        %v872 = vadd.f32 %v349, %v871
        %873 = vmatprep.mubr.bf16.mxu0 0
        %874 = vmatmul.mubr.bf16.gmra.mxu0 %v534
        %v875 = vpop.f32.mrf.mxu0
        %v876 = vadd.f32 %v345, %v875
        %v877 = vpop.f32.mrf.mxu0
        %v878 = vadd.f32 %v349, %v877
        %v879 = vpop.f32.mrf.mxu0
        %v880 = vadd.f32 %v345, %v879
        %v881 = vpop.f32.mrf.mxu0
        %v882 = vadd.f32 %v349, %v881
        %883 = vmatprep.mubr.bf16.mxu0 0
        %884 = vmatmul.mubr.bf16.gmra.mxu0 %v537
        %v885 = vpop.f32.mrf.mxu0
        %v886 = vadd.f32 %v345, %v885
        %v887 = vpop.f32.mrf.mxu0
        %v888 = vadd.f32 %v349, %v887
        %v889 = vpop.f32.mrf.mxu0
        %v890 = vadd.f32 %v345, %v889
        %v891 = vpop.f32.mrf.mxu0
        %v892 = vadd.f32 %v349, %v891
        %893 = vmatprep.mubr.bf16.mxu0 0
        %894 = vmatmul.mubr.bf16.gmra.mxu0 %v540
        %v895 = vpop.f32.mrf.mxu0
        %v896 = vadd.f32 %v345, %v895
        %v897 = vpop.f32.mrf.mxu0
        %v898 = vadd.f32 %v349, %v897
        %v899 = vpop.f32.mrf.mxu0
        %v900 = vadd.f32 %v345, %v899
        %v901 = vpop.f32.mrf.mxu0
        %v902 = vadd.f32 %v349, %v901
        %903 = vmatprep.mubr.bf16.mxu0 0
        %904 = vmatmul.mubr.bf16.gmra.mxu0 %v543
        %v905 = vpop.f32.mrf.mxu0
        %v906 = vadd.f32 %v345, %v905
        %v907 = vpop.f32.mrf.mxu0
        %v908 = vadd.f32 %v349, %v907
        %v909 = vpop.f32.mrf.mxu0
        %v910 = vadd.f32 %v345, %v909
        %v911 = vpop.f32.mrf.mxu0
        %v912 = vadd.f32 %v349, %v911
        %913 = vmatprep.mubr.bf16.mxu0 0
        %914 = vmatmul.mubr.bf16.gmra.mxu0 %v546
        %v915 = vpop.f32.mrf.mxu0
        %v916 = vadd.f32 %v345, %v915
        %v917 = vpop.f32.mrf.mxu0
        %v918 = vadd.f32 %v349, %v917
        %v919 = vpop.f32.mrf.mxu0
        %v920 = vadd.f32 %v345, %v919
        %v921 = vpop.f32.mrf.mxu0
        %v922 = vadd.f32 %v349, %v921
        %923 = vmatprep.mubr.bf16.mxu0 0
        %924 = vmatmul.mubr.bf16.gmra.mxu0 %v549
        %v925 = vpop.f32.mrf.mxu0
        %v926 = vadd.f32 %v345, %v925
        %v927 = vpop.f32.mrf.mxu0
        %v928 = vadd.f32 %v349, %v927
        %v929 = vpop.f32.mrf.mxu0
        %v930 = vadd.f32 %v345, %v929
        %v931 = vpop.f32.mrf.mxu0
        %v932 = vadd.f32 %v349, %v931
        %933 = vmatprep.mubr.bf16.mxu0 0
        %934 = vmatmul.mubr.bf16.gmra.mxu0 %v552
        %v935 = vpop.f32.mrf.mxu0
        %v936 = vadd.f32 %v345, %v935
        %v937 = vpop.f32.mrf.mxu0
        %v938 = vadd.f32 %v349, %v937
        %v939 = vpop.f32.mrf.mxu0
        %v940 = vadd.f32 %v345, %v939
        %v941 = vpop.f32.mrf.mxu0
        %v942 = vadd.f32 %v349, %v941
        %943 = vmatprep.mubr.bf16.mxu0 0
        %944 = vmatmul.mubr.bf16.gmra.mxu0 %v555
        %v945 = vpop.f32.mrf.mxu0
        %v946 = vadd.f32 %v345, %v945
        %v947 = vpop.f32.mrf.mxu0
        %v948 = vadd.f32 %v349, %v947
        %v949 = vpop.f32.mrf.mxu0
        %v950 = vadd.f32 %v345, %v949
        %v951 = vpop.f32.mrf.mxu0
        %v952 = vadd.f32 %v349, %v951
        %953 = vmatprep.mubr.bf16.mxu0 0
        %954 = vmatmul.mubr.bf16.gmra.mxu0 %v558
        %v955 = vpop.f32.mrf.mxu0
        %v956 = vadd.f32 %v345, %v955
        %v957 = vpop.f32.mrf.mxu0
        %v958 = vadd.f32 %v349, %v957
        %v959 = vpop.f32.mrf.mxu0
        %v960 = vadd.f32 %v345, %v959
        %v961 = vpop.f32.mrf.mxu0
        %v962 = vadd.f32 %v349, %v961
        %963 = vmatprep.mubr.bf16.mxu0 0
        %964 = vmatmul.mubr.bf16.gmra.mxu0 %v561
        %v965 = vpop.f32.mrf.mxu0
        %v966 = vadd.f32 %v345, %v965
        %v967 = vpop.f32.mrf.mxu0
        %v968 = vadd.f32 %v349, %v967
        %v969 = vpop.f32.mrf.mxu0
        %v970 = vadd.f32 %v345, %v969
        %v971 = vpop.f32.mrf.mxu0
        %v972 = vadd.f32 %v349, %v971
        %973 = vdwg.mxu0
        %974 = vmatprep.subr.bf16.mxu0 0
        %975 = vmatpush1.bf16.msra.mxu0 0
        %976 = vmatprep.subr.bf16.mxu0 0
        %977 = vmatpush1.bf16.msra.mxu0 0
        %978 = vmatprep.subr.bf16.mxu0 0
        %979 = vmatpush1.bf16.msra.mxu0 0
        %980 = vmatprep.subr.bf16.mxu0 0
        %981 = vmatpush1.bf16.msra.mxu0 0
        %982 = vmatprep.subr.bf16.mxu0 0
        %983 = vmatpush1.bf16.msra.mxu0 0
        %984 = vmatprep.subr.bf16.mxu0 0
        %985 = vmatpush1.bf16.msra.mxu0 0
        %986 = vmatprep.subr.bf16.mxu0 %v580
        %987 = vmatpush1.bf16.msra.mxu0 %v577
        %988 = vmatprep.subr.bf16.mxu0 %v495
        %989 = vmatpush1.bf16.msra.mxu0 %v494
        %990 = vmatprep.subr.bf16.mxu0 0
        %991 = vmatpush2.bf16.msra.mxu0 0
        %992 = vmatprep.subr.bf16.mxu0 0
        %993 = vmatpush2.bf16.msra.mxu0 0
        %994 = vmatprep.subr.bf16.mxu0 0
        %995 = vmatpush2.bf16.msra.mxu0 0
        %996 = vmatprep.subr.bf16.mxu0 0
        %997 = vmatpush2.bf16.msra.mxu0 0
        %998 = vmatprep.subr.bf16.mxu0 0
        %999 = vmatpush2.bf16.msra.mxu0 0
        %1000 = vmatprep.subr.bf16.mxu0 0
        %1001 = vmatpush2.bf16.msra.mxu0 0
        %1002 = vmatprep.subr.bf16.mxu0 0
        %1003 = vmatpush2.bf16.msra.mxu0 0
        %1004 = vmatprep.subr.bf16.mxu0 0
        %1005 = vmatpush2.bf16.msra.mxu0 0
        %1006 = vmatprep.mubr.bf16.mxu0 0
        %1007 = vmatmul.mubr.bf16.gmra.mxu0 %v516
        %v1008 = vpop.f32.mrf.mxu0
        %v1009 = vadd.f32 %v353, %v1008
        %v1010 = vpop.f32.mrf.mxu0
        %v1011 = vadd.f32 %v357, %v1010
        %v1012 = vpop.f32.mrf.mxu0
        %v1013 = vadd.f32 %v353, %v1012
        %v1014 = vpop.f32.mrf.mxu0
        %v1015 = vadd.f32 %v357, %v1014
        %1016 = vmatprep.mubr.bf16.mxu0 0
        %1017 = vmatmul.mubr.bf16.gmra.mxu0 %v519
        %v1018 = vpop.f32.mrf.mxu0
        %v1019 = vadd.f32 %v353, %v1018
        %v1020 = vpop.f32.mrf.mxu0
        %v1021 = vadd.f32 %v357, %v1020
        %v1022 = vpop.f32.mrf.mxu0
        %v1023 = vadd.f32 %v353, %v1022
        %v1024 = vpop.f32.mrf.mxu0
        %v1025 = vadd.f32 %v357, %v1024
        %1026 = vmatprep.mubr.bf16.mxu0 0
        %1027 = vmatmul.mubr.bf16.gmra.mxu0 %v522
        %v1028 = vpop.f32.mrf.mxu0
        %v1029 = vadd.f32 %v353, %v1028
        %v1030 = vpop.f32.mrf.mxu0
        %v1031 = vadd.f32 %v357, %v1030
        %v1032 = vpop.f32.mrf.mxu0
        %v1033 = vadd.f32 %v353, %v1032
        %v1034 = vpop.f32.mrf.mxu0
        %v1035 = vadd.f32 %v357, %v1034
        %1036 = vmatprep.mubr.bf16.mxu0 0
        %1037 = vmatmul.mubr.bf16.gmra.mxu0 %v525
        %v1038 = vpop.f32.mrf.mxu0
        %v1039 = vadd.f32 %v353, %v1038
        %v1040 = vpop.f32.mrf.mxu0
        %v1041 = vadd.f32 %v357, %v1040
        %v1042 = vpop.f32.mrf.mxu0
        %v1043 = vadd.f32 %v353, %v1042
        %v1044 = vpop.f32.mrf.mxu0
        %v1045 = vadd.f32 %v357, %v1044
        %1046 = vmatprep.mubr.bf16.mxu0 0
        %1047 = vmatmul.mubr.bf16.gmra.mxu0 %v528
        %v1048 = vpop.f32.mrf.mxu0
        %v1049 = vadd.f32 %v353, %v1048
        %v1050 = vpop.f32.mrf.mxu0
        %v1051 = vadd.f32 %v357, %v1050
        %v1052 = vpop.f32.mrf.mxu0
        %v1053 = vadd.f32 %v353, %v1052
        %v1054 = vpop.f32.mrf.mxu0
        %v1055 = vadd.f32 %v357, %v1054
        %1056 = vmatprep.mubr.bf16.mxu0 0
        %1057 = vmatmul.mubr.bf16.gmra.mxu0 %v531
        %v1058 = vpop.f32.mrf.mxu0
        %v1059 = vadd.f32 %v353, %v1058
        %v1060 = vpop.f32.mrf.mxu0
        %v1061 = vadd.f32 %v357, %v1060
        %v1062 = vpop.f32.mrf.mxu0
        %v1063 = vadd.f32 %v353, %v1062
        %v1064 = vpop.f32.mrf.mxu0
        %v1065 = vadd.f32 %v357, %v1064
        %1066 = vmatprep.mubr.bf16.mxu0 0
        %1067 = vmatmul.mubr.bf16.gmra.mxu0 %v534
        %v1068 = vpop.f32.mrf.mxu0
        %v1069 = vadd.f32 %v353, %v1068
        %v1070 = vpop.f32.mrf.mxu0
        %v1071 = vadd.f32 %v357, %v1070
        %v1072 = vpop.f32.mrf.mxu0
        %v1073 = vadd.f32 %v353, %v1072
        %v1074 = vpop.f32.mrf.mxu0
        %v1075 = vadd.f32 %v357, %v1074
        %1076 = vmatprep.mubr.bf16.mxu0 0
        %1077 = vmatmul.mubr.bf16.gmra.mxu0 %v537
        %v1078 = vpop.f32.mrf.mxu0
        %v1079 = vadd.f32 %v353, %v1078
        %v1080 = vpop.f32.mrf.mxu0
        %v1081 = vadd.f32 %v357, %v1080
        %v1082 = vpop.f32.mrf.mxu0
        %v1083 = vadd.f32 %v353, %v1082
        %v1084 = vpop.f32.mrf.mxu0
        %v1085 = vadd.f32 %v357, %v1084
        %1086 = vmatprep.mubr.bf16.mxu0 0
        %1087 = vmatmul.mubr.bf16.gmra.mxu0 %v540
        %v1088 = vpop.f32.mrf.mxu0
        %v1089 = vadd.f32 %v353, %v1088
        %v1090 = vpop.f32.mrf.mxu0
        %v1091 = vadd.f32 %v357, %v1090
        %v1092 = vpop.f32.mrf.mxu0
        %v1093 = vadd.f32 %v353, %v1092
        %v1094 = vpop.f32.mrf.mxu0
        %v1095 = vadd.f32 %v357, %v1094
        %1096 = vmatprep.mubr.bf16.mxu0 0
        %1097 = vmatmul.mubr.bf16.gmra.mxu0 %v543
        %v1098 = vpop.f32.mrf.mxu0
        %v1099 = vadd.f32 %v353, %v1098
        %v1100 = vpop.f32.mrf.mxu0
        %v1101 = vadd.f32 %v357, %v1100
        %v1102 = vpop.f32.mrf.mxu0
        %v1103 = vadd.f32 %v353, %v1102
        %v1104 = vpop.f32.mrf.mxu0
        %v1105 = vadd.f32 %v357, %v1104
        %1106 = vmatprep.mubr.bf16.mxu0 0
        %1107 = vmatmul.mubr.bf16.gmra.mxu0 %v546
        %v1108 = vpop.f32.mrf.mxu0
        %v1109 = vadd.f32 %v353, %v1108
        %v1110 = vpop.f32.mrf.mxu0
        %v1111 = vadd.f32 %v357, %v1110
        %v1112 = vpop.f32.mrf.mxu0
        %v1113 = vadd.f32 %v353, %v1112
        %v1114 = vpop.f32.mrf.mxu0
        %v1115 = vadd.f32 %v357, %v1114
        %1116 = vmatprep.mubr.bf16.mxu0 0
        %1117 = vmatmul.mubr.bf16.gmra.mxu0 %v549
        %v1118 = vpop.f32.mrf.mxu0
        %v1119 = vadd.f32 %v353, %v1118
        %v1120 = vpop.f32.mrf.mxu0
        %v1121 = vadd.f32 %v357, %v1120
        %v1122 = vpop.f32.mrf.mxu0
        %v1123 = vadd.f32 %v353, %v1122
        %v1124 = vpop.f32.mrf.mxu0
        %v1125 = vadd.f32 %v357, %v1124
        %1126 = vmatprep.mubr.bf16.mxu0 0
        %1127 = vmatmul.mubr.bf16.gmra.mxu0 %v552
        %v1128 = vpop.f32.mrf.mxu0
        %v1129 = vadd.f32 %v353, %v1128
        %v1130 = vpop.f32.mrf.mxu0
        %v1131 = vadd.f32 %v357, %v1130
        %v1132 = vpop.f32.mrf.mxu0
        %v1133 = vadd.f32 %v353, %v1132
        %v1134 = vpop.f32.mrf.mxu0
        %v1135 = vadd.f32 %v357, %v1134
        %1136 = vmatprep.mubr.bf16.mxu0 0
        %1137 = vmatmul.mubr.bf16.gmra.mxu0 %v555
        %v1138 = vpop.f32.mrf.mxu0
        %v1139 = vadd.f32 %v353, %v1138
        %v1140 = vpop.f32.mrf.mxu0
        %v1141 = vadd.f32 %v357, %v1140
        %v1142 = vpop.f32.mrf.mxu0
        %v1143 = vadd.f32 %v353, %v1142
        %v1144 = vpop.f32.mrf.mxu0
        %v1145 = vadd.f32 %v357, %v1144
        %1146 = vmatprep.mubr.bf16.mxu0 0
        %1147 = vmatmul.mubr.bf16.gmra.mxu0 %v558
        %v1148 = vpop.f32.mrf.mxu0
        %v1149 = vadd.f32 %v353, %v1148
        %v1150 = vpop.f32.mrf.mxu0
        %v1151 = vadd.f32 %v357, %v1150
        %v1152 = vpop.f32.mrf.mxu0
        %v1153 = vadd.f32 %v353, %v1152
        %v1154 = vpop.f32.mrf.mxu0
        %v1155 = vadd.f32 %v357, %v1154
        %1156 = vmatprep.mubr.bf16.mxu0 0
        %1157 = vmatmul.mubr.bf16.gmra.mxu0 %v561
        %v1158 = vpop.f32.mrf.mxu0
        %v1159 = vadd.f32 %v353, %v1158
        %v1160 = vpop.f32.mrf.mxu0
        %v1161 = vadd.f32 %v357, %v1160
        %v1162 = vpop.f32.mrf.mxu0
        %v1163 = vadd.f32 %v353, %v1162
        %v1164 = vpop.f32.mrf.mxu0
        %v1165 = vadd.f32 %v357, %v1164
        %1166 = vdwg.mxu0
        %1167 = vmatprep.subr.bf16.mxu0 0
        %1168 = vmatpush1.bf16.msra.mxu0 0
        %1169 = vmatprep.subr.bf16.mxu0 0
        %1170 = vmatpush1.bf16.msra.mxu0 0
        %1171 = vmatprep.subr.bf16.mxu0 0
        %1172 = vmatpush1.bf16.msra.mxu0 0
        %1173 = vmatprep.subr.bf16.mxu0 0
        %1174 = vmatpush1.bf16.msra.mxu0 0
        %1175 = vmatprep.subr.bf16.mxu0 0
        %1176 = vmatpush1.bf16.msra.mxu0 0
        %1177 = vmatprep.subr.bf16.mxu0 0
        %1178 = vmatpush1.bf16.msra.mxu0 0
        %1179 = vmatprep.subr.bf16.mxu0 %v586
        %1180 = vmatpush1.bf16.msra.mxu0 %v583
        %1181 = vmatprep.subr.bf16.mxu0 %v497
        %1182 = vmatpush1.bf16.msra.mxu0 %v496
        %1183 = vmatprep.subr.bf16.mxu0 0
        %1184 = vmatpush2.bf16.msra.mxu0 0
        %1185 = vmatprep.subr.bf16.mxu0 0
        %1186 = vmatpush2.bf16.msra.mxu0 0
        %1187 = vmatprep.subr.bf16.mxu0 0
        %1188 = vmatpush2.bf16.msra.mxu0 0
        %1189 = vmatprep.subr.bf16.mxu0 0
        %1190 = vmatpush2.bf16.msra.mxu0 0
        %1191 = vmatprep.subr.bf16.mxu0 0
        %1192 = vmatpush2.bf16.msra.mxu0 0
        %1193 = vmatprep.subr.bf16.mxu0 0
        %1194 = vmatpush2.bf16.msra.mxu0 0
        %1195 = vmatprep.subr.bf16.mxu0 0
        %1196 = vmatpush2.bf16.msra.mxu0 0
        %1197 = vmatprep.subr.bf16.mxu0 0
        %1198 = vmatpush2.bf16.msra.mxu0 0
        %1199 = vmatprep.mubr.bf16.mxu0 0
        %1200 = vmatmul.mubr.bf16.gmra.mxu0 %v516
        %v1201 = vpop.f32.mrf.mxu0
        %v1202 = vadd.f32 %v361, %v1201
        %v1203 = vpop.f32.mrf.mxu0
        %v1204 = vadd.f32 %v365, %v1203
        %v1205 = vpop.f32.mrf.mxu0
        %v1206 = vadd.f32 %v361, %v1205
        %v1207 = vpop.f32.mrf.mxu0
        %v1208 = vadd.f32 %v365, %v1207
        %1209 = vmatprep.mubr.bf16.mxu0 0
        %1210 = vmatmul.mubr.bf16.gmra.mxu0 %v519
        %v1211 = vpop.f32.mrf.mxu0
        %v1212 = vadd.f32 %v361, %v1211
        %v1213 = vpop.f32.mrf.mxu0
        %v1214 = vadd.f32 %v365, %v1213
        %v1215 = vpop.f32.mrf.mxu0
        %v1216 = vadd.f32 %v361, %v1215
        %v1217 = vpop.f32.mrf.mxu0
        %v1218 = vadd.f32 %v365, %v1217
        %1219 = vmatprep.mubr.bf16.mxu0 0
        %1220 = vmatmul.mubr.bf16.gmra.mxu0 %v522
        %v1221 = vpop.f32.mrf.mxu0
        %v1222 = vadd.f32 %v361, %v1221
        %v1223 = vpop.f32.mrf.mxu0
        %v1224 = vadd.f32 %v365, %v1223
        %v1225 = vpop.f32.mrf.mxu0
        %v1226 = vadd.f32 %v361, %v1225
        %v1227 = vpop.f32.mrf.mxu0
        %v1228 = vadd.f32 %v365, %v1227
        %1229 = vmatprep.mubr.bf16.mxu0 0
        %1230 = vmatmul.mubr.bf16.gmra.mxu0 %v525
        %v1231 = vpop.f32.mrf.mxu0
        %v1232 = vadd.f32 %v361, %v1231
        %v1233 = vpop.f32.mrf.mxu0
        %v1234 = vadd.f32 %v365, %v1233
        %v1235 = vpop.f32.mrf.mxu0
        %v1236 = vadd.f32 %v361, %v1235
        %v1237 = vpop.f32.mrf.mxu0
        %v1238 = vadd.f32 %v365, %v1237
        %1239 = vmatprep.mubr.bf16.mxu0 0
        %1240 = vmatmul.mubr.bf16.gmra.mxu0 %v528
        %v1241 = vpop.f32.mrf.mxu0
        %v1242 = vadd.f32 %v361, %v1241
        %v1243 = vpop.f32.mrf.mxu0
        %v1244 = vadd.f32 %v365, %v1243
        %v1245 = vpop.f32.mrf.mxu0
        %v1246 = vadd.f32 %v361, %v1245
        %v1247 = vpop.f32.mrf.mxu0
        %v1248 = vadd.f32 %v365, %v1247
        %1249 = vmatprep.mubr.bf16.mxu0 0
        %1250 = vmatmul.mubr.bf16.gmra.mxu0 %v531
        %v1251 = vpop.f32.mrf.mxu0
        %v1252 = vadd.f32 %v361, %v1251
        %v1253 = vpop.f32.mrf.mxu0
        %v1254 = vadd.f32 %v365, %v1253
        %v1255 = vpop.f32.mrf.mxu0
        %v1256 = vadd.f32 %v361, %v1255
        %v1257 = vpop.f32.mrf.mxu0
        %v1258 = vadd.f32 %v365, %v1257
        %1259 = vmatprep.mubr.bf16.mxu0 0
        %1260 = vmatmul.mubr.bf16.gmra.mxu0 %v534
        %v1261 = vpop.f32.mrf.mxu0
        %v1262 = vadd.f32 %v361, %v1261
        %v1263 = vpop.f32.mrf.mxu0
        %v1264 = vadd.f32 %v365, %v1263
        %v1265 = vpop.f32.mrf.mxu0
        %v1266 = vadd.f32 %v361, %v1265
        %v1267 = vpop.f32.mrf.mxu0
        %v1268 = vadd.f32 %v365, %v1267
        %1269 = vmatprep.mubr.bf16.mxu0 0
        %1270 = vmatmul.mubr.bf16.gmra.mxu0 %v537
        %v1271 = vpop.f32.mrf.mxu0
        %v1272 = vadd.f32 %v361, %v1271
        %v1273 = vpop.f32.mrf.mxu0
        %v1274 = vadd.f32 %v365, %v1273
        %v1275 = vpop.f32.mrf.mxu0
        %v1276 = vadd.f32 %v361, %v1275
        %v1277 = vpop.f32.mrf.mxu0
        %v1278 = vadd.f32 %v365, %v1277
        %1279 = vmatprep.mubr.bf16.mxu0 0
        %1280 = vmatmul.mubr.bf16.gmra.mxu0 %v540
        %v1281 = vpop.f32.mrf.mxu0
        %v1282 = vadd.f32 %v361, %v1281
        %v1283 = vpop.f32.mrf.mxu0
        %v1284 = vadd.f32 %v365, %v1283
        %v1285 = vpop.f32.mrf.mxu0
        %v1286 = vadd.f32 %v361, %v1285
        %v1287 = vpop.f32.mrf.mxu0
        %v1288 = vadd.f32 %v365, %v1287
        %1289 = vmatprep.mubr.bf16.mxu0 0
        %1290 = vmatmul.mubr.bf16.gmra.mxu0 %v543
        %v1291 = vpop.f32.mrf.mxu0
        %v1292 = vadd.f32 %v361, %v1291
        %v1293 = vpop.f32.mrf.mxu0
        %v1294 = vadd.f32 %v365, %v1293
        %v1295 = vpop.f32.mrf.mxu0
        %v1296 = vadd.f32 %v361, %v1295
        %v1297 = vpop.f32.mrf.mxu0
        %v1298 = vadd.f32 %v365, %v1297
        %1299 = vmatprep.mubr.bf16.mxu0 0
        %1300 = vmatmul.mubr.bf16.gmra.mxu0 %v546
        %v1301 = vpop.f32.mrf.mxu0
        %v1302 = vadd.f32 %v361, %v1301
        %v1303 = vpop.f32.mrf.mxu0
        %v1304 = vadd.f32 %v365, %v1303
        %v1305 = vpop.f32.mrf.mxu0
        %v1306 = vadd.f32 %v361, %v1305
        %v1307 = vpop.f32.mrf.mxu0
        %v1308 = vadd.f32 %v365, %v1307
        %1309 = vmatprep.mubr.bf16.mxu0 0
        %1310 = vmatmul.mubr.bf16.gmra.mxu0 %v549
        %v1311 = vpop.f32.mrf.mxu0
        %v1312 = vadd.f32 %v361, %v1311
        %v1313 = vpop.f32.mrf.mxu0
        %v1314 = vadd.f32 %v365, %v1313
        %v1315 = vpop.f32.mrf.mxu0
        %v1316 = vadd.f32 %v361, %v1315
        %v1317 = vpop.f32.mrf.mxu0
        %v1318 = vadd.f32 %v365, %v1317
        %1319 = vmatprep.mubr.bf16.mxu0 0
        %1320 = vmatmul.mubr.bf16.gmra.mxu0 %v552
        %v1321 = vpop.f32.mrf.mxu0
        %v1322 = vadd.f32 %v361, %v1321
        %v1323 = vpop.f32.mrf.mxu0
        %v1324 = vadd.f32 %v365, %v1323
        %v1325 = vpop.f32.mrf.mxu0
        %v1326 = vadd.f32 %v361, %v1325
        %v1327 = vpop.f32.mrf.mxu0
        %v1328 = vadd.f32 %v365, %v1327
        %1329 = vmatprep.mubr.bf16.mxu0 0
        %1330 = vmatmul.mubr.bf16.gmra.mxu0 %v555
        %v1331 = vpop.f32.mrf.mxu0
        %v1332 = vadd.f32 %v361, %v1331
        %v1333 = vpop.f32.mrf.mxu0
        %v1334 = vadd.f32 %v365, %v1333
        %v1335 = vpop.f32.mrf.mxu0
        %v1336 = vadd.f32 %v361, %v1335
        %v1337 = vpop.f32.mrf.mxu0
        %v1338 = vadd.f32 %v365, %v1337
        %1339 = vmatprep.mubr.bf16.mxu0 0
        %1340 = vmatmul.mubr.bf16.gmra.mxu0 %v558
        %v1341 = vpop.f32.mrf.mxu0
        %v1342 = vadd.f32 %v361, %v1341
        %v1343 = vpop.f32.mrf.mxu0
        %v1344 = vadd.f32 %v365, %v1343
        %v1345 = vpop.f32.mrf.mxu0
        %v1346 = vadd.f32 %v361, %v1345
        %v1347 = vpop.f32.mrf.mxu0
        %v1348 = vadd.f32 %v365, %v1347
        %1349 = vmatprep.mubr.bf16.mxu0 0
        %1350 = vmatmul.mubr.bf16.gmra.mxu0 %v561
        %v1351 = vpop.f32.mrf.mxu0
        %v1352 = vadd.f32 %v361, %v1351
        %v1353 = vpop.f32.mrf.mxu0
        %v1354 = vadd.f32 %v365, %v1353
        %v1355 = vpop.f32.mrf.mxu0
        %v1356 = vadd.f32 %v361, %v1355
        %v1357 = vpop.f32.mrf.mxu0
        %v1358 = vadd.f32 %v365, %v1357
        %1359 = vdwg.mxu0
        %v1360 = vmax.f32 %v623, 0.0
        %v1361 = vmax.f32 %v625, 0.0
        %v1362 = vmax.f32 %v816, 0.0
        %v1363 = vmax.f32 %v818, 0.0
        %v1364 = vmax.f32 %v1009, 0.0
        %v1365 = vmax.f32 %v1011, 0.0
        %v1366 = vmax.f32 %v1202, 0.0
        %v1367 = vmax.f32 %v1204, 0.0
        %v1368 = vmax.f32 %v627, 0.0
        %v1369 = vmax.f32 %v629, 0.0
        %v1370 = vmax.f32 %v820, 0.0
        %v1371 = vmax.f32 %v822, 0.0
        %v1372 = vmax.f32 %v1013, 0.0
        %v1373 = vmax.f32 %v1015, 0.0
        %v1374 = vmax.f32 %v1206, 0.0
        %v1375 = vmax.f32 %v1208, 0.0
        %v1376 = vmax.f32 %v633, 0.0
        %v1377 = vmax.f32 %v635, 0.0
        %v1378 = vmax.f32 %v826, 0.0
        %v1379 = vmax.f32 %v828, 0.0
        %v1380 = vmax.f32 %v1019, 0.0
        %v1381 = vmax.f32 %v1021, 0.0
        %v1382 = vmax.f32 %v1212, 0.0
        %v1383 = vmax.f32 %v1214, 0.0
        %v1384 = vmax.f32 %v637, 0.0
        %v1385 = vmax.f32 %v639, 0.0
        %v1386 = vmax.f32 %v830, 0.0
        %v1387 = vmax.f32 %v832, 0.0
        %v1388 = vmax.f32 %v1023, 0.0
        %v1389 = vmax.f32 %v1025, 0.0
        %v1390 = vmax.f32 %v1216, 0.0
        %v1391 = vmax.f32 %v1218, 0.0
        %v1392 = vmax.f32 %v643, 0.0
        %v1393 = vmax.f32 %v645, 0.0
        %v1394 = vmax.f32 %v836, 0.0
        %v1395 = vmax.f32 %v838, 0.0
        %v1396 = vmax.f32 %v1029, 0.0
        %v1397 = vmax.f32 %v1031, 0.0
        %v1398 = vmax.f32 %v1222, 0.0
        %v1399 = vmax.f32 %v1224, 0.0
        %v1400 = vmax.f32 %v647, 0.0
        %v1401 = vmax.f32 %v649, 0.0
        %v1402 = vmax.f32 %v840, 0.0
        %v1403 = vmax.f32 %v842, 0.0
        %v1404 = vmax.f32 %v1033, 0.0
        %v1405 = vmax.f32 %v1035, 0.0
        %v1406 = vmax.f32 %v1226, 0.0
        %v1407 = vmax.f32 %v1228, 0.0
        %v1408 = vmax.f32 %v653, 0.0
        %v1409 = vmax.f32 %v655, 0.0
        %v1410 = vmax.f32 %v846, 0.0
        %v1411 = vmax.f32 %v848, 0.0
        %v1412 = vmax.f32 %v1039, 0.0
        %v1413 = vmax.f32 %v1041, 0.0
        %v1414 = vmax.f32 %v1232, 0.0
        %v1415 = vmax.f32 %v1234, 0.0
        %v1416 = vmax.f32 %v657, 0.0
        %v1417 = vmax.f32 %v659, 0.0
        %v1418 = vmax.f32 %v850, 0.0
        %v1419 = vmax.f32 %v852, 0.0
        %v1420 = vmax.f32 %v1043, 0.0
        %v1421 = vmax.f32 %v1045, 0.0
        %v1422 = vmax.f32 %v1236, 0.0
        %v1423 = vmax.f32 %v1238, 0.0
        %v1424 = vmax.f32 %v663, 0.0
        %v1425 = vmax.f32 %v665, 0.0
        %v1426 = vmax.f32 %v856, 0.0
        %v1427 = vmax.f32 %v858, 0.0
        %v1428 = vmax.f32 %v1049, 0.0
        %v1429 = vmax.f32 %v1051, 0.0
        %v1430 = vmax.f32 %v1242, 0.0
        %v1431 = vmax.f32 %v1244, 0.0
        %v1432 = vmax.f32 %v667, 0.0
        %v1433 = vmax.f32 %v669, 0.0
        %v1434 = vmax.f32 %v860, 0.0
        %v1435 = vmax.f32 %v862, 0.0
        %v1436 = vmax.f32 %v1053, 0.0
        %v1437 = vmax.f32 %v1055, 0.0
        %v1438 = vmax.f32 %v1246, 0.0
        %v1439 = vmax.f32 %v1248, 0.0
        %v1440 = vmax.f32 %v673, 0.0
        %v1441 = vmax.f32 %v675, 0.0
        %v1442 = vmax.f32 %v866, 0.0
        %v1443 = vmax.f32 %v868, 0.0
        %v1444 = vmax.f32 %v1059, 0.0
        %v1445 = vmax.f32 %v1061, 0.0
        %v1446 = vmax.f32 %v1252, 0.0
        %v1447 = vmax.f32 %v1254, 0.0
        %v1448 = vmax.f32 %v677, 0.0
        %v1449 = vmax.f32 %v679, 0.0
        %v1450 = vmax.f32 %v870, 0.0
        %v1451 = vmax.f32 %v872, 0.0
        %v1452 = vmax.f32 %v1063, 0.0
        %v1453 = vmax.f32 %v1065, 0.0
        %v1454 = vmax.f32 %v1256, 0.0
        %v1455 = vmax.f32 %v1258, 0.0
        %v1456 = vmax.f32 %v683, 0.0
        %v1457 = vmax.f32 %v685, 0.0
        %v1458 = vmax.f32 %v876, 0.0
        %v1459 = vmax.f32 %v878, 0.0
        %v1460 = vmax.f32 %v1069, 0.0
        %v1461 = vmax.f32 %v1071, 0.0
        %v1462 = vmax.f32 %v1262, 0.0
        %v1463 = vmax.f32 %v1264, 0.0
        %v1464 = vmax.f32 %v687, 0.0
        %v1465 = vmax.f32 %v689, 0.0
        %v1466 = vmax.f32 %v880, 0.0
        %v1467 = vmax.f32 %v882, 0.0
        %v1468 = vmax.f32 %v1073, 0.0
        %v1469 = vmax.f32 %v1075, 0.0
        %v1470 = vmax.f32 %v1266, 0.0
        %v1471 = vmax.f32 %v1268, 0.0
        %v1472 = vmax.f32 %v693, 0.0
        %v1473 = vmax.f32 %v695, 0.0
        %v1474 = vmax.f32 %v886, 0.0
        %v1475 = vmax.f32 %v888, 0.0
        %v1476 = vmax.f32 %v1079, 0.0
        %v1477 = vmax.f32 %v1081, 0.0
        %v1478 = vmax.f32 %v1272, 0.0
        %v1479 = vmax.f32 %v1274, 0.0
        %v1480 = vmax.f32 %v697, 0.0
        %v1481 = vmax.f32 %v699, 0.0
        %v1482 = vmax.f32 %v890, 0.0
        %v1483 = vmax.f32 %v892, 0.0
        %v1484 = vmax.f32 %v1083, 0.0
        %v1485 = vmax.f32 %v1085, 0.0
        %v1486 = vmax.f32 %v1276, 0.0
        %v1487 = vmax.f32 %v1278, 0.0
        %v1488 = vmax.f32 %v703, 0.0
        %v1489 = vmax.f32 %v705, 0.0
        %v1490 = vmax.f32 %v896, 0.0
        %v1491 = vmax.f32 %v898, 0.0
        %v1492 = vmax.f32 %v1089, 0.0
        %v1493 = vmax.f32 %v1091, 0.0
        %v1494 = vmax.f32 %v1282, 0.0
        %v1495 = vmax.f32 %v1284, 0.0
        %v1496 = vmax.f32 %v707, 0.0
        %v1497 = vmax.f32 %v709, 0.0
        %v1498 = vmax.f32 %v900, 0.0
        %v1499 = vmax.f32 %v902, 0.0
        %v1500 = vmax.f32 %v1093, 0.0
        %v1501 = vmax.f32 %v1095, 0.0
        %v1502 = vmax.f32 %v1286, 0.0
        %v1503 = vmax.f32 %v1288, 0.0
        %v1504 = vmax.f32 %v713, 0.0
        %v1505 = vmax.f32 %v715, 0.0
        %v1506 = vmax.f32 %v906, 0.0
        %v1507 = vmax.f32 %v908, 0.0
        %v1508 = vmax.f32 %v1099, 0.0
        %v1509 = vmax.f32 %v1101, 0.0
        %v1510 = vmax.f32 %v1292, 0.0
        %v1511 = vmax.f32 %v1294, 0.0
        %v1512 = vmax.f32 %v717, 0.0
        %v1513 = vmax.f32 %v719, 0.0
        %v1514 = vmax.f32 %v910, 0.0
        %v1515 = vmax.f32 %v912, 0.0
        %v1516 = vmax.f32 %v1103, 0.0
        %v1517 = vmax.f32 %v1105, 0.0
        %v1518 = vmax.f32 %v1296, 0.0
        %v1519 = vmax.f32 %v1298, 0.0
        %v1520 = vmax.f32 %v723, 0.0
        %v1521 = vmax.f32 %v725, 0.0
        %v1522 = vmax.f32 %v916, 0.0
        %v1523 = vmax.f32 %v918, 0.0
        %v1524 = vmax.f32 %v1109, 0.0
        %v1525 = vmax.f32 %v1111, 0.0
        %v1526 = vmax.f32 %v1302, 0.0
        %v1527 = vmax.f32 %v1304, 0.0
        %v1528 = vmax.f32 %v727, 0.0
        %v1529 = vmax.f32 %v729, 0.0
        %v1530 = vmax.f32 %v920, 0.0
        %v1531 = vmax.f32 %v922, 0.0
        %v1532 = vmax.f32 %v1113, 0.0
        %v1533 = vmax.f32 %v1115, 0.0
        %v1534 = vmax.f32 %v1306, 0.0
        %v1535 = vmax.f32 %v1308, 0.0
        %v1536 = vmax.f32 %v733, 0.0
        %v1537 = vmax.f32 %v735, 0.0
        %v1538 = vmax.f32 %v926, 0.0
        %v1539 = vmax.f32 %v928, 0.0
        %v1540 = vmax.f32 %v1119, 0.0
        %v1541 = vmax.f32 %v1121, 0.0
        %v1542 = vmax.f32 %v1312, 0.0
        %v1543 = vmax.f32 %v1314, 0.0
        %v1544 = vmax.f32 %v737, 0.0
        %v1545 = vmax.f32 %v739, 0.0
        %v1546 = vmax.f32 %v930, 0.0
        %v1547 = vmax.f32 %v932, 0.0
        %v1548 = vmax.f32 %v1123, 0.0
        %v1549 = vmax.f32 %v1125, 0.0
        %v1550 = vmax.f32 %v1316, 0.0
        %v1551 = vmax.f32 %v1318, 0.0
        %v1552 = vmax.f32 %v743, 0.0
        %v1553 = vmax.f32 %v745, 0.0
        %v1554 = vmax.f32 %v936, 0.0
        %v1555 = vmax.f32 %v938, 0.0
        %v1556 = vmax.f32 %v1129, 0.0
        %v1557 = vmax.f32 %v1131, 0.0
        %v1558 = vmax.f32 %v1322, 0.0
        %v1559 = vmax.f32 %v1324, 0.0
        %v1560 = vmax.f32 %v747, 0.0
        %v1561 = vmax.f32 %v749, 0.0
        %v1562 = vmax.f32 %v940, 0.0
        %v1563 = vmax.f32 %v942, 0.0
        %v1564 = vmax.f32 %v1133, 0.0
        %v1565 = vmax.f32 %v1135, 0.0
        %v1566 = vmax.f32 %v1326, 0.0
        %v1567 = vmax.f32 %v1328, 0.0
        %v1568 = vmax.f32 %v753, 0.0
        %v1569 = vmax.f32 %v755, 0.0
        %v1570 = vmax.f32 %v946, 0.0
        %v1571 = vmax.f32 %v948, 0.0
        %v1572 = vmax.f32 %v1139, 0.0
        %v1573 = vmax.f32 %v1141, 0.0
        %v1574 = vmax.f32 %v1332, 0.0
        %v1575 = vmax.f32 %v1334, 0.0
        %v1576 = vmax.f32 %v757, 0.0
        %v1577 = vmax.f32 %v759, 0.0
        %v1578 = vmax.f32 %v950, 0.0
        %v1579 = vmax.f32 %v952, 0.0
        %v1580 = vmax.f32 %v1143, 0.0
        %v1581 = vmax.f32 %v1145, 0.0
        %v1582 = vmax.f32 %v1336, 0.0
        %v1583 = vmax.f32 %v1338, 0.0
        %v1584 = vmax.f32 %v763, 0.0
        %v1585 = vmax.f32 %v765, 0.0
        %v1586 = vmax.f32 %v956, 0.0
        %v1587 = vmax.f32 %v958, 0.0
        %v1588 = vmax.f32 %v1149, 0.0
        %v1589 = vmax.f32 %v1151, 0.0
        %v1590 = vmax.f32 %v1342, 0.0
        %v1591 = vmax.f32 %v1344, 0.0
        %v1592 = vmax.f32 %v767, 0.0
        %v1593 = vmax.f32 %v769, 0.0
        %v1594 = vmax.f32 %v960, 0.0
        %v1595 = vmax.f32 %v962, 0.0
        %v1596 = vmax.f32 %v1153, 0.0
        %v1597 = vmax.f32 %v1155, 0.0
        %v1598 = vmax.f32 %v1346, 0.0
        %v1599 = vmax.f32 %v1348, 0.0
        %v1600 = vmax.f32 %v773, 0.0
        %v1601 = vmax.f32 %v775, 0.0
        %v1602 = vmax.f32 %v966, 0.0
        %v1603 = vmax.f32 %v968, 0.0
        %v1604 = vmax.f32 %v1159, 0.0
        %v1605 = vmax.f32 %v1161, 0.0
        %v1606 = vmax.f32 %v1352, 0.0
        %v1607 = vmax.f32 %v1354, 0.0
        %v1608 = vmax.f32 %v777, 0.0
        %v1609 = vmax.f32 %v779, 0.0
        %v1610 = vmax.f32 %v970, 0.0
        %v1611 = vmax.f32 %v972, 0.0
        %v1612 = vmax.f32 %v1163, 0.0
        %v1613 = vmax.f32 %v1165, 0.0
        %v1614 = vmax.f32 %v1356, 0.0
        %v1615 = vmax.f32 %v1358, 0.0
        %s1616 = ssub.s32 256, %s296
        %p1617 = scmp.gt.s32.totalorder %s1616, 0
        %s1618 = scalar_select %p1617, %s1616, 0
        %p1619 = scmp.lt.s32.totalorder %s1618, 16
        %s1620 = scalar_select %p1619, %s1618, 16
        %vm1621 = vcmp.ge.s32.totalorder %v272, %v269
        %vm1622 = vcmp.ge.s32.totalorder %v273, %v269
        %vm1623 = vcmp.ge.s32.totalorder %v272, %v270
        %vm1624 = vcmp.ge.s32.totalorder %v273, %v270
        %v1625 = vstv %s1620
        %v1626 = vadd.s32 %v269, %v1625
        %v1627 = vadd.s32 %v270, %v1625
        %vm1628 = vcmp.lt.s32.totalorder %v272, %v1626
        %vm1629 = vcmp.lt.s32.totalorder %v273, %v1626
        %vm1630 = vcmp.lt.s32.totalorder %v272, %v1627
        %vm1631 = vcmp.lt.s32.totalorder %v273, %v1627
        %vm1632 = vmand %vm1621, %vm1628
        %vm1633 = vmand %vm1622, %vm1629
        %vm1634 = vmand %vm1623, %vm1630
        %vm1635 = vmand %vm1624, %vm1631
        %v1636 = vsel %vm1632, 0.00390625, 0.0
        %v1637 = vsel %vm1633, 0.00390625, 0.0
        %v1638 = vsel %vm1634, 0.00390625, 0.0
        %v1639 = vsel %vm1635, 0.00390625, 0.0
        %1640 = vmatprep.subr.mxu0 %v1481
        %1641 = vmatpush1.msra.mxu0 %v1480
        %1642 = vmatprep.subr.mxu0 %v1473
        %1643 = vmatpush1.msra.mxu0 %v1472
        %1644 = vmatprep.subr.mxu0 %v1465
        %1645 = vmatpush1.msra.mxu0 %v1464
        %1646 = vmatprep.subr.mxu0 %v1457
        %1647 = vmatpush1.msra.mxu0 %v1456
        %1648 = vmatprep.subr.mxu0 %v1449
        %1649 = vmatpush1.msra.mxu0 %v1448
        %1650 = vmatprep.subr.mxu0 %v1441
        %1651 = vmatpush1.msra.mxu0 %v1440
        %1652 = vmatprep.subr.mxu0 %v1433
        %1653 = vmatpush1.msra.mxu0 %v1432
        %1654 = vmatprep.subr.mxu0 %v1425
        %1655 = vmatpush1.msra.mxu0 %v1424
        %1656 = vmatprep.subr.mxu0 %v1417
        %1657 = vmatpush1.msra.mxu0 %v1416
        %1658 = vmatprep.subr.mxu0 %v1409
        %1659 = vmatpush1.msra.mxu0 %v1408
        %1660 = vmatprep.subr.mxu0 %v1401
        %1661 = vmatpush1.msra.mxu0 %v1400
        %1662 = vmatprep.subr.mxu0 %v1393
        %1663 = vmatpush1.msra.mxu0 %v1392
        %1664 = vmatprep.subr.mxu0 %v1385
        %1665 = vmatpush1.msra.mxu0 %v1384
        %1666 = vmatprep.subr.mxu0 %v1377
        %1667 = vmatpush1.msra.mxu0 %v1376
        %1668 = vmatprep.subr.mxu0 %v1369
        %1669 = vmatpush1.msra.mxu0 %v1368
        %1670 = vmatprep.subr.mxu0 %v1361
        %1671 = vmatpush1.msra.mxu0 %v1360
        %1672 = vmatprep.subr.mxu0 %v1609
        %1673 = vmatpush2.msra.mxu0 %v1608
        %1674 = vmatprep.subr.mxu0 %v1601
        %1675 = vmatpush2.msra.mxu0 %v1600
        %1676 = vmatprep.subr.mxu0 %v1593
        %1677 = vmatpush2.msra.mxu0 %v1592
        %1678 = vmatprep.subr.mxu0 %v1585
        %1679 = vmatpush2.msra.mxu0 %v1584
        %1680 = vmatprep.subr.mxu0 %v1577
        %1681 = vmatpush2.msra.mxu0 %v1576
        %1682 = vmatprep.subr.mxu0 %v1569
        %1683 = vmatpush2.msra.mxu0 %v1568
        %1684 = vmatprep.subr.mxu0 %v1561
        %1685 = vmatpush2.msra.mxu0 %v1560
        %1686 = vmatprep.subr.mxu0 %v1553
        %1687 = vmatpush2.msra.mxu0 %v1552
        %1688 = vmatprep.subr.mxu0 %v1545
        %1689 = vmatpush2.msra.mxu0 %v1544
        %1690 = vmatprep.subr.mxu0 %v1537
        %1691 = vmatpush2.msra.mxu0 %v1536
        %1692 = vmatprep.subr.mxu0 %v1529
        %1693 = vmatpush2.msra.mxu0 %v1528
        %1694 = vmatprep.subr.mxu0 %v1521
        %1695 = vmatpush2.msra.mxu0 %v1520
        %1696 = vmatprep.subr.mxu0 %v1513
        %1697 = vmatpush2.msra.mxu0 %v1512
        %1698 = vmatprep.subr.mxu0 %v1505
        %1699 = vmatpush2.msra.mxu0 %v1504
        %1700 = vmatprep.subr.mxu0 %v1497
        %1701 = vmatpush2.msra.mxu0 %v1496
        %1702 = vmatprep.subr.mxu0 %v1489
        %1703 = vmatpush2.msra.mxu0 %v1488
        %1704 = vmatprep.mubr.f32.mxu0 %v1637
        %1705 = vmatmul.mubr.f32.gmra.mxu0 %v1636
        %v1706 = vpop.f32.mrf.mxu0
        %v1707 = vadd.f32 0.0, %v1706
        %v1708 = vpop.f32.mrf.mxu0
        %v1709 = vadd.f32 0.0, %v1708
        %1710 = vmatprep.mubr.f32.mxu0 %v1639
        %1711 = vmatmul.mubr.f32.gmra.mxu0 %v1638
        %v1712 = vpop.f32.mrf.mxu0
        %v1713 = vadd.f32 0.0, %v1712
        %v1714 = vpop.f32.mrf.mxu0
        %v1715 = vadd.f32 0.0, %v1714
        %1716 = vdwg.mxu0
        %1717 = vmatprep.subr.mxu0 %v1483
        %1718 = vmatpush1.msra.mxu0 %v1482
        %1719 = vmatprep.subr.mxu0 %v1475
        %1720 = vmatpush1.msra.mxu0 %v1474
        %1721 = vmatprep.subr.mxu0 %v1467
        %1722 = vmatpush1.msra.mxu0 %v1466
        %1723 = vmatprep.subr.mxu0 %v1459
        %1724 = vmatpush1.msra.mxu0 %v1458
        %1725 = vmatprep.subr.mxu0 %v1451
        %1726 = vmatpush1.msra.mxu0 %v1450
        %1727 = vmatprep.subr.mxu0 %v1443
        %1728 = vmatpush1.msra.mxu0 %v1442
        %1729 = vmatprep.subr.mxu0 %v1435
        %1730 = vmatpush1.msra.mxu0 %v1434
        %1731 = vmatprep.subr.mxu0 %v1427
        %1732 = vmatpush1.msra.mxu0 %v1426
        %1733 = vmatprep.subr.mxu0 %v1419
        %1734 = vmatpush1.msra.mxu0 %v1418
        %1735 = vmatprep.subr.mxu0 %v1411
        %1736 = vmatpush1.msra.mxu0 %v1410
        %1737 = vmatprep.subr.mxu0 %v1403
        %1738 = vmatpush1.msra.mxu0 %v1402
        %1739 = vmatprep.subr.mxu0 %v1395
        %1740 = vmatpush1.msra.mxu0 %v1394
        %1741 = vmatprep.subr.mxu0 %v1387
        %1742 = vmatpush1.msra.mxu0 %v1386
        %1743 = vmatprep.subr.mxu0 %v1379
        %1744 = vmatpush1.msra.mxu0 %v1378
        %1745 = vmatprep.subr.mxu0 %v1371
        %1746 = vmatpush1.msra.mxu0 %v1370
        %1747 = vmatprep.subr.mxu0 %v1363
        %1748 = vmatpush1.msra.mxu0 %v1362
        %1749 = vmatprep.subr.mxu0 %v1611
        %1750 = vmatpush2.msra.mxu0 %v1610
        %1751 = vmatprep.subr.mxu0 %v1603
        %1752 = vmatpush2.msra.mxu0 %v1602
        %1753 = vmatprep.subr.mxu0 %v1595
        %1754 = vmatpush2.msra.mxu0 %v1594
        %1755 = vmatprep.subr.mxu0 %v1587
        %1756 = vmatpush2.msra.mxu0 %v1586
        %1757 = vmatprep.subr.mxu0 %v1579
        %1758 = vmatpush2.msra.mxu0 %v1578
        %1759 = vmatprep.subr.mxu0 %v1571
        %1760 = vmatpush2.msra.mxu0 %v1570
        %1761 = vmatprep.subr.mxu0 %v1563
        %1762 = vmatpush2.msra.mxu0 %v1562
        %1763 = vmatprep.subr.mxu0 %v1555
        %1764 = vmatpush2.msra.mxu0 %v1554
        %1765 = vmatprep.subr.mxu0 %v1547
        %1766 = vmatpush2.msra.mxu0 %v1546
        %1767 = vmatprep.subr.mxu0 %v1539
        %1768 = vmatpush2.msra.mxu0 %v1538
        %1769 = vmatprep.subr.mxu0 %v1531
        %1770 = vmatpush2.msra.mxu0 %v1530
        %1771 = vmatprep.subr.mxu0 %v1523
        %1772 = vmatpush2.msra.mxu0 %v1522
        %1773 = vmatprep.subr.mxu0 %v1515
        %1774 = vmatpush2.msra.mxu0 %v1514
        %1775 = vmatprep.subr.mxu0 %v1507
        %1776 = vmatpush2.msra.mxu0 %v1506
        %1777 = vmatprep.subr.mxu0 %v1499
        %1778 = vmatpush2.msra.mxu0 %v1498
        %1779 = vmatprep.subr.mxu0 %v1491
        %1780 = vmatpush2.msra.mxu0 %v1490
        %1781 = vmatprep.mubr.f32.mxu0 %v1637
        %1782 = vmatmul.mubr.f32.gmra.mxu0 %v1636
        %v1783 = vpop.f32.mrf.mxu0
        %v1784 = vadd.f32 0.0, %v1783
        %v1785 = vpop.f32.mrf.mxu0
        %v1786 = vadd.f32 0.0, %v1785
        %1787 = vmatprep.mubr.f32.mxu0 %v1639
        %1788 = vmatmul.mubr.f32.gmra.mxu0 %v1638
        %v1789 = vpop.f32.mrf.mxu0
        %v1790 = vadd.f32 0.0, %v1789
        %v1791 = vpop.f32.mrf.mxu0
        %v1792 = vadd.f32 0.0, %v1791
        %1793 = vdwg.mxu0
        %1794 = vmatprep.subr.mxu0 %v1485
        %1795 = vmatpush1.msra.mxu0 %v1484
        %1796 = vmatprep.subr.mxu0 %v1477
        %1797 = vmatpush1.msra.mxu0 %v1476
        %1798 = vmatprep.subr.mxu0 %v1469
        %1799 = vmatpush1.msra.mxu0 %v1468
        %1800 = vmatprep.subr.mxu0 %v1461
        %1801 = vmatpush1.msra.mxu0 %v1460
        %1802 = vmatprep.subr.mxu0 %v1453
        %1803 = vmatpush1.msra.mxu0 %v1452
        %1804 = vmatprep.subr.mxu0 %v1445
        %1805 = vmatpush1.msra.mxu0 %v1444
        %1806 = vmatprep.subr.mxu0 %v1437
        %1807 = vmatpush1.msra.mxu0 %v1436
        %1808 = vmatprep.subr.mxu0 %v1429
        %1809 = vmatpush1.msra.mxu0 %v1428
        %1810 = vmatprep.subr.mxu0 %v1421
        %1811 = vmatpush1.msra.mxu0 %v1420
        %1812 = vmatprep.subr.mxu0 %v1413
        %1813 = vmatpush1.msra.mxu0 %v1412
        %1814 = vmatprep.subr.mxu0 %v1405
        %1815 = vmatpush1.msra.mxu0 %v1404
        %1816 = vmatprep.subr.mxu0 %v1397
        %1817 = vmatpush1.msra.mxu0 %v1396
        %1818 = vmatprep.subr.mxu0 %v1389
        %1819 = vmatpush1.msra.mxu0 %v1388
        %1820 = vmatprep.subr.mxu0 %v1381
        %1821 = vmatpush1.msra.mxu0 %v1380
        %1822 = vmatprep.subr.mxu0 %v1373
        %1823 = vmatpush1.msra.mxu0 %v1372
        %1824 = vmatprep.subr.mxu0 %v1365
        %1825 = vmatpush1.msra.mxu0 %v1364
        %1826 = vmatprep.subr.mxu0 %v1613
        %1827 = vmatpush2.msra.mxu0 %v1612
        %1828 = vmatprep.subr.mxu0 %v1605
        %1829 = vmatpush2.msra.mxu0 %v1604
        %1830 = vmatprep.subr.mxu0 %v1597
        %1831 = vmatpush2.msra.mxu0 %v1596
        %1832 = vmatprep.subr.mxu0 %v1589
        %1833 = vmatpush2.msra.mxu0 %v1588
        %1834 = vmatprep.subr.mxu0 %v1581
        %1835 = vmatpush2.msra.mxu0 %v1580
        %1836 = vmatprep.subr.mxu0 %v1573
        %1837 = vmatpush2.msra.mxu0 %v1572
        %1838 = vmatprep.subr.mxu0 %v1565
        %1839 = vmatpush2.msra.mxu0 %v1564
        %1840 = vmatprep.subr.mxu0 %v1557
        %1841 = vmatpush2.msra.mxu0 %v1556
        %1842 = vmatprep.subr.mxu0 %v1549
        %1843 = vmatpush2.msra.mxu0 %v1548
        %1844 = vmatprep.subr.mxu0 %v1541
        %1845 = vmatpush2.msra.mxu0 %v1540
        %1846 = vmatprep.subr.mxu0 %v1533
        %1847 = vmatpush2.msra.mxu0 %v1532
        %1848 = vmatprep.subr.mxu0 %v1525
        %1849 = vmatpush2.msra.mxu0 %v1524
        %1850 = vmatprep.subr.mxu0 %v1517
        %1851 = vmatpush2.msra.mxu0 %v1516
        %1852 = vmatprep.subr.mxu0 %v1509
        %1853 = vmatpush2.msra.mxu0 %v1508
        %1854 = vmatprep.subr.mxu0 %v1501
        %1855 = vmatpush2.msra.mxu0 %v1500
        %1856 = vmatprep.subr.mxu0 %v1493
        %1857 = vmatpush2.msra.mxu0 %v1492
        %1858 = vmatprep.mubr.f32.mxu0 %v1637
        %1859 = vmatmul.mubr.f32.gmra.mxu0 %v1636
        %v1860 = vpop.f32.mrf.mxu0
        %v1861 = vadd.f32 0.0, %v1860
        %v1862 = vpop.f32.mrf.mxu0
        %v1863 = vadd.f32 0.0, %v1862
        %1864 = vmatprep.mubr.f32.mxu0 %v1639
        %1865 = vmatmul.mubr.f32.gmra.mxu0 %v1638
        %v1866 = vpop.f32.mrf.mxu0
        %v1867 = vadd.f32 0.0, %v1866
        %v1868 = vpop.f32.mrf.mxu0
        %v1869 = vadd.f32 0.0, %v1868
        %1870 = vdwg.mxu0
        %1871 = vmatprep.subr.mxu0 %v1487
        %1872 = vmatpush1.msra.mxu0 %v1486
        %1873 = vmatprep.subr.mxu0 %v1479
        %1874 = vmatpush1.msra.mxu0 %v1478
        %1875 = vmatprep.subr.mxu0 %v1471
        %1876 = vmatpush1.msra.mxu0 %v1470
        %1877 = vmatprep.subr.mxu0 %v1463
        %1878 = vmatpush1.msra.mxu0 %v1462
        %1879 = vmatprep.subr.mxu0 %v1455
        %1880 = vmatpush1.msra.mxu0 %v1454
        %1881 = vmatprep.subr.mxu0 %v1447
        %1882 = vmatpush1.msra.mxu0 %v1446
        %1883 = vmatprep.subr.mxu0 %v1439
        %1884 = vmatpush1.msra.mxu0 %v1438
        %1885 = vmatprep.subr.mxu0 %v1431
        %1886 = vmatpush1.msra.mxu0 %v1430
        %1887 = vmatprep.subr.mxu0 %v1423
        %1888 = vmatpush1.msra.mxu0 %v1422
        %1889 = vmatprep.subr.mxu0 %v1415
        %1890 = vmatpush1.msra.mxu0 %v1414
        %1891 = vmatprep.subr.mxu0 %v1407
        %1892 = vmatpush1.msra.mxu0 %v1406
        %1893 = vmatprep.subr.mxu0 %v1399
        %1894 = vmatpush1.msra.mxu0 %v1398
        %1895 = vmatprep.subr.mxu0 %v1391
        %1896 = vmatpush1.msra.mxu0 %v1390
        %1897 = vmatprep.subr.mxu0 %v1383
        %1898 = vmatpush1.msra.mxu0 %v1382
        %1899 = vmatprep.subr.mxu0 %v1375
        %1900 = vmatpush1.msra.mxu0 %v1374
        %1901 = vmatprep.subr.mxu0 %v1367
        %1902 = vmatpush1.msra.mxu0 %v1366
        %1903 = vmatprep.subr.mxu0 %v1615
        %1904 = vmatpush2.msra.mxu0 %v1614
        %1905 = vmatprep.subr.mxu0 %v1607
        %1906 = vmatpush2.msra.mxu0 %v1606
        %1907 = vmatprep.subr.mxu0 %v1599
        %1908 = vmatpush2.msra.mxu0 %v1598
        %1909 = vmatprep.subr.mxu0 %v1591
        %1910 = vmatpush2.msra.mxu0 %v1590
        %1911 = vmatprep.subr.mxu0 %v1583
        %1912 = vmatpush2.msra.mxu0 %v1582
        %1913 = vmatprep.subr.mxu0 %v1575
        %1914 = vmatpush2.msra.mxu0 %v1574
        %1915 = vmatprep.subr.mxu0 %v1567
        %1916 = vmatpush2.msra.mxu0 %v1566
        %1917 = vmatprep.subr.mxu0 %v1559
        %1918 = vmatpush2.msra.mxu0 %v1558
        %1919 = vmatprep.subr.mxu0 %v1551
        %1920 = vmatpush2.msra.mxu0 %v1550
        %1921 = vmatprep.subr.mxu0 %v1543
        %1922 = vmatpush2.msra.mxu0 %v1542
        %1923 = vmatprep.subr.mxu0 %v1535
        %1924 = vmatpush2.msra.mxu0 %v1534
        %1925 = vmatprep.subr.mxu0 %v1527
        %1926 = vmatpush2.msra.mxu0 %v1526
        %1927 = vmatprep.subr.mxu0 %v1519
        %1928 = vmatpush2.msra.mxu0 %v1518
        %1929 = vmatprep.subr.mxu0 %v1511
        %1930 = vmatpush2.msra.mxu0 %v1510
        %1931 = vmatprep.subr.mxu0 %v1503
        %1932 = vmatpush2.msra.mxu0 %v1502
        %1933 = vmatprep.subr.mxu0 %v1495
        %1934 = vmatpush2.msra.mxu0 %v1494
        %1935 = vmatprep.mubr.f32.mxu0 %v1637
        %1936 = vmatmul.mubr.f32.gmra.mxu0 %v1636
        %v1937 = vpop.f32.mrf.mxu0
        %v1938 = vadd.f32 0.0, %v1937
        %v1939 = vpop.f32.mrf.mxu0
        %v1940 = vadd.f32 0.0, %v1939
        %1941 = vmatprep.mubr.f32.mxu0 %v1639
        %1942 = vmatmul.mubr.f32.gmra.mxu0 %v1638
        %v1943 = vpop.f32.mrf.mxu0
        %v1944 = vadd.f32 0.0, %v1943
        %v1945 = vpop.f32.mrf.mxu0
        %v1946 = vadd.f32 0.0, %v1945
        %1947 = vdwg.mxu0
        %v1948 = vadd.f32 %v280, %v1707
        %v1949 = vadd.f32 %v281, %v1709
        %v1950 = vadd.f32 %v282, %v1784
        %v1951 = vadd.f32 %v283, %v1786
        %v1952 = vadd.f32 %v284, %v1861
        %v1953 = vadd.f32 %v285, %v1863
        %v1954 = vadd.f32 %v286, %v1938
        %v1955 = vadd.f32 %v287, %v1940
        %v1956 = vadd.f32 %v288, %v1713
        %v1957 = vadd.f32 %v289, %v1715
        %v1958 = vadd.f32 %v290, %v1790
        %v1959 = vadd.f32 %v291, %v1792
        %v1960 = vadd.f32 %v292, %v1867
        %v1961 = vadd.f32 %v293, %v1869
        %v1962 = vadd.f32 %v294, %v1944
        %v1963 = vadd.f32 %v295, %v1946
      $region37: #{cmc_multiheads_forward.2} parent=31 // loop_footer
        %s279 = sadd.s32 1, %s275
      $region38: #{cmc_multiheads_forward.2} parent=31 // loop_footer_branch
        %274 = sbr.rel target = $region34
      $region39: #{cmc_multiheads_forward.2} parent=31 // loop_exit
        _
      %v1964 = vpack.c.bf16 %v288, %v280
      %v1965 = vpack.c.bf16 %v289, %v281
      %v1966 = vpack.c.bf16 %v290, %v282
      %v1967 = vpack.c.bf16 %v291, %v283
      %v1968 = vpack.c.bf16 %v292, %v284
      %v1969 = vpack.c.bf16 %v293, %v285
      %v1970 = vpack.c.bf16 %v294, %v286
      %v1971 = vpack.c.bf16 %v295, %v287
      %v1980 = vunpack.c.l.b16 %v1964
      %v1981 = vunpack.c.l.b16 %v1965
      %v1982 = vunpack.c.l.b16 %v1966
      %v1983 = vunpack.c.l.b16 %v1967
      %v1984 = vunpack.c.l.b16 %v1968
      %v1985 = vunpack.c.l.b16 %v1969
      %v1986 = vunpack.c.l.b16 %v1970
      %v1987 = vunpack.c.l.b16 %v1971
      %v1988 = vunpack.c.h.b16 %v1964
      %v1989 = vunpack.c.h.b16 %v1965
      %v1990 = vunpack.c.h.b16 %v1966
      %v1991 = vunpack.c.h.b16 %v1967
      %v1992 = vunpack.c.h.b16 %v1968
      %v1993 = vunpack.c.h.b16 %v1969
      %v1994 = vunpack.c.h.b16 %v1970
      %v1995 = vunpack.c.h.b16 %v1971
      %v1996 = vpack.c.b16 %v1981, %v1980
      %v1997 = vpack.c.b16 %v1983, %v1982
      %v1998 = vpack.c.b16 %v1985, %v1984
      %v1999 = vpack.c.b16 %v1987, %v1986
      %v2000 = vpack.c.b16 %v1989, %v1988
      %v2001 = vpack.c.b16 %v1991, %v1990
      %v2002 = vpack.c.b16 %v1993, %v1992
      %v2003 = vpack.c.b16 %v1995, %v1994
      %2012 = vst [vmem:[%s250] sm:$0xff] %v1996
      %2013 = vst [vmem:[%s250 + $0x8] sm:$0xff] %v1997
      %2014 = vst [vmem:[%s250 + $0x10] sm:$0xff] %v1998
      %2015 = vst [vmem:[%s250 + $0x18] sm:$0xff] %v1999
      %2016 = vst [vmem:[%s250 + $0x20] sm:$0xff] %v2000
      %2017 = vst [vmem:[%s250 + $0x28] sm:$0xff] %v2001
      %2018 = vst [vmem:[%s250 + $0x30] sm:$0xff] %v2002
      %2019 = vst [vmem:[%s250 + $0x38] sm:$0xff] %v2003
      %s2020 = smul.u32 2, %s19
      %p2021 = scmp.lt.s32.totalorder %s18, 1
      %s2022 = scalar_select %p2021, %s18, 1
      %p2023 = scmp.lt.s32.totalorder %s2020, 3
      %s2024 = scalar_select %p2023, %s2020, 3
      %s2025 = smul.addr %s2024, 8
      %s2026 = smul.addr %s2022, 32
      %s2027 = sadd.s32 %s2025, %s2026
      %s2028 = smul.addr %s2027, 4
      %s2029 = scalar_lea.vmem %s3, %s2028
      // Predicated region
      $region40: #{cmc_multiheads_forward.2} parent=31 // pred_check
        %p2030 = pneg %p126
      $region41: #{cmc_multiheads_forward.2} parent=31 // pred_check_branch
        %2032 = sbr.rel (%p2030) target = $region43
      $region42: #{cmc_multiheads_forward.2} parent=31 // pred_region
        %s2033 = smul.u32 2, %s19
      $region43: #{cmc_multiheads_forward.2} parent=31 // pred_fallthru
        _
    $region32: #{cmc_multiheads_forward.2} parent=5 // pred_fallthru
      _
    %p2034 = scmp.le.s32.totalorder 2, %s9
    // Predicated region
    $region44: #{cmc_multiheads_forward.2} parent=5 // pred_check
      %p2035 = pneg %p2034
    $region45: #{cmc_multiheads_forward.2} parent=5 // pred_check_branch
      %2037 = sbr.rel (%p2035) target = $region47
    $region46: #{cmc_multiheads_forward.2} parent=5 // pred_region
      %s2038 = ssub.s32 %s9, 2
      // Predicated region
      $region48: #{cmc_multiheads_forward.2} parent=46 // pred_check
        %p2039 = pneg %p132
      $region49: #{cmc_multiheads_forward.2} parent=46 // pred_check_branch
        %2041 = sbr.rel (%p2039) target = $region51
      $region50: #{cmc_multiheads_forward.2} parent=46 // pred_region
        %s2042 = smul.u32 2, %s21
        %p2043 = scmp.lt.s32.totalorder %s20, 1
        %s2044 = scalar_select %p2043, %s20, 1
        %p2045 = scmp.lt.s32.totalorder %s2042, 3
        %s2046 = scalar_select %p2045, %s2042, 3
        %s2047 = smul.addr %s2046, 8
        %s2048 = smul.addr %s2044, 32
        %s2049 = sadd.s32 %s2047, %s2048
        %s2050 = smul.addr %s2049, 4
        %s2051 = scalar_lea.vmem %s3, %s2050
      $region51: #{cmc_multiheads_forward.2} parent=46 // pred_fallthru
        _
    $region47: #{cmc_multiheads_forward.2} parent=5 // pred_fallthru
      _
  $region6: #{cmc_multiheads_forward.2} parent=0 // loop_footer
    %s13 = sadd.s32 1, %s9
  $region7: #{cmc_multiheads_forward.2} parent=0 // loop_footer_branch
    %8 = sbr.rel target = $region3
  $region8: #{cmc_multiheads_forward.2} parent=0 // loop_exit
    _

// kernel: cmc_multiheads_forward.3
$region0: #{cmc_multiheads_forward.3}
  #allocation0 [shape = 'u32[]', space=smem, size = 0x4, offset = 0x4, fixed_abs, tag = 'smem constant byte address 0x4 - core index']
  #allocation1 [shape = 'u32[144,128]{1,0:T(1,128)}', space=vmem, size = 0x12000, scoped, tag = 'internal scratch']
  %s0 = inlined_call_operand.vmem [shape: bf16[2,2,1024], index: 0, kind: input, shape index: {}]
  %s1 = inlined_call_operand.vmem [shape: bf16[2,18,1024], index: 1, kind: input, shape index: {}]
  %s2 = inlined_call_operand.vmem [shape: bf16[2,1024,128], index: 2, kind: input, shape index: {}]
  %s3 = inlined_call_operand.vmem [shape: f32[2,1,128], index: 3, kind: input, shape index: {}]
  %s4 = inlined_call_operand.vmem [shape: bf16[2,1024,128], index: 4, kind: input, shape index: {}]
  %s5 = inlined_call_operand.vmem [shape: f32[2,1,128], index: 5, kind: input, shape index: {}]
  %s6 = inlined_call_operand.vmem [shape: bf16[2,9,2,18], index: 6, kind: input, shape index: {}]
  %s7 = inlined_call_operand.vmem [shape: bf16[2,1152,128], index: 7, kind: input, shape index: {}]
  %s8 = inlined_call_operand.vmem [shape: f32[2,1,128], index: 8, kind: input, shape index: {}]
  %s9 = inlined_call_operand.vmem [shape: f32[2,2,128], index: 9, kind: output, shape index: {0}]
  %s10 = inlined_call_operand.vmem [shape: f32[2,2,128], index: 10, kind: output, shape index: {1}]
  %11 = xla_tuple %s9, %s10
  %s12 = sld [smem:[#allocation0]]
  $region77: #{cmc_multiheads_forward.3} parent=0
    _
  %s14 = ssub.s32 1, %s12
  %s15 = scalar_select 0, %s14, %s12
  loop: start=0, step=1, limit=4
  $region2: #{cmc_multiheads_forward.3} parent=0 // loop_pre_header
    _
  $region3: #{cmc_multiheads_forward.3} parent=0 // loop_header
    %s17 = sphi 0, %s21
    %p18 = scmp.ge.s32.totalorder %s17, 4
    %s27 = sphi 0, %s29
    %s30 = sphi 0, %s27
    %s31 = sphi 0, %s30
    %s47 = sphi 0, %s31
    %s53 = sphi 0, %s55
    %s56 = sphi 0, %s53
    %s57 = sphi 0, %s56
    %s73 = sphi 0, %s57
    %s79 = sphi 0, %s81
    %s82 = sphi 0, %s79
    %s83 = sphi 0, %s82
    %s99 = sphi 0, %s83
    %s105 = sphi 0, %s107
    %s108 = sphi 0, %s105
    %s109 = sphi 0, %s108
    %s125 = sphi 0, %s109
    %s131 = sphi 0, %s133
    %s134 = sphi 0, %s131
    %s135 = sphi 0, %s134
    %s151 = sphi 0, %s135
    %s157 = sphi 0, %s159
    %s160 = sphi 0, %s157
    %s161 = sphi 0, %s160
    %s177 = sphi 0, %s161
    %s183 = sphi 0, %s185
    %s186 = sphi 0, %s183
    %s187 = sphi 0, %s186
    %s203 = sphi 0, %s187
    %s209 = sphi 0, %s211
    %s212 = sphi 0, %s209
    %s213 = sphi 0, %s212
    %s229 = sphi 0, %s213
    %s235 = sphi 0, %s237
    %s238 = sphi 0, %s235
    %s239 = sphi 0, %s238
    %s255 = sphi 0, %s239
    %s261 = sphi 0, %s263
    %s264 = sphi 0, %s261
    %s265 = sphi 0, %s264
    %s281 = sphi 0, %s265
    %s287 = sphi 0, %s289
    %s290 = sphi 0, %s287
    %s291 = sphi 0, %s290
    %s307 = sphi 0, %s291
  $region4: #{cmc_multiheads_forward.3} parent=0 // loop_header_branch
    %20 = sbr.rel (%p18) target = $region8
  $region5: #{cmc_multiheads_forward.3} parent=0 // loop_body
    %s22 = ssub.s32 %s17, 1
    %s23 = ssub.s32 %s17, 2
    %s24 = sadd.s32 %s17, 1
    %s25 = ssub.s32 %s17, %s24
    %p26 = scmp.eq.s32.totalorder %s25, 0
    %s28 = sadd.s32 %s27, 1
    %s29 = scalar_select %p26, %s27, %s28
    %p32 = pneg %p26
    %p33 = scmp.eq.s32.totalorder %s17, 1
    %p34 = por %p32, %p33
    %p35 = scmp.ne.s32.totalorder %s27, %s30
    %p36 = scmp.eq.s32.totalorder %s17, 0
    %p37 = por %p35, %p36
    %p38 = scmp.ne.s32.totalorder %s27, %s30
    %p39 = scmp.eq.s32.totalorder %s22, 1
    %p40 = por %p38, %p39
    %p41 = scmp.ne.s32.totalorder %s30, %s31
    %p42 = scmp.eq.s32.totalorder %s22, 0
    %p43 = por %p41, %p42
    %p44 = scmp.ne.s32.totalorder %s30, %s31
    %p45 = scmp.eq.s32.totalorder %s23, 1
    %p46 = por %p44, %p45
    %p48 = scmp.ne.s32.totalorder %s31, %s47
    %p49 = scmp.eq.s32.totalorder %s23, 0
    %p50 = por %p48, %p49
    %s51 = ssub.s32 %s17, %s24
    %p52 = scmp.eq.s32.totalorder %s51, 0
    %s54 = sadd.s32 %s53, 1
    %s55 = scalar_select %p52, %s53, %s54
    %p58 = pneg %p52
    %p59 = scmp.eq.s32.totalorder %s17, 1
    %p60 = por %p58, %p59
    %p61 = scmp.ne.s32.totalorder %s53, %s56
    %p62 = scmp.eq.s32.totalorder %s17, 0
    %p63 = por %p61, %p62
    %p64 = scmp.ne.s32.totalorder %s53, %s56
    %p65 = scmp.eq.s32.totalorder %s22, 1
    %p66 = por %p64, %p65
    %p67 = scmp.ne.s32.totalorder %s56, %s57
    %p68 = scmp.eq.s32.totalorder %s22, 0
    %p69 = por %p67, %p68
    %p70 = scmp.ne.s32.totalorder %s56, %s57
    %p71 = scmp.eq.s32.totalorder %s23, 1
    %p72 = por %p70, %p71
    %p74 = scmp.ne.s32.totalorder %s57, %s73
    %p75 = scmp.eq.s32.totalorder %s23, 0
    %p76 = por %p74, %p75
    %s77 = ssub.s32 %s17, %s24
    %p78 = scmp.eq.s32.totalorder %s77, 0
    %s80 = sadd.s32 %s79, 1
    %s81 = scalar_select %p78, %s79, %s80
    %p84 = pneg %p78
    %p85 = scmp.eq.s32.totalorder %s17, 1
    %p86 = por %p84, %p85
    %p87 = scmp.ne.s32.totalorder %s79, %s82
    %p88 = scmp.eq.s32.totalorder %s17, 0
    %p89 = por %p87, %p88
    %p90 = scmp.ne.s32.totalorder %s79, %s82
    %p91 = scmp.eq.s32.totalorder %s22, 1
    %p92 = por %p90, %p91
    %p93 = scmp.ne.s32.totalorder %s82, %s83
    %p94 = scmp.eq.s32.totalorder %s22, 0
    %p95 = por %p93, %p94
    %p96 = scmp.ne.s32.totalorder %s82, %s83
    %p97 = scmp.eq.s32.totalorder %s23, 1
    %p98 = por %p96, %p97
    %p100 = scmp.ne.s32.totalorder %s83, %s99
    %p101 = scmp.eq.s32.totalorder %s23, 0
    %p102 = por %p100, %p101
    %s103 = ssub.s32 %s17, %s24
    %p104 = scmp.eq.s32.totalorder %s103, 0
    %s106 = sadd.s32 %s105, 1
    %s107 = scalar_select %p104, %s105, %s106
    %p110 = pneg %p104
    %p111 = scmp.eq.s32.totalorder %s17, 1
    %p112 = por %p110, %p111
    %p113 = scmp.ne.s32.totalorder %s105, %s108
    %p114 = scmp.eq.s32.totalorder %s17, 0
    %p115 = por %p113, %p114
    %p116 = scmp.ne.s32.totalorder %s105, %s108
    %p117 = scmp.eq.s32.totalorder %s22, 1
    %p118 = por %p116, %p117
    %p119 = scmp.ne.s32.totalorder %s108, %s109
    %p120 = scmp.eq.s32.totalorder %s22, 0
    %p121 = por %p119, %p120
    %p122 = scmp.ne.s32.totalorder %s108, %s109
    %p123 = scmp.eq.s32.totalorder %s23, 1
    %p124 = por %p122, %p123
    %p126 = scmp.ne.s32.totalorder %s109, %s125
    %p127 = scmp.eq.s32.totalorder %s23, 0
    %p128 = por %p126, %p127
    %s129 = ssub.s32 %s17, %s24
    %p130 = scmp.eq.s32.totalorder %s129, 0
    %s132 = sadd.s32 %s131, 1
    %s133 = scalar_select %p130, %s131, %s132
    %p136 = pneg %p130
    %p137 = scmp.eq.s32.totalorder %s17, 1
    %p138 = por %p136, %p137
    %p139 = scmp.ne.s32.totalorder %s131, %s134
    %p140 = scmp.eq.s32.totalorder %s17, 0
    %p141 = por %p139, %p140
    %p142 = scmp.ne.s32.totalorder %s131, %s134
    %p143 = scmp.eq.s32.totalorder %s22, 1
    %p144 = por %p142, %p143
    %p145 = scmp.ne.s32.totalorder %s134, %s135
    %p146 = scmp.eq.s32.totalorder %s22, 0
    %p147 = por %p145, %p146
    %p148 = scmp.ne.s32.totalorder %s134, %s135
    %p149 = scmp.eq.s32.totalorder %s23, 1
    %p150 = por %p148, %p149
    %p152 = scmp.ne.s32.totalorder %s135, %s151
    %p153 = scmp.eq.s32.totalorder %s23, 0
    %p154 = por %p152, %p153
    %s155 = ssub.s32 %s17, %s24
    %p156 = scmp.eq.s32.totalorder %s155, 0
    %s158 = sadd.s32 %s157, 1
    %s159 = scalar_select %p156, %s157, %s158
    %p162 = pneg %p156
    %p163 = scmp.eq.s32.totalorder %s17, 1
    %p164 = por %p162, %p163
    %p165 = scmp.ne.s32.totalorder %s157, %s160
    %p166 = scmp.eq.s32.totalorder %s17, 0
    %p167 = por %p165, %p166
    %p168 = scmp.ne.s32.totalorder %s157, %s160
    %p169 = scmp.eq.s32.totalorder %s22, 1
    %p170 = por %p168, %p169
    %p171 = scmp.ne.s32.totalorder %s160, %s161
    %p172 = scmp.eq.s32.totalorder %s22, 0
    %p173 = por %p171, %p172
    %p174 = scmp.ne.s32.totalorder %s160, %s161
    %p175 = scmp.eq.s32.totalorder %s23, 1
    %p176 = por %p174, %p175
    %p178 = scmp.ne.s32.totalorder %s161, %s177
    %p179 = scmp.eq.s32.totalorder %s23, 0
    %p180 = por %p178, %p179
    %s181 = ssub.s32 %s17, %s24
    %p182 = scmp.eq.s32.totalorder %s181, 0
    %s184 = sadd.s32 %s183, 1
    %s185 = scalar_select %p182, %s183, %s184
    %p188 = pneg %p182
    %p189 = scmp.eq.s32.totalorder %s17, 1
    %p190 = por %p188, %p189
    %p191 = scmp.ne.s32.totalorder %s183, %s186
    %p192 = scmp.eq.s32.totalorder %s17, 0
    %p193 = por %p191, %p192
    %p194 = scmp.ne.s32.totalorder %s183, %s186
    %p195 = scmp.eq.s32.totalorder %s22, 1
    %p196 = por %p194, %p195
    %p197 = scmp.ne.s32.totalorder %s186, %s187
    %p198 = scmp.eq.s32.totalorder %s22, 0
    %p199 = por %p197, %p198
    %p200 = scmp.ne.s32.totalorder %s186, %s187
    %p201 = scmp.eq.s32.totalorder %s23, 1
    %p202 = por %p200, %p201
    %p204 = scmp.ne.s32.totalorder %s187, %s203
    %p205 = scmp.eq.s32.totalorder %s23, 0
    %p206 = por %p204, %p205
    %s207 = ssub.s32 %s17, %s24
    %p208 = scmp.eq.s32.totalorder %s207, 0
    %s210 = sadd.s32 %s209, 1
    %s211 = scalar_select %p208, %s209, %s210
    %p214 = pneg %p208
    %p215 = scmp.eq.s32.totalorder %s17, 1
    %p216 = por %p214, %p215
    %p217 = scmp.ne.s32.totalorder %s209, %s212
    %p218 = scmp.eq.s32.totalorder %s17, 0
    %p219 = por %p217, %p218
    %p220 = scmp.ne.s32.totalorder %s209, %s212
    %p221 = scmp.eq.s32.totalorder %s22, 1
    %p222 = por %p220, %p221
    %p223 = scmp.ne.s32.totalorder %s212, %s213
    %p224 = scmp.eq.s32.totalorder %s22, 0
    %p225 = por %p223, %p224
    %p226 = scmp.ne.s32.totalorder %s212, %s213
    %p227 = scmp.eq.s32.totalorder %s23, 1
    %p228 = por %p226, %p227
    %p230 = scmp.ne.s32.totalorder %s213, %s229
    %p231 = scmp.eq.s32.totalorder %s23, 0
    %p232 = por %p230, %p231
    %s233 = ssub.s32 %s17, %s24
    %p234 = scmp.eq.s32.totalorder %s233, 0
    %s236 = sadd.s32 %s235, 1
    %s237 = scalar_select %p234, %s235, %s236
    %p240 = pneg %p234
    %p241 = scmp.eq.s32.totalorder %s17, 1
    %p242 = por %p240, %p241
    %p243 = scmp.ne.s32.totalorder %s235, %s238
    %p244 = scmp.eq.s32.totalorder %s17, 0
    %p245 = por %p243, %p244
    %p246 = scmp.ne.s32.totalorder %s235, %s238
    %p247 = scmp.eq.s32.totalorder %s22, 1
    %p248 = por %p246, %p247
    %p249 = scmp.ne.s32.totalorder %s238, %s239
    %p250 = scmp.eq.s32.totalorder %s22, 0
    %p251 = por %p249, %p250
    %p252 = scmp.ne.s32.totalorder %s238, %s239
    %p253 = scmp.eq.s32.totalorder %s23, 1
    %p254 = por %p252, %p253
    %p256 = scmp.ne.s32.totalorder %s239, %s255
    %p257 = scmp.eq.s32.totalorder %s23, 0
    %p258 = por %p256, %p257
    %s259 = ssub.s32 %s17, %s24
    %p260 = scmp.eq.s32.totalorder %s259, 0
    %s262 = sadd.s32 %s261, 1
    %s263 = scalar_select %p260, %s261, %s262
    %p266 = pneg %p260
    %p267 = scmp.eq.s32.totalorder %s17, 1
    %p268 = por %p266, %p267
    %p269 = scmp.ne.s32.totalorder %s261, %s264
    %p270 = scmp.eq.s32.totalorder %s17, 0
    %p271 = por %p269, %p270
    %p272 = scmp.ne.s32.totalorder %s261, %s264
    %p273 = scmp.eq.s32.totalorder %s22, 1
    %p274 = por %p272, %p273
    %p275 = scmp.ne.s32.totalorder %s264, %s265
    %p276 = scmp.eq.s32.totalorder %s22, 0
    %p277 = por %p275, %p276
    %p278 = scmp.ne.s32.totalorder %s264, %s265
    %p279 = scmp.eq.s32.totalorder %s23, 1
    %p280 = por %p278, %p279
    %p282 = scmp.ne.s32.totalorder %s265, %s281
    %p283 = scmp.eq.s32.totalorder %s23, 0
    %p284 = por %p282, %p283
    %s285 = ssub.s32 %s17, %s24
    %p286 = scmp.eq.s32.totalorder %s285, 0
    %s288 = sadd.s32 %s287, 1
    %s289 = scalar_select %p286, %s287, %s288
    %p292 = pneg %p286
    %p293 = scmp.eq.s32.totalorder %s17, 1
    %p294 = por %p292, %p293
    %p295 = scmp.ne.s32.totalorder %s287, %s290
    %p296 = scmp.eq.s32.totalorder %s17, 0
    %p297 = por %p295, %p296
    %p298 = scmp.ne.s32.totalorder %s287, %s290
    %p299 = scmp.eq.s32.totalorder %s22, 1
    %p300 = por %p298, %p299
    %p301 = scmp.ne.s32.totalorder %s290, %s291
    %p302 = scmp.eq.s32.totalorder %s22, 0
    %p303 = por %p301, %p302
    %p304 = scmp.ne.s32.totalorder %s290, %s291
    %p305 = scmp.eq.s32.totalorder %s23, 1
    %p306 = por %p304, %p305
    %p308 = scmp.ne.s32.totalorder %s291, %s307
    %p309 = scmp.eq.s32.totalorder %s23, 0
    %p310 = por %p308, %p309
    %p311 = scmp.le.s32.totalorder 1, %s17
    %p312 = scmp.lt.s32.totalorder %s17, 3
    %p313 = pnand %p311, %p312
    %p314 = pneg %p313
    // Predicated region
    $region9: #{cmc_multiheads_forward.3} parent=5 // pred_check
      _
    $region10: #{cmc_multiheads_forward.3} parent=5 // pred_check_branch
      %316 = sbr.rel (%p313) target = $region12
    $region11: #{cmc_multiheads_forward.3} parent=5 // pred_region
      %s317 = ssub.s32 %s17, 1
    $region12: #{cmc_multiheads_forward.3} parent=5 // pred_fallthru
      _
    %p318 = scmp.lt.s32.totalorder %s17, 2
    // Predicated region
    $region13: #{cmc_multiheads_forward.3} parent=5 // pred_check
      %p319 = pneg %p318
    $region14: #{cmc_multiheads_forward.3} parent=5 // pred_check_branch
      %321 = sbr.rel (%p319) target = $region16
    $region15: #{cmc_multiheads_forward.3} parent=5 // pred_region
      // Predicated region
      $region17: #{cmc_multiheads_forward.3} parent=15 // pred_check
        %p322 = pneg %p37
      $region18: #{cmc_multiheads_forward.3} parent=15 // pred_check_branch
        %324 = sbr.rel (%p322) target = $region20
      $region19: #{cmc_multiheads_forward.3} parent=15 // pred_region
        %p325 = scmp.lt.s32.totalorder %s17, 1
        %s326 = scalar_select %p325, %s17, 1
        %s327 = smul.addr %s326, 8
        %s328 = scalar_lea.vmem %s0, %s327
      $region20: #{cmc_multiheads_forward.3} parent=15 // pred_fallthru
        _
      // Predicated region
      $region21: #{cmc_multiheads_forward.3} parent=15 // pred_check
        %p329 = pneg %p63
      $region22: #{cmc_multiheads_forward.3} parent=15 // pred_check_branch
        %331 = sbr.rel (%p329) target = $region24
      $region23: #{cmc_multiheads_forward.3} parent=15 // pred_region
        %p332 = scmp.lt.s32.totalorder %s17, 1
        %s333 = scalar_select %p332, %s17, 1
        %s334 = smul.addr %s333, 24
        %s335 = smul.addr %s334, 4
        %s336 = scalar_lea.vmem %s1, %s335
      $region24: #{cmc_multiheads_forward.3} parent=15 // pred_fallthru
        _
      // Predicated region
      $region25: #{cmc_multiheads_forward.3} parent=15 // pred_check
        %p337 = pneg %p89
      $region26: #{cmc_multiheads_forward.3} parent=15 // pred_check_branch
        %339 = sbr.rel (%p337) target = $region28
      $region27: #{cmc_multiheads_forward.3} parent=15 // pred_region
        %p340 = scmp.lt.s32.totalorder %s17, 1
        %s341 = scalar_select %p340, %s17, 1
        %s342 = smul.addr %s341, 128
        %s343 = smul.addr %s342, 4
        %s344 = scalar_lea.vmem %s2, %s343
      $region28: #{cmc_multiheads_forward.3} parent=15 // pred_fallthru
        _
      // Predicated region
      $region29: #{cmc_multiheads_forward.3} parent=15 // pred_check
        %p345 = pneg %p115
      $region30: #{cmc_multiheads_forward.3} parent=15 // pred_check_branch
        %347 = sbr.rel (%p345) target = $region32
      $region31: #{cmc_multiheads_forward.3} parent=15 // pred_region
        %p348 = scmp.lt.s32.totalorder %s17, 1
        %s349 = scalar_select %p348, %s17, 1
        %s350 = scalar_lea.vmem %s3, %s349
      $region32: #{cmc_multiheads_forward.3} parent=15 // pred_fallthru
        _
      // Predicated region
      $region33: #{cmc_multiheads_forward.3} parent=15 // pred_check
        %p351 = pneg %p141
      $region34: #{cmc_multiheads_forward.3} parent=15 // pred_check_branch
        %353 = sbr.rel (%p351) target = $region36
      $region35: #{cmc_multiheads_forward.3} parent=15 // pred_region
        %p354 = scmp.lt.s32.totalorder %s17, 1
        %s355 = scalar_select %p354, %s17, 1
        %s356 = smul.addr %s355, 128
        %s357 = smul.addr %s356, 4
        %s358 = scalar_lea.vmem %s4, %s357
      $region36: #{cmc_multiheads_forward.3} parent=15 // pred_fallthru
        _
      // Predicated region
      $region37: #{cmc_multiheads_forward.3} parent=15 // pred_check
        %p359 = pneg %p167
      $region38: #{cmc_multiheads_forward.3} parent=15 // pred_check_branch
        %361 = sbr.rel (%p359) target = $region40
      $region39: #{cmc_multiheads_forward.3} parent=15 // pred_region
        %p362 = scmp.lt.s32.totalorder %s17, 1
        %s363 = scalar_select %p362, %s17, 1
        %s364 = scalar_lea.vmem %s5, %s363
      $region40: #{cmc_multiheads_forward.3} parent=15 // pred_fallthru
        _
      // Predicated region
      $region41: #{cmc_multiheads_forward.3} parent=15 // pred_check
        %p365 = pneg %p193
      $region42: #{cmc_multiheads_forward.3} parent=15 // pred_check_branch
        %367 = sbr.rel (%p365) target = $region44
      $region43: #{cmc_multiheads_forward.3} parent=15 // pred_region
        %p368 = scmp.lt.s32.totalorder %s17, 1
        %s369 = scalar_select %p368, %s17, 1
        %s370 = smul.addr %s369, 9
        %s371 = scalar_lea.vmem %s6, %s370
      $region44: #{cmc_multiheads_forward.3} parent=15 // pred_fallthru
        _
      // Predicated region
      $region45: #{cmc_multiheads_forward.3} parent=15 // pred_check
        %p372 = pneg %p219
      $region46: #{cmc_multiheads_forward.3} parent=15 // pred_check_branch
        %374 = sbr.rel (%p372) target = $region48
      $region47: #{cmc_multiheads_forward.3} parent=15 // pred_region
        %p375 = scmp.lt.s32.totalorder %s17, 1
        %s376 = scalar_select %p375, %s17, 1
        %s377 = smul.addr %s376, 144
        %s378 = smul.addr %s377, 4
        %s379 = scalar_lea.vmem %s7, %s378
      $region48: #{cmc_multiheads_forward.3} parent=15 // pred_fallthru
        _
      // Predicated region
      $region49: #{cmc_multiheads_forward.3} parent=15 // pred_check
        %p380 = pneg %p245
      $region50: #{cmc_multiheads_forward.3} parent=15 // pred_check_branch
        %382 = sbr.rel (%p380) target = $region52
      $region51: #{cmc_multiheads_forward.3} parent=15 // pred_region
        %p383 = scmp.lt.s32.totalorder %s17, 1
        %s384 = scalar_select %p383, %s17, 1
        %s385 = scalar_lea.vmem %s8, %s384
      $region52: #{cmc_multiheads_forward.3} parent=15 // pred_fallthru
        _
    $region16: #{cmc_multiheads_forward.3} parent=5 // pred_fallthru
      _
    %p386 = scmp.le.s32.totalorder 1, %s17
    %p387 = scmp.lt.s32.totalorder %s17, 3
    %p388 = pnand %p386, %p387
    %p389 = pneg %p388
    // Predicated region
    $region53: #{cmc_multiheads_forward.3} parent=5 // pred_check
      _
    $region54: #{cmc_multiheads_forward.3} parent=5 // pred_check_branch
      %391 = sbr.rel (%p388) target = $region56
    $region55: #{cmc_multiheads_forward.3} parent=5 // pred_region
      %s392 = ssub.s32 %s17, 1
      %p393 = scmp.lt.s32.totalorder %s22, 1
      %s394 = scalar_select %p393, %s22, 1
      %s395 = smul.addr %s394, 8
      %s396 = scalar_lea.vmem %s0, %s395
      %p397 = pneg %p43
      %p398 = pneg %p40
      %p399 = scmp.lt.s32.totalorder %s22, 1
      %s400 = scalar_select %p399, %s22, 1
      %s401 = smul.addr %s400, 24
      %s402 = smul.addr %s401, 4
      %s403 = scalar_lea.vmem %s1, %s402
      %p404 = pneg %p69
      %p405 = pneg %p66
      %p406 = scmp.lt.s32.totalorder %s22, 1
      %s407 = scalar_select %p406, %s22, 1
      %s408 = smul.addr %s407, 128
      %s409 = smul.addr %s408, 4
      %s410 = scalar_lea.vmem %s2, %s409
      %p411 = pneg %p95
      %p412 = pneg %p92
      %p413 = scmp.lt.s32.totalorder %s22, 1
      %s414 = scalar_select %p413, %s22, 1
      %s415 = scalar_lea.vmem %s3, %s414
      %p416 = pneg %p121
      %p417 = pneg %p118
      %p418 = scmp.lt.s32.totalorder %s22, 1
      %s419 = scalar_select %p418, %s22, 1
      %s420 = smul.addr %s419, 128
      %s421 = smul.addr %s420, 4
      %s422 = scalar_lea.vmem %s4, %s421
      %p423 = pneg %p147
      %p424 = pneg %p144
      %p425 = scmp.lt.s32.totalorder %s22, 1
      %s426 = scalar_select %p425, %s22, 1
      %s427 = scalar_lea.vmem %s5, %s426
      %p428 = pneg %p173
      %p429 = pneg %p170
      %p430 = scmp.lt.s32.totalorder %s22, 1
      %s431 = scalar_select %p430, %s22, 1
      %s432 = smul.addr %s431, 9
      %s433 = scalar_lea.vmem %s6, %s432
      %p434 = pneg %p199
      %p435 = pneg %p196
      %p436 = scmp.lt.s32.totalorder %s22, 1
      %s437 = scalar_select %p436, %s22, 1
      %s438 = smul.addr %s437, 144
      %s439 = smul.addr %s438, 4
      %s440 = scalar_lea.vmem %s7, %s439
      %p441 = pneg %p225
      %p442 = pneg %p222
      %p443 = scmp.lt.s32.totalorder %s22, 1
      %s444 = scalar_select %p443, %s22, 1
      %s445 = scalar_lea.vmem %s8, %s444
      %p446 = pneg %p251
      %p447 = pneg %p248
      %p448 = pneg %p277
      %p449 = pneg %p274
      %p450 = scmp.lt.s32.totalorder %s22, 1
      %s451 = scalar_select %p450, %s22, 1
      %s452 = smul.addr %s451, 2
      %s453 = scalar_lea.vmem %s9, %s452
      %p454 = pneg %p303
      %p455 = pneg %p300
      %p456 = scmp.lt.s32.totalorder %s22, 1
      %s457 = scalar_select %p456, %s22, 1
      %s458 = smul.addr %s457, 2
      %s459 = scalar_lea.vmem %s10, %s458
      %p460 = scmp.lt.s32.totalorder %s22, 1
      %s461 = scalar_select %p460, %s22, 1
      %s462 = smul.addr %s461, 8
      %s463 = scalar_lea.vmem %s0, %s462
      %p464 = scmp.lt.s32.totalorder %s22, 1
      %s465 = scalar_select %p464, %s22, 1
      %s466 = smul.addr %s465, 24
      %s467 = smul.addr %s466, 4
      %s468 = scalar_lea.vmem %s1, %s467
      %p469 = scmp.lt.s32.totalorder %s22, 1
      %s470 = scalar_select %p469, %s22, 1
      %s471 = smul.addr %s470, 128
      %s472 = smul.addr %s471, 4
      %s473 = scalar_lea.vmem %s2, %s472
      %p474 = scmp.lt.s32.totalorder %s22, 1
      %s475 = scalar_select %p474, %s22, 1
      %s476 = scalar_lea.vmem %s3, %s475
      %p477 = scmp.lt.s32.totalorder %s22, 1
      %s478 = scalar_select %p477, %s22, 1
      %s479 = smul.addr %s478, 128
      %s480 = smul.addr %s479, 4
      %s481 = scalar_lea.vmem %s4, %s480
      %p482 = scmp.lt.s32.totalorder %s22, 1
      %s483 = scalar_select %p482, %s22, 1
      %s484 = scalar_lea.vmem %s5, %s483
      %p485 = scmp.lt.s32.totalorder %s22, 1
      %s486 = scalar_select %p485, %s22, 1
      %s487 = smul.addr %s486, 9
      %s488 = scalar_lea.vmem %s6, %s487
      %p489 = scmp.lt.s32.totalorder %s22, 1
      %s490 = scalar_select %p489, %s22, 1
      %s491 = smul.addr %s490, 144
      %s492 = smul.addr %s491, 4
      %s493 = scalar_lea.vmem %s7, %s492
      %p494 = scmp.lt.s32.totalorder %s22, 1
      %s495 = scalar_select %p494, %s22, 1
      %s496 = scalar_lea.vmem %s8, %s495
      %p497 = scmp.lt.s32.totalorder %s22, 1
      %s498 = scalar_select %p497, %s22, 1
      %s499 = smul.addr %s498, 2
      %s500 = scalar_lea.vmem %s9, %s499
      %p501 = scmp.lt.s32.totalorder %s22, 1
      %s502 = scalar_select %p501, %s22, 1
      %s503 = smul.addr %s502, 2
      %s504 = scalar_lea.vmem %s10, %s503
      %v506 = vld [vmem:[%s463] sm:$0xff]
      %v507 = vld [vmem:[%s473] sm:$0xf]
      %v508 = vld [vmem:[%s473 + $0x4] sm:$0xf]
      %v509 = vld [vmem:[%s473 + $0x8] sm:$0xf]
      %v510 = vld [vmem:[%s473 + $0xc] sm:$0xf]
      %v511 = vld [vmem:[%s473 + $0x10] sm:$0xf]
      %v512 = vld [vmem:[%s473 + $0x14] sm:$0xf]
      %v513 = vld [vmem:[%s473 + $0x18] sm:$0xf]
      %v514 = vld [vmem:[%s473 + $0x1c] sm:$0xf]
      %v515 = vld [vmem:[%s473 + $0x20] sm:$0xf]
      %v516 = vld [vmem:[%s473 + $0x24] sm:$0xf]
      %v517 = vld [vmem:[%s473 + $0x28] sm:$0xf]
      %v518 = vld [vmem:[%s473 + $0x2c] sm:$0xf]
      %v519 = vld [vmem:[%s473 + $0x30] sm:$0xf]
      %v520 = vld [vmem:[%s473 + $0x34] sm:$0xf]
      %v521 = vld [vmem:[%s473 + $0x38] sm:$0xf]
      %v522 = vld [vmem:[%s473 + $0x3c] sm:$0xf]
      %v523 = vld [vmem:[%s473 + $0x40] sm:$0xf]
      %v524 = vld [vmem:[%s473 + $0x44] sm:$0xf]
      %v525 = vld [vmem:[%s473 + $0x48] sm:$0xf]
      %v526 = vld [vmem:[%s473 + $0x4c] sm:$0xf]
      %v527 = vld [vmem:[%s473 + $0x50] sm:$0xf]
      %v528 = vld [vmem:[%s473 + $0x54] sm:$0xf]
      %v529 = vld [vmem:[%s473 + $0x58] sm:$0xf]
      %v530 = vld [vmem:[%s473 + $0x5c] sm:$0xf]
      %v531 = vld [vmem:[%s473 + $0x60] sm:$0xf]
      %v532 = vld [vmem:[%s473 + $0x64] sm:$0xf]
      %v533 = vld [vmem:[%s473 + $0x68] sm:$0xf]
      %v534 = vld [vmem:[%s473 + $0x6c] sm:$0xf]
      %v535 = vld [vmem:[%s473 + $0x70] sm:$0xf]
      %v536 = vld [vmem:[%s473 + $0x74] sm:$0xf]
      %v537 = vld [vmem:[%s473 + $0x78] sm:$0xf]
      %v538 = vld [vmem:[%s473 + $0x7c] sm:$0xf]
      %v539 = vld [vmem:[%s473 + $0x80] sm:$0xf]
      %v540 = vld [vmem:[%s473 + $0x84] sm:$0xf]
      %v541 = vld [vmem:[%s473 + $0x88] sm:$0xf]
      %v542 = vld [vmem:[%s473 + $0x8c] sm:$0xf]
      %v543 = vld [vmem:[%s473 + $0x90] sm:$0xf]
      %v544 = vld [vmem:[%s473 + $0x94] sm:$0xf]
      %v545 = vld [vmem:[%s473 + $0x98] sm:$0xf]
      %v546 = vld [vmem:[%s473 + $0x9c] sm:$0xf]
      %v547 = vld [vmem:[%s473 + $0xa0] sm:$0xf]
      %v548 = vld [vmem:[%s473 + $0xa4] sm:$0xf]
      %v549 = vld [vmem:[%s473 + $0xa8] sm:$0xf]
      %v550 = vld [vmem:[%s473 + $0xac] sm:$0xf]
      %v551 = vld [vmem:[%s473 + $0xb0] sm:$0xf]
      %v552 = vld [vmem:[%s473 + $0xb4] sm:$0xf]
      %v553 = vld [vmem:[%s473 + $0xb8] sm:$0xf]
      %v554 = vld [vmem:[%s473 + $0xbc] sm:$0xf]
      %v555 = vld [vmem:[%s473 + $0xc0] sm:$0xf]
      %v556 = vld [vmem:[%s473 + $0xc4] sm:$0xf]
      %v557 = vld [vmem:[%s473 + $0xc8] sm:$0xf]
      %v558 = vld [vmem:[%s473 + $0xcc] sm:$0xf]
      %v559 = vld [vmem:[%s473 + $0xd0] sm:$0xf]
      %v560 = vld [vmem:[%s473 + $0xd4] sm:$0xf]
      %v561 = vld [vmem:[%s473 + $0xd8] sm:$0xf]
      %v562 = vld [vmem:[%s473 + $0xdc] sm:$0xf]
      %v563 = vld [vmem:[%s473 + $0xe0] sm:$0xf]
      %v564 = vld [vmem:[%s473 + $0xe4] sm:$0xf]
      %v565 = vld [vmem:[%s473 + $0xe8] sm:$0xf]
      %v566 = vld [vmem:[%s473 + $0xec] sm:$0xf]
      %v567 = vld [vmem:[%s473 + $0xf0] sm:$0xf]
      %v568 = vld [vmem:[%s473 + $0xf4] sm:$0xf]
      %v569 = vld [vmem:[%s473 + $0xf8] sm:$0xf]
      %v570 = vld [vmem:[%s473 + $0xfc] sm:$0xf]
      %v571 = vld [vmem:[%s473 + $0x100] sm:$0xf]
      %v572 = vld [vmem:[%s473 + $0x104] sm:$0xf]
      %v573 = vld [vmem:[%s473 + $0x108] sm:$0xf]
      %v574 = vld [vmem:[%s473 + $0x10c] sm:$0xf]
      %v575 = vld [vmem:[%s473 + $0x110] sm:$0xf]
      %v576 = vld [vmem:[%s473 + $0x114] sm:$0xf]
      %v577 = vld [vmem:[%s473 + $0x118] sm:$0xf]
      %v578 = vld [vmem:[%s473 + $0x11c] sm:$0xf]
      %v579 = vld [vmem:[%s473 + $0x120] sm:$0xf]
      %v580 = vld [vmem:[%s473 + $0x124] sm:$0xf]
      %v581 = vld [vmem:[%s473 + $0x128] sm:$0xf]
      %v582 = vld [vmem:[%s473 + $0x12c] sm:$0xf]
      %v583 = vld [vmem:[%s473 + $0x130] sm:$0xf]
      %v584 = vld [vmem:[%s473 + $0x134] sm:$0xf]
      %v585 = vld [vmem:[%s473 + $0x138] sm:$0xf]
      %v586 = vld [vmem:[%s473 + $0x13c] sm:$0xf]
      %v587 = vld [vmem:[%s473 + $0x140] sm:$0xf]
      %v588 = vld [vmem:[%s473 + $0x144] sm:$0xf]
      %v589 = vld [vmem:[%s473 + $0x148] sm:$0xf]
      %v590 = vld [vmem:[%s473 + $0x14c] sm:$0xf]
      %v591 = vld [vmem:[%s473 + $0x150] sm:$0xf]
      %v592 = vld [vmem:[%s473 + $0x154] sm:$0xf]
      %v593 = vld [vmem:[%s473 + $0x158] sm:$0xf]
      %v594 = vld [vmem:[%s473 + $0x15c] sm:$0xf]
      %v595 = vld [vmem:[%s473 + $0x160] sm:$0xf]
      %v596 = vld [vmem:[%s473 + $0x164] sm:$0xf]
      %v597 = vld [vmem:[%s473 + $0x168] sm:$0xf]
      %v598 = vld [vmem:[%s473 + $0x16c] sm:$0xf]
      %v599 = vld [vmem:[%s473 + $0x170] sm:$0xf]
      %v600 = vld [vmem:[%s473 + $0x174] sm:$0xf]
      %v601 = vld [vmem:[%s473 + $0x178] sm:$0xf]
      %v602 = vld [vmem:[%s473 + $0x17c] sm:$0xf]
      %v603 = vld [vmem:[%s473 + $0x180] sm:$0xf]
      %v604 = vld [vmem:[%s473 + $0x184] sm:$0xf]
      %v605 = vld [vmem:[%s473 + $0x188] sm:$0xf]
      %v606 = vld [vmem:[%s473 + $0x18c] sm:$0xf]
      %v607 = vld [vmem:[%s473 + $0x190] sm:$0xf]
      %v608 = vld [vmem:[%s473 + $0x194] sm:$0xf]
      %v609 = vld [vmem:[%s473 + $0x198] sm:$0xf]
      %v610 = vld [vmem:[%s473 + $0x19c] sm:$0xf]
      %v611 = vld [vmem:[%s473 + $0x1a0] sm:$0xf]
      %v612 = vld [vmem:[%s473 + $0x1a4] sm:$0xf]
      %v613 = vld [vmem:[%s473 + $0x1a8] sm:$0xf]
      %v614 = vld [vmem:[%s473 + $0x1ac] sm:$0xf]
      %v615 = vld [vmem:[%s473 + $0x1b0] sm:$0xf]
      %v616 = vld [vmem:[%s473 + $0x1b4] sm:$0xf]
      %v617 = vld [vmem:[%s473 + $0x1b8] sm:$0xf]
      %v618 = vld [vmem:[%s473 + $0x1bc] sm:$0xf]
      %v619 = vld [vmem:[%s473 + $0x1c0] sm:$0xf]
      %v620 = vld [vmem:[%s473 + $0x1c4] sm:$0xf]
      %v621 = vld [vmem:[%s473 + $0x1c8] sm:$0xf]
      %v622 = vld [vmem:[%s473 + $0x1cc] sm:$0xf]
      %v623 = vld [vmem:[%s473 + $0x1d0] sm:$0xf]
      %v624 = vld [vmem:[%s473 + $0x1d4] sm:$0xf]
      %v625 = vld [vmem:[%s473 + $0x1d8] sm:$0xf]
      %v626 = vld [vmem:[%s473 + $0x1dc] sm:$0xf]
      %v627 = vld [vmem:[%s473 + $0x1e0] sm:$0xf]
      %v628 = vld [vmem:[%s473 + $0x1e4] sm:$0xf]
      %v629 = vld [vmem:[%s473 + $0x1e8] sm:$0xf]
      %v630 = vld [vmem:[%s473 + $0x1ec] sm:$0xf]
      %v631 = vld [vmem:[%s473 + $0x1f0] sm:$0xf]
      %v632 = vld [vmem:[%s473 + $0x1f4] sm:$0xf]
      %v633 = vld [vmem:[%s473 + $0x1f8] sm:$0xf]
      %v634 = vld [vmem:[%s473 + $0x1fc] sm:$0xf]
      %v635 = vld [vmem:[%s476] sm:$0x1]
      %v637 = vlaneseq
      %v638 = vshrl.u32 %v637, 7
      %v639 = vsub.s32 0, %v638
      %v640 = vrot.slane %v635, %v639
      %v643 = vcombine.high %v506, %v506
      %v645 = vunpack.c.l.s4 1966171168
      %v646 = vunpack.c.0.s8 %v645
      %v647 = vlaneseq
      %v648 = vshrl.u32 %v647, 7
      %v649 = vsub.s32 %v646, %v648
      %v650 = vrot.slane %v506, %v649
      %v652 = vunpack.c.l.s4 1966171168
      %v653 = vunpack.c.0.s8 %v652
      %v654 = vlaneseq
      %v655 = vshrl.u32 %v654, 7
      %v656 = vsub.s32 %v653, %v655
      %v657 = vrot.slane %v643, %v656
      %v658 = vcombine.high %v650, %v650
      %v659 = vcombine.high %v657, %v657
      %v661 = vunpack.c.l.s4 1966171168
      %v662 = vunpack.c.0.s8 %v661
      %v663 = vlaneseq
      %v664 = vshrl.u32 %v663, 7
      %v665 = vsub.s32 %v662, %v664
      %v666 = vrot.slane %v650, %v665
      %v668 = vunpack.c.l.s4 1966171168
      %v669 = vunpack.c.0.s8 %v668
      %v670 = vlaneseq
      %v671 = vshrl.u32 %v670, 7
      %v672 = vsub.s32 %v669, %v671
      %v673 = vrot.slane %v657, %v672
      %v675 = vunpack.c.l.s4 1966171168
      %v676 = vunpack.c.0.s8 %v675
      %v677 = vlaneseq
      %v678 = vshrl.u32 %v677, 7
      %v679 = vsub.s32 %v676, %v678
      %v680 = vrot.slane %v658, %v679
      %v682 = vunpack.c.l.s4 1966171168
      %v683 = vunpack.c.0.s8 %v682
      %v684 = vlaneseq
      %v685 = vshrl.u32 %v684, 7
      %v686 = vsub.s32 %v683, %v685
      %v687 = vrot.slane %v659, %v686
      %v688 = vcombine.high %v666, %v666
      %v689 = vcombine.high %v673, %v673
      %v690 = vcombine.high %v680, %v680
      %v691 = vcombine.high %v687, %v687
      %v828 = vunpack.c.l.b16 %v507
      %v829 = vunpack.c.l.b16 %v508
      %v830 = vunpack.c.l.b16 %v509
      %v831 = vunpack.c.l.b16 %v510
      %v832 = vunpack.c.l.b16 %v511
      %v833 = vunpack.c.l.b16 %v512
      %v834 = vunpack.c.l.b16 %v513
      %v835 = vunpack.c.l.b16 %v514
      %v836 = vunpack.c.l.b16 %v515
      %v837 = vunpack.c.l.b16 %v516
      %v838 = vunpack.c.l.b16 %v517
      %v839 = vunpack.c.l.b16 %v518
      %v840 = vunpack.c.l.b16 %v519
      %v841 = vunpack.c.l.b16 %v520
      %v842 = vunpack.c.l.b16 %v521
      %v843 = vunpack.c.l.b16 %v522
      %v844 = vunpack.c.l.b16 %v523
      %v845 = vunpack.c.l.b16 %v524
      %v846 = vunpack.c.l.b16 %v525
      %v847 = vunpack.c.l.b16 %v526
      %v848 = vunpack.c.l.b16 %v527
      %v849 = vunpack.c.l.b16 %v528
      %v850 = vunpack.c.l.b16 %v529
      %v851 = vunpack.c.l.b16 %v530
      %v852 = vunpack.c.l.b16 %v531
      %v853 = vunpack.c.l.b16 %v532
      %v854 = vunpack.c.l.b16 %v533
      %v855 = vunpack.c.l.b16 %v534
      %v856 = vunpack.c.l.b16 %v535
      %v857 = vunpack.c.l.b16 %v536
      %v858 = vunpack.c.l.b16 %v537
      %v859 = vunpack.c.l.b16 %v538
      %v860 = vunpack.c.l.b16 %v539
      %v861 = vunpack.c.l.b16 %v540
      %v862 = vunpack.c.l.b16 %v541
      %v863 = vunpack.c.l.b16 %v542
      %v864 = vunpack.c.l.b16 %v543
      %v865 = vunpack.c.l.b16 %v544
      %v866 = vunpack.c.l.b16 %v545
      %v867 = vunpack.c.l.b16 %v546
      %v868 = vunpack.c.l.b16 %v547
      %v869 = vunpack.c.l.b16 %v548
      %v870 = vunpack.c.l.b16 %v549
      %v871 = vunpack.c.l.b16 %v550
      %v872 = vunpack.c.l.b16 %v551
      %v873 = vunpack.c.l.b16 %v552
      %v874 = vunpack.c.l.b16 %v553
      %v875 = vunpack.c.l.b16 %v554
      %v876 = vunpack.c.l.b16 %v555
      %v877 = vunpack.c.l.b16 %v556
      %v878 = vunpack.c.l.b16 %v557
      %v879 = vunpack.c.l.b16 %v558
      %v880 = vunpack.c.l.b16 %v559
      %v881 = vunpack.c.l.b16 %v560
      %v882 = vunpack.c.l.b16 %v561
      %v883 = vunpack.c.l.b16 %v562
      %v884 = vunpack.c.l.b16 %v563
      %v885 = vunpack.c.l.b16 %v564
      %v886 = vunpack.c.l.b16 %v565
      %v887 = vunpack.c.l.b16 %v566
      %v888 = vunpack.c.l.b16 %v567
      %v889 = vunpack.c.l.b16 %v568
      %v890 = vunpack.c.l.b16 %v569
      %v891 = vunpack.c.l.b16 %v570
      %v892 = vunpack.c.l.b16 %v571
      %v893 = vunpack.c.l.b16 %v572
      %v894 = vunpack.c.l.b16 %v573
      %v895 = vunpack.c.l.b16 %v574
      %v896 = vunpack.c.l.b16 %v575
      %v897 = vunpack.c.l.b16 %v576
      %v898 = vunpack.c.l.b16 %v577
      %v899 = vunpack.c.l.b16 %v578
      %v900 = vunpack.c.l.b16 %v579
      %v901 = vunpack.c.l.b16 %v580
      %v902 = vunpack.c.l.b16 %v581
      %v903 = vunpack.c.l.b16 %v582
      %v904 = vunpack.c.l.b16 %v583
      %v905 = vunpack.c.l.b16 %v584
      %v906 = vunpack.c.l.b16 %v585
      %v907 = vunpack.c.l.b16 %v586
      %v908 = vunpack.c.l.b16 %v587
      %v909 = vunpack.c.l.b16 %v588
      %v910 = vunpack.c.l.b16 %v589
      %v911 = vunpack.c.l.b16 %v590
      %v912 = vunpack.c.l.b16 %v591
      %v913 = vunpack.c.l.b16 %v592
      %v914 = vunpack.c.l.b16 %v593
      %v915 = vunpack.c.l.b16 %v594
      %v916 = vunpack.c.l.b16 %v595
      %v917 = vunpack.c.l.b16 %v596
      %v918 = vunpack.c.l.b16 %v597
      %v919 = vunpack.c.l.b16 %v598
      %v920 = vunpack.c.l.b16 %v599
      %v921 = vunpack.c.l.b16 %v600
      %v922 = vunpack.c.l.b16 %v601
      %v923 = vunpack.c.l.b16 %v602
      %v924 = vunpack.c.l.b16 %v603
      %v925 = vunpack.c.l.b16 %v604
      %v926 = vunpack.c.l.b16 %v605
      %v927 = vunpack.c.l.b16 %v606
      %v928 = vunpack.c.l.b16 %v607
      %v929 = vunpack.c.l.b16 %v608
      %v930 = vunpack.c.l.b16 %v609
      %v931 = vunpack.c.l.b16 %v610
      %v932 = vunpack.c.l.b16 %v611
      %v933 = vunpack.c.l.b16 %v612
      %v934 = vunpack.c.l.b16 %v613
      %v935 = vunpack.c.l.b16 %v614
      %v936 = vunpack.c.l.b16 %v615
      %v937 = vunpack.c.l.b16 %v616
      %v938 = vunpack.c.l.b16 %v617
      %v939 = vunpack.c.l.b16 %v618
      %v940 = vunpack.c.l.b16 %v619
      %v941 = vunpack.c.l.b16 %v620
      %v942 = vunpack.c.l.b16 %v621
      %v943 = vunpack.c.l.b16 %v622
      %v944 = vunpack.c.l.b16 %v623
      %v945 = vunpack.c.l.b16 %v624
      %v946 = vunpack.c.l.b16 %v625
      %v947 = vunpack.c.l.b16 %v626
      %v948 = vunpack.c.l.b16 %v627
      %v949 = vunpack.c.l.b16 %v628
      %v950 = vunpack.c.l.b16 %v629
      %v951 = vunpack.c.l.b16 %v630
      %v952 = vunpack.c.l.b16 %v631
      %v953 = vunpack.c.l.b16 %v632
      %v954 = vunpack.c.l.b16 %v633
      %v955 = vunpack.c.l.b16 %v634
      %v956 = vpack.c.b16 %v829, %v828
      %v957 = vpack.c.b16 %v831, %v830
      %v958 = vpack.c.b16 %v833, %v832
      %v959 = vpack.c.b16 %v835, %v834
      %v960 = vpack.c.b16 %v837, %v836
      %v961 = vpack.c.b16 %v839, %v838
      %v962 = vpack.c.b16 %v841, %v840
      %v963 = vpack.c.b16 %v843, %v842
      %v964 = vpack.c.b16 %v845, %v844
      %v965 = vpack.c.b16 %v847, %v846
      %v966 = vpack.c.b16 %v849, %v848
      %v967 = vpack.c.b16 %v851, %v850
      %v968 = vpack.c.b16 %v853, %v852
      %v969 = vpack.c.b16 %v855, %v854
      %v970 = vpack.c.b16 %v857, %v856
      %v971 = vpack.c.b16 %v859, %v858
      %v972 = vpack.c.b16 %v861, %v860
      %v973 = vpack.c.b16 %v863, %v862
      %v974 = vpack.c.b16 %v865, %v864
      %v975 = vpack.c.b16 %v867, %v866
      %v976 = vpack.c.b16 %v869, %v868
      %v977 = vpack.c.b16 %v871, %v870
      %v978 = vpack.c.b16 %v873, %v872
      %v979 = vpack.c.b16 %v875, %v874
      %v980 = vpack.c.b16 %v877, %v876
      %v981 = vpack.c.b16 %v879, %v878
      %v982 = vpack.c.b16 %v881, %v880
      %v983 = vpack.c.b16 %v883, %v882
      %v984 = vpack.c.b16 %v885, %v884
      %v985 = vpack.c.b16 %v887, %v886
      %v986 = vpack.c.b16 %v889, %v888
      %v987 = vpack.c.b16 %v891, %v890
      %v988 = vpack.c.b16 %v893, %v892
      %v989 = vpack.c.b16 %v895, %v894
      %v990 = vpack.c.b16 %v897, %v896
      %v991 = vpack.c.b16 %v899, %v898
      %v992 = vpack.c.b16 %v901, %v900
      %v993 = vpack.c.b16 %v903, %v902
      %v994 = vpack.c.b16 %v905, %v904
      %v995 = vpack.c.b16 %v907, %v906
      %v996 = vpack.c.b16 %v909, %v908
      %v997 = vpack.c.b16 %v911, %v910
      %v998 = vpack.c.b16 %v913, %v912
      %v999 = vpack.c.b16 %v915, %v914
      %v1000 = vpack.c.b16 %v917, %v916
      %v1001 = vpack.c.b16 %v919, %v918
      %v1002 = vpack.c.b16 %v921, %v920
      %v1003 = vpack.c.b16 %v923, %v922
      %v1004 = vpack.c.b16 %v925, %v924
      %v1005 = vpack.c.b16 %v927, %v926
      %v1006 = vpack.c.b16 %v929, %v928
      %v1007 = vpack.c.b16 %v931, %v930
      %v1008 = vpack.c.b16 %v933, %v932
      %v1009 = vpack.c.b16 %v935, %v934
      %v1010 = vpack.c.b16 %v937, %v936
      %v1011 = vpack.c.b16 %v939, %v938
      %v1012 = vpack.c.b16 %v941, %v940
      %v1013 = vpack.c.b16 %v943, %v942
      %v1014 = vpack.c.b16 %v945, %v944
      %v1015 = vpack.c.b16 %v947, %v946
      %v1016 = vpack.c.b16 %v949, %v948
      %v1017 = vpack.c.b16 %v951, %v950
      %v1018 = vpack.c.b16 %v953, %v952
      %v1019 = vpack.c.b16 %v955, %v954
      %1084 = vmatprep.subr.bf16.mxu0 0
      %1085 = vmatpush1.bf16.msra.mxu0 %v963
      %1086 = vmatprep.subr.bf16.mxu0 0
      %1087 = vmatpush1.bf16.msra.mxu0 %v962
      %1088 = vmatprep.subr.bf16.mxu0 0
      %1089 = vmatpush1.bf16.msra.mxu0 %v961
      %1090 = vmatprep.subr.bf16.mxu0 0
      %1091 = vmatpush1.bf16.msra.mxu0 %v960
      %1092 = vmatprep.subr.bf16.mxu0 0
      %1093 = vmatpush1.bf16.msra.mxu0 %v959
      %1094 = vmatprep.subr.bf16.mxu0 0
      %1095 = vmatpush1.bf16.msra.mxu0 %v958
      %1096 = vmatprep.subr.bf16.mxu0 0
      %1097 = vmatpush1.bf16.msra.mxu0 %v957
      %1098 = vmatprep.subr.bf16.mxu0 0
      %1099 = vmatpush1.bf16.msra.mxu0 %v956
      %1100 = vmatprep.subr.bf16.mxu0 0
      %1101 = vmatpush2.bf16.msra.mxu0 %v971
      %1102 = vmatprep.subr.bf16.mxu0 0
      %1103 = vmatpush2.bf16.msra.mxu0 %v970
      %1104 = vmatprep.subr.bf16.mxu0 0
      %1105 = vmatpush2.bf16.msra.mxu0 %v969
      %1106 = vmatprep.subr.bf16.mxu0 0
      %1107 = vmatpush2.bf16.msra.mxu0 %v968
      %1108 = vmatprep.subr.bf16.mxu0 0
      %1109 = vmatpush2.bf16.msra.mxu0 %v967
      %1110 = vmatprep.subr.bf16.mxu0 0
      %1111 = vmatpush2.bf16.msra.mxu0 %v966
      %1112 = vmatprep.subr.bf16.mxu0 0
      %1113 = vmatpush2.bf16.msra.mxu0 %v965
      %1114 = vmatprep.subr.bf16.mxu0 0
      %1115 = vmatpush2.bf16.msra.mxu0 %v964
      %1116 = vmatprep.mubr.bf16.mxu0 %v680
      %1117 = vmatmul.mubr.bf16.gmra.mxu0 %v666
      %v1118 = vpop.f32.mrf.mxu0
      %v1119 = vadd.f32 %v640, %v1118
      %v1120 = vpop.f32.mrf.mxu0
      %v1121 = vpop.f32.mrf.mxu0
      %v1122 = vpop.f32.mrf.mxu0
      %1123 = vdwg.mxu0
      %1124 = vmatprep.subr.bf16.mxu0 0
      %1125 = vmatpush1.bf16.msra.mxu0 %v979
      %1126 = vmatprep.subr.bf16.mxu0 0
      %1127 = vmatpush1.bf16.msra.mxu0 %v978
      %1128 = vmatprep.subr.bf16.mxu0 0
      %1129 = vmatpush1.bf16.msra.mxu0 %v977
      %1130 = vmatprep.subr.bf16.mxu0 0
      %1131 = vmatpush1.bf16.msra.mxu0 %v976
      %1132 = vmatprep.subr.bf16.mxu0 0
      %1133 = vmatpush1.bf16.msra.mxu0 %v975
      %1134 = vmatprep.subr.bf16.mxu0 0
      %1135 = vmatpush1.bf16.msra.mxu0 %v974
      %1136 = vmatprep.subr.bf16.mxu0 0
      %1137 = vmatpush1.bf16.msra.mxu0 %v973
      %1138 = vmatprep.subr.bf16.mxu0 0
      %1139 = vmatpush1.bf16.msra.mxu0 %v972
      %1140 = vmatprep.subr.bf16.mxu0 0
      %1141 = vmatpush2.bf16.msra.mxu0 %v987
      %1142 = vmatprep.subr.bf16.mxu0 0
      %1143 = vmatpush2.bf16.msra.mxu0 %v986
      %1144 = vmatprep.subr.bf16.mxu0 0
      %1145 = vmatpush2.bf16.msra.mxu0 %v985
      %1146 = vmatprep.subr.bf16.mxu0 0
      %1147 = vmatpush2.bf16.msra.mxu0 %v984
      %1148 = vmatprep.subr.bf16.mxu0 0
      %1149 = vmatpush2.bf16.msra.mxu0 %v983
      %1150 = vmatprep.subr.bf16.mxu0 0
      %1151 = vmatpush2.bf16.msra.mxu0 %v982
      %1152 = vmatprep.subr.bf16.mxu0 0
      %1153 = vmatpush2.bf16.msra.mxu0 %v981
      %1154 = vmatprep.subr.bf16.mxu0 0
      %1155 = vmatpush2.bf16.msra.mxu0 %v980
      %1156 = vmatprep.mubr.bf16.mxu0 %v690
      %1157 = vmatmul.mubr.bf16.gmra.mxu0 %v688
      %v1158 = vpop.f32.mrf.mxu0
      %v1159 = vadd.f32 %v1119, %v1158
      %v1160 = vpop.f32.mrf.mxu0
      %v1161 = vpop.f32.mrf.mxu0
      %v1162 = vpop.f32.mrf.mxu0
      %1163 = vdwg.mxu0
      %1164 = vmatprep.subr.bf16.mxu0 0
      %1165 = vmatpush1.bf16.msra.mxu0 %v995
      %1166 = vmatprep.subr.bf16.mxu0 0
      %1167 = vmatpush1.bf16.msra.mxu0 %v994
      %1168 = vmatprep.subr.bf16.mxu0 0
      %1169 = vmatpush1.bf16.msra.mxu0 %v993
      %1170 = vmatprep.subr.bf16.mxu0 0
      %1171 = vmatpush1.bf16.msra.mxu0 %v992
      %1172 = vmatprep.subr.bf16.mxu0 0
      %1173 = vmatpush1.bf16.msra.mxu0 %v991
      %1174 = vmatprep.subr.bf16.mxu0 0
      %1175 = vmatpush1.bf16.msra.mxu0 %v990
      %1176 = vmatprep.subr.bf16.mxu0 0
      %1177 = vmatpush1.bf16.msra.mxu0 %v989
      %1178 = vmatprep.subr.bf16.mxu0 0
      %1179 = vmatpush1.bf16.msra.mxu0 %v988
      %1180 = vmatprep.subr.bf16.mxu0 0
      %1181 = vmatpush2.bf16.msra.mxu0 %v1003
      %1182 = vmatprep.subr.bf16.mxu0 0
      %1183 = vmatpush2.bf16.msra.mxu0 %v1002
      %1184 = vmatprep.subr.bf16.mxu0 0
      %1185 = vmatpush2.bf16.msra.mxu0 %v1001
      %1186 = vmatprep.subr.bf16.mxu0 0
      %1187 = vmatpush2.bf16.msra.mxu0 %v1000
      %1188 = vmatprep.subr.bf16.mxu0 0
      %1189 = vmatpush2.bf16.msra.mxu0 %v999
      %1190 = vmatprep.subr.bf16.mxu0 0
      %1191 = vmatpush2.bf16.msra.mxu0 %v998
      %1192 = vmatprep.subr.bf16.mxu0 0
      %1193 = vmatpush2.bf16.msra.mxu0 %v997
      %1194 = vmatprep.subr.bf16.mxu0 0
      %1195 = vmatpush2.bf16.msra.mxu0 %v996
      %1196 = vmatprep.mubr.bf16.mxu0 %v687
      %1197 = vmatmul.mubr.bf16.gmra.mxu0 %v673
      %v1198 = vpop.f32.mrf.mxu0
      %v1199 = vadd.f32 %v1159, %v1198
      %v1200 = vpop.f32.mrf.mxu0
      %v1201 = vpop.f32.mrf.mxu0
      %v1202 = vpop.f32.mrf.mxu0
      %1203 = vdwg.mxu0
      %1204 = vmatprep.subr.bf16.mxu0 0
      %1205 = vmatpush1.bf16.msra.mxu0 %v1011
      %1206 = vmatprep.subr.bf16.mxu0 0
      %1207 = vmatpush1.bf16.msra.mxu0 %v1010
      %1208 = vmatprep.subr.bf16.mxu0 0
      %1209 = vmatpush1.bf16.msra.mxu0 %v1009
      %1210 = vmatprep.subr.bf16.mxu0 0
      %1211 = vmatpush1.bf16.msra.mxu0 %v1008
      %1212 = vmatprep.subr.bf16.mxu0 0
      %1213 = vmatpush1.bf16.msra.mxu0 %v1007
      %1214 = vmatprep.subr.bf16.mxu0 0
      %1215 = vmatpush1.bf16.msra.mxu0 %v1006
      %1216 = vmatprep.subr.bf16.mxu0 0
      %1217 = vmatpush1.bf16.msra.mxu0 %v1005
      %1218 = vmatprep.subr.bf16.mxu0 0
      %1219 = vmatpush1.bf16.msra.mxu0 %v1004
      %1220 = vmatprep.subr.bf16.mxu0 0
      %1221 = vmatpush2.bf16.msra.mxu0 %v1019
      %1222 = vmatprep.subr.bf16.mxu0 0
      %1223 = vmatpush2.bf16.msra.mxu0 %v1018
      %1224 = vmatprep.subr.bf16.mxu0 0
      %1225 = vmatpush2.bf16.msra.mxu0 %v1017
      %1226 = vmatprep.subr.bf16.mxu0 0
      %1227 = vmatpush2.bf16.msra.mxu0 %v1016
      %1228 = vmatprep.subr.bf16.mxu0 0
      %1229 = vmatpush2.bf16.msra.mxu0 %v1015
      %1230 = vmatprep.subr.bf16.mxu0 0
      %1231 = vmatpush2.bf16.msra.mxu0 %v1014
      %1232 = vmatprep.subr.bf16.mxu0 0
      %1233 = vmatpush2.bf16.msra.mxu0 %v1013
      %1234 = vmatprep.subr.bf16.mxu0 0
      %1235 = vmatpush2.bf16.msra.mxu0 %v1012
      %1236 = vmatprep.mubr.bf16.mxu0 %v691
      %1237 = vmatmul.mubr.bf16.gmra.mxu0 %v689
      %v1238 = vpop.f32.mrf.mxu0
      %v1239 = vadd.f32 %v1199, %v1238
      %v1240 = vpop.f32.mrf.mxu0
      %v1241 = vpop.f32.mrf.mxu0
      %v1242 = vpop.f32.mrf.mxu0
      %1243 = vdwg.mxu0
      %v1244 = vmul.f32 %v1239, %v1239
      %vm1245 = vcmask 1041408
      %v1246 = vsel %vm1245, %v1244, 0.0
      %1247 = vadd.xlane.f32.xlu0 %v1246
      %v1248 = vpop.xlane.xlu0 %1247
      %v1249 = vmax.f32 %v1248, 1e-24
      %v1250 = vrsqrt.pop %v1249
      %v1251 = vmul.f32 %v1239, %v1250
      %1252 = vst [vmem:[%s500] sm:$0x3] %v1251
      %v1253 = vld [vmem:[%s468] sm:$0xff]
      %v1254 = vld [vmem:[%s468 + $0x8] sm:$0xff]
      %v1255 = vld [vmem:[%s468 + $0x10] sm:$0xff]
      %v1256 = vld [vmem:[%s468 + $0x18] sm:$0xff]
      %v1257 = vld [vmem:[%s468 + $0x20] sm:$0xff]
      %v1258 = vld [vmem:[%s468 + $0x28] sm:$0xff]
      %v1259 = vld [vmem:[%s468 + $0x30] sm:$0xff]
      %v1260 = vld [vmem:[%s468 + $0x38] sm:$0xff]
      %v1261 = vld [vmem:[%s468 + $0x40] sm:$0x11]
      %v1262 = vld [vmem:[%s468 + $0x48] sm:$0x11]
      %v1263 = vld [vmem:[%s468 + $0x50] sm:$0x11]
      %v1264 = vld [vmem:[%s468 + $0x58] sm:$0x11]
      %v1265 = vld [vmem:[%s481] sm:$0xf]
      %v1266 = vld [vmem:[%s481 + $0x4] sm:$0xf]
      %v1267 = vld [vmem:[%s481 + $0x8] sm:$0xf]
      %v1268 = vld [vmem:[%s481 + $0xc] sm:$0xf]
      %v1269 = vld [vmem:[%s481 + $0x10] sm:$0xf]
      %v1270 = vld [vmem:[%s481 + $0x14] sm:$0xf]
      %v1271 = vld [vmem:[%s481 + $0x18] sm:$0xf]
      %v1272 = vld [vmem:[%s481 + $0x1c] sm:$0xf]
      %v1273 = vld [vmem:[%s481 + $0x20] sm:$0xf]
      %v1274 = vld [vmem:[%s481 + $0x24] sm:$0xf]
      %v1275 = vld [vmem:[%s481 + $0x28] sm:$0xf]
      %v1276 = vld [vmem:[%s481 + $0x2c] sm:$0xf]
      %v1277 = vld [vmem:[%s481 + $0x30] sm:$0xf]
      %v1278 = vld [vmem:[%s481 + $0x34] sm:$0xf]
      %v1279 = vld [vmem:[%s481 + $0x38] sm:$0xf]
      %v1280 = vld [vmem:[%s481 + $0x3c] sm:$0xf]
      %v1281 = vld [vmem:[%s481 + $0x40] sm:$0xf]
      %v1282 = vld [vmem:[%s481 + $0x44] sm:$0xf]
      %v1283 = vld [vmem:[%s481 + $0x48] sm:$0xf]
      %v1284 = vld [vmem:[%s481 + $0x4c] sm:$0xf]
      %v1285 = vld [vmem:[%s481 + $0x50] sm:$0xf]
      %v1286 = vld [vmem:[%s481 + $0x54] sm:$0xf]
      %v1287 = vld [vmem:[%s481 + $0x58] sm:$0xf]
      %v1288 = vld [vmem:[%s481 + $0x5c] sm:$0xf]
      %v1289 = vld [vmem:[%s481 + $0x60] sm:$0xf]
      %v1290 = vld [vmem:[%s481 + $0x64] sm:$0xf]
      %v1291 = vld [vmem:[%s481 + $0x68] sm:$0xf]
      %v1292 = vld [vmem:[%s481 + $0x6c] sm:$0xf]
      %v1293 = vld [vmem:[%s481 + $0x70] sm:$0xf]
      %v1294 = vld [vmem:[%s481 + $0x74] sm:$0xf]
      %v1295 = vld [vmem:[%s481 + $0x78] sm:$0xf]
      %v1296 = vld [vmem:[%s481 + $0x7c] sm:$0xf]
      %v1297 = vld [vmem:[%s481 + $0x80] sm:$0xf]
      %v1298 = vld [vmem:[%s481 + $0x84] sm:$0xf]
      %v1299 = vld [vmem:[%s481 + $0x88] sm:$0xf]
      %v1300 = vld [vmem:[%s481 + $0x8c] sm:$0xf]
      %v1301 = vld [vmem:[%s481 + $0x90] sm:$0xf]
      %v1302 = vld [vmem:[%s481 + $0x94] sm:$0xf]
      %v1303 = vld [vmem:[%s481 + $0x98] sm:$0xf]
      %v1304 = vld [vmem:[%s481 + $0x9c] sm:$0xf]
      %v1305 = vld [vmem:[%s481 + $0xa0] sm:$0xf]
      %v1306 = vld [vmem:[%s481 + $0xa4] sm:$0xf]
      %v1307 = vld [vmem:[%s481 + $0xa8] sm:$0xf]
      %v1308 = vld [vmem:[%s481 + $0xac] sm:$0xf]
      %v1309 = vld [vmem:[%s481 + $0xb0] sm:$0xf]
      %v1310 = vld [vmem:[%s481 + $0xb4] sm:$0xf]
      %v1311 = vld [vmem:[%s481 + $0xb8] sm:$0xf]
      %v1312 = vld [vmem:[%s481 + $0xbc] sm:$0xf]
      %v1313 = vld [vmem:[%s481 + $0xc0] sm:$0xf]
      %v1314 = vld [vmem:[%s481 + $0xc4] sm:$0xf]
      %v1315 = vld [vmem:[%s481 + $0xc8] sm:$0xf]
      %v1316 = vld [vmem:[%s481 + $0xcc] sm:$0xf]
      %v1317 = vld [vmem:[%s481 + $0xd0] sm:$0xf]
      %v1318 = vld [vmem:[%s481 + $0xd4] sm:$0xf]
      %v1319 = vld [vmem:[%s481 + $0xd8] sm:$0xf]
      %v1320 = vld [vmem:[%s481 + $0xdc] sm:$0xf]
      %v1321 = vld [vmem:[%s481 + $0xe0] sm:$0xf]
      %v1322 = vld [vmem:[%s481 + $0xe4] sm:$0xf]
      %v1323 = vld [vmem:[%s481 + $0xe8] sm:$0xf]
      %v1324 = vld [vmem:[%s481 + $0xec] sm:$0xf]
      %v1325 = vld [vmem:[%s481 + $0xf0] sm:$0xf]
      %v1326 = vld [vmem:[%s481 + $0xf4] sm:$0xf]
      %v1327 = vld [vmem:[%s481 + $0xf8] sm:$0xf]
      %v1328 = vld [vmem:[%s481 + $0xfc] sm:$0xf]
      %v1329 = vld [vmem:[%s481 + $0x100] sm:$0xf]
      %v1330 = vld [vmem:[%s481 + $0x104] sm:$0xf]
      %v1331 = vld [vmem:[%s481 + $0x108] sm:$0xf]
      %v1332 = vld [vmem:[%s481 + $0x10c] sm:$0xf]
      %v1333 = vld [vmem:[%s481 + $0x110] sm:$0xf]
      %v1334 = vld [vmem:[%s481 + $0x114] sm:$0xf]
      %v1335 = vld [vmem:[%s481 + $0x118] sm:$0xf]
      %v1336 = vld [vmem:[%s481 + $0x11c] sm:$0xf]
      %v1337 = vld [vmem:[%s481 + $0x120] sm:$0xf]
      %v1338 = vld [vmem:[%s481 + $0x124] sm:$0xf]
      %v1339 = vld [vmem:[%s481 + $0x128] sm:$0xf]
      %v1340 = vld [vmem:[%s481 + $0x12c] sm:$0xf]
      %v1341 = vld [vmem:[%s481 + $0x130] sm:$0xf]
      %v1342 = vld [vmem:[%s481 + $0x134] sm:$0xf]
      %v1343 = vld [vmem:[%s481 + $0x138] sm:$0xf]
      %v1344 = vld [vmem:[%s481 + $0x13c] sm:$0xf]
      %v1345 = vld [vmem:[%s481 + $0x140] sm:$0xf]
      %v1346 = vld [vmem:[%s481 + $0x144] sm:$0xf]
      %v1347 = vld [vmem:[%s481 + $0x148] sm:$0xf]
      %v1348 = vld [vmem:[%s481 + $0x14c] sm:$0xf]
      %v1349 = vld [vmem:[%s481 + $0x150] sm:$0xf]
      %v1350 = vld [vmem:[%s481 + $0x154] sm:$0xf]
      %v1351 = vld [vmem:[%s481 + $0x158] sm:$0xf]
      %v1352 = vld [vmem:[%s481 + $0x15c] sm:$0xf]
      %v1353 = vld [vmem:[%s481 + $0x160] sm:$0xf]
      %v1354 = vld [vmem:[%s481 + $0x164] sm:$0xf]
      %v1355 = vld [vmem:[%s481 + $0x168] sm:$0xf]
      %v1356 = vld [vmem:[%s481 + $0x16c] sm:$0xf]
      %v1357 = vld [vmem:[%s481 + $0x170] sm:$0xf]
      %v1358 = vld [vmem:[%s481 + $0x174] sm:$0xf]
      %v1359 = vld [vmem:[%s481 + $0x178] sm:$0xf]
      %v1360 = vld [vmem:[%s481 + $0x17c] sm:$0xf]
      %v1361 = vld [vmem:[%s481 + $0x180] sm:$0xf]
      %v1362 = vld [vmem:[%s481 + $0x184] sm:$0xf]
      %v1363 = vld [vmem:[%s481 + $0x188] sm:$0xf]
      %v1364 = vld [vmem:[%s481 + $0x18c] sm:$0xf]
      %v1365 = vld [vmem:[%s481 + $0x190] sm:$0xf]
      %v1366 = vld [vmem:[%s481 + $0x194] sm:$0xf]
      %v1367 = vld [vmem:[%s481 + $0x198] sm:$0xf]
      %v1368 = vld [vmem:[%s481 + $0x19c] sm:$0xf]
      %v1369 = vld [vmem:[%s481 + $0x1a0] sm:$0xf]
      %v1370 = vld [vmem:[%s481 + $0x1a4] sm:$0xf]
      %v1371 = vld [vmem:[%s481 + $0x1a8] sm:$0xf]
      %v1372 = vld [vmem:[%s481 + $0x1ac] sm:$0xf]
      %v1373 = vld [vmem:[%s481 + $0x1b0] sm:$0xf]
      %v1374 = vld [vmem:[%s481 + $0x1b4] sm:$0xf]
      %v1375 = vld [vmem:[%s481 + $0x1b8] sm:$0xf]
      %v1376 = vld [vmem:[%s481 + $0x1bc] sm:$0xf]
      %v1377 = vld [vmem:[%s481 + $0x1c0] sm:$0xf]
      %v1378 = vld [vmem:[%s481 + $0x1c4] sm:$0xf]
      %v1379 = vld [vmem:[%s481 + $0x1c8] sm:$0xf]
      %v1380 = vld [vmem:[%s481 + $0x1cc] sm:$0xf]
      %v1381 = vld [vmem:[%s481 + $0x1d0] sm:$0xf]
      %v1382 = vld [vmem:[%s481 + $0x1d4] sm:$0xf]
      %v1383 = vld [vmem:[%s481 + $0x1d8] sm:$0xf]
      %v1384 = vld [vmem:[%s481 + $0x1dc] sm:$0xf]
      %v1385 = vld [vmem:[%s481 + $0x1e0] sm:$0xf]
      %v1386 = vld [vmem:[%s481 + $0x1e4] sm:$0xf]
      %v1387 = vld [vmem:[%s481 + $0x1e8] sm:$0xf]
      %v1388 = vld [vmem:[%s481 + $0x1ec] sm:$0xf]
      %v1389 = vld [vmem:[%s481 + $0x1f0] sm:$0xf]
      %v1390 = vld [vmem:[%s481 + $0x1f4] sm:$0xf]
      %v1391 = vld [vmem:[%s481 + $0x1f8] sm:$0xf]
      %v1392 = vld [vmem:[%s481 + $0x1fc] sm:$0xf]
      %v1393 = vld [vmem:[%s484] sm:$0x1]
      %v1395 = vlaneseq
      %v1396 = vshrl.u32 %v1395, 7
      %v1397 = vsub.s32 0, %v1396
      %v1398 = vrot.slane %v1393, %v1397
      %v1412 = vunpack.c.l.b16 %v1253
      %v1413 = vunpack.c.h.b16 %v1253
      %v1414 = vunpack.c.l.b16 %v1254
      %v1415 = vunpack.c.h.b16 %v1254
      %v1416 = vunpack.c.l.b16 %v1255
      %v1417 = vunpack.c.h.b16 %v1255
      %v1418 = vunpack.c.l.b16 %v1256
      %v1419 = vunpack.c.h.b16 %v1256
      %v1420 = vunpack.c.l.b16 %v1257
      %v1421 = vunpack.c.h.b16 %v1257
      %v1422 = vunpack.c.l.b16 %v1258
      %v1423 = vunpack.c.h.b16 %v1258
      %v1424 = vunpack.c.l.b16 %v1259
      %v1425 = vunpack.c.h.b16 %v1259
      %v1426 = vunpack.c.l.b16 %v1260
      %v1427 = vunpack.c.h.b16 %v1260
      %v1428 = vunpack.c.l.b16 %v1261
      %v1429 = vunpack.c.h.b16 %v1261
      %v1430 = vunpack.c.l.b16 %v1262
      %v1431 = vunpack.c.h.b16 %v1262
      %v1432 = vunpack.c.l.b16 %v1263
      %v1433 = vunpack.c.h.b16 %v1263
      %v1434 = vunpack.c.l.b16 %v1264
      %v1435 = vunpack.c.h.b16 %v1264
      %v1436 = vpack.c.b16 %v1420, %v1412
      %v1437 = vpack.c.b16 %v1421, %v1413
      %v1438 = vpack.c.b16 %v1422, %v1414
      %v1439 = vpack.c.b16 %v1423, %v1415
      %v1440 = vpack.c.b16 %v1424, %v1416
      %v1441 = vpack.c.b16 %v1425, %v1417
      %v1442 = vpack.c.b16 %v1426, %v1418
      %v1443 = vpack.c.b16 %v1427, %v1419
      %v1444 = vpack.c.b16 %v1428, %v1428
      %v1445 = vpack.c.b16 %v1429, %v1429
      %v1446 = vpack.c.b16 %v1430, %v1430
      %v1447 = vpack.c.b16 %v1431, %v1431
      %v1448 = vpack.c.b16 %v1432, %v1432
      %v1449 = vpack.c.b16 %v1433, %v1433
      %v1450 = vpack.c.b16 %v1434, %v1434
      %v1451 = vpack.c.b16 %v1435, %v1435
      %v1596 = vunpack.c.l.b16 %v1265
      %v1597 = vunpack.c.l.b16 %v1266
      %v1598 = vunpack.c.l.b16 %v1267
      %v1599 = vunpack.c.l.b16 %v1268
      %v1600 = vunpack.c.l.b16 %v1269
      %v1601 = vunpack.c.l.b16 %v1270
      %v1602 = vunpack.c.l.b16 %v1271
      %v1603 = vunpack.c.l.b16 %v1272
      %v1604 = vunpack.c.l.b16 %v1273
      %v1605 = vunpack.c.l.b16 %v1274
      %v1606 = vunpack.c.l.b16 %v1275
      %v1607 = vunpack.c.l.b16 %v1276
      %v1608 = vunpack.c.l.b16 %v1277
      %v1609 = vunpack.c.l.b16 %v1278
      %v1610 = vunpack.c.l.b16 %v1279
      %v1611 = vunpack.c.l.b16 %v1280
      %v1612 = vunpack.c.l.b16 %v1281
      %v1613 = vunpack.c.l.b16 %v1282
      %v1614 = vunpack.c.l.b16 %v1283
      %v1615 = vunpack.c.l.b16 %v1284
      %v1616 = vunpack.c.l.b16 %v1285
      %v1617 = vunpack.c.l.b16 %v1286
      %v1618 = vunpack.c.l.b16 %v1287
      %v1619 = vunpack.c.l.b16 %v1288
      %v1620 = vunpack.c.l.b16 %v1289
      %v1621 = vunpack.c.l.b16 %v1290
      %v1622 = vunpack.c.l.b16 %v1291
      %v1623 = vunpack.c.l.b16 %v1292
      %v1624 = vunpack.c.l.b16 %v1293
      %v1625 = vunpack.c.l.b16 %v1294
      %v1626 = vunpack.c.l.b16 %v1295
      %v1627 = vunpack.c.l.b16 %v1296
      %v1628 = vunpack.c.l.b16 %v1297
      %v1629 = vunpack.c.l.b16 %v1298
      %v1630 = vunpack.c.l.b16 %v1299
      %v1631 = vunpack.c.l.b16 %v1300
      %v1632 = vunpack.c.l.b16 %v1301
      %v1633 = vunpack.c.l.b16 %v1302
      %v1634 = vunpack.c.l.b16 %v1303
      %v1635 = vunpack.c.l.b16 %v1304
      %v1636 = vunpack.c.l.b16 %v1305
      %v1637 = vunpack.c.l.b16 %v1306
      %v1638 = vunpack.c.l.b16 %v1307
      %v1639 = vunpack.c.l.b16 %v1308
      %v1640 = vunpack.c.l.b16 %v1309
      %v1641 = vunpack.c.l.b16 %v1310
      %v1642 = vunpack.c.l.b16 %v1311
      %v1643 = vunpack.c.l.b16 %v1312
      %v1644 = vunpack.c.l.b16 %v1313
      %v1645 = vunpack.c.l.b16 %v1314
      %v1646 = vunpack.c.l.b16 %v1315
      %v1647 = vunpack.c.l.b16 %v1316
      %v1648 = vunpack.c.l.b16 %v1317
      %v1649 = vunpack.c.l.b16 %v1318
      %v1650 = vunpack.c.l.b16 %v1319
      %v1651 = vunpack.c.l.b16 %v1320
      %v1652 = vunpack.c.l.b16 %v1321
      %v1653 = vunpack.c.l.b16 %v1322
      %v1654 = vunpack.c.l.b16 %v1323
      %v1655 = vunpack.c.l.b16 %v1324
      %v1656 = vunpack.c.l.b16 %v1325
      %v1657 = vunpack.c.l.b16 %v1326
      %v1658 = vunpack.c.l.b16 %v1327
      %v1659 = vunpack.c.l.b16 %v1328
      %v1660 = vunpack.c.l.b16 %v1329
      %v1661 = vunpack.c.l.b16 %v1330
      %v1662 = vunpack.c.l.b16 %v1331
      %v1663 = vunpack.c.l.b16 %v1332
      %v1664 = vunpack.c.l.b16 %v1333
      %v1665 = vunpack.c.l.b16 %v1334
      %v1666 = vunpack.c.l.b16 %v1335
      %v1667 = vunpack.c.l.b16 %v1336
      %v1668 = vunpack.c.l.b16 %v1337
      %v1669 = vunpack.c.l.b16 %v1338
      %v1670 = vunpack.c.l.b16 %v1339
      %v1671 = vunpack.c.l.b16 %v1340
      %v1672 = vunpack.c.l.b16 %v1341
      %v1673 = vunpack.c.l.b16 %v1342
      %v1674 = vunpack.c.l.b16 %v1343
      %v1675 = vunpack.c.l.b16 %v1344
      %v1676 = vunpack.c.l.b16 %v1345
      %v1677 = vunpack.c.l.b16 %v1346
      %v1678 = vunpack.c.l.b16 %v1347
      %v1679 = vunpack.c.l.b16 %v1348
      %v1680 = vunpack.c.l.b16 %v1349
      %v1681 = vunpack.c.l.b16 %v1350
      %v1682 = vunpack.c.l.b16 %v1351
      %v1683 = vunpack.c.l.b16 %v1352
      %v1684 = vunpack.c.l.b16 %v1353
      %v1685 = vunpack.c.l.b16 %v1354
      %v1686 = vunpack.c.l.b16 %v1355
      %v1687 = vunpack.c.l.b16 %v1356
      %v1688 = vunpack.c.l.b16 %v1357
      %v1689 = vunpack.c.l.b16 %v1358
      %v1690 = vunpack.c.l.b16 %v1359
      %v1691 = vunpack.c.l.b16 %v1360
      %v1692 = vunpack.c.l.b16 %v1361
      %v1693 = vunpack.c.l.b16 %v1362
      %v1694 = vunpack.c.l.b16 %v1363
      %v1695 = vunpack.c.l.b16 %v1364
      %v1696 = vunpack.c.l.b16 %v1365
      %v1697 = vunpack.c.l.b16 %v1366
      %v1698 = vunpack.c.l.b16 %v1367
      %v1699 = vunpack.c.l.b16 %v1368
      %v1700 = vunpack.c.l.b16 %v1369
      %v1701 = vunpack.c.l.b16 %v1370
      %v1702 = vunpack.c.l.b16 %v1371
      %v1703 = vunpack.c.l.b16 %v1372
      %v1704 = vunpack.c.l.b16 %v1373
      %v1705 = vunpack.c.l.b16 %v1374
      %v1706 = vunpack.c.l.b16 %v1375
      %v1707 = vunpack.c.l.b16 %v1376
      %v1708 = vunpack.c.l.b16 %v1377
      %v1709 = vunpack.c.l.b16 %v1378
      %v1710 = vunpack.c.l.b16 %v1379
      %v1711 = vunpack.c.l.b16 %v1380
      %v1712 = vunpack.c.l.b16 %v1381
      %v1713 = vunpack.c.l.b16 %v1382
      %v1714 = vunpack.c.l.b16 %v1383
      %v1715 = vunpack.c.l.b16 %v1384
      %v1716 = vunpack.c.l.b16 %v1385
      %v1717 = vunpack.c.l.b16 %v1386
      %v1718 = vunpack.c.l.b16 %v1387
      %v1719 = vunpack.c.l.b16 %v1388
      %v1720 = vunpack.c.l.b16 %v1389
      %v1721 = vunpack.c.l.b16 %v1390
      %v1722 = vunpack.c.l.b16 %v1391
      %v1723 = vunpack.c.l.b16 %v1392
      %v1724 = vpack.c.b16 %v1597, %v1596
      %v1725 = vpack.c.b16 %v1599, %v1598
      %v1726 = vpack.c.b16 %v1601, %v1600
      %v1727 = vpack.c.b16 %v1603, %v1602
      %v1728 = vpack.c.b16 %v1605, %v1604
      %v1729 = vpack.c.b16 %v1607, %v1606
      %v1730 = vpack.c.b16 %v1609, %v1608
      %v1731 = vpack.c.b16 %v1611, %v1610
      %v1732 = vpack.c.b16 %v1613, %v1612
      %v1733 = vpack.c.b16 %v1615, %v1614
      %v1734 = vpack.c.b16 %v1617, %v1616
      %v1735 = vpack.c.b16 %v1619, %v1618
      %v1736 = vpack.c.b16 %v1621, %v1620
      %v1737 = vpack.c.b16 %v1623, %v1622
      %v1738 = vpack.c.b16 %v1625, %v1624
      %v1739 = vpack.c.b16 %v1627, %v1626
      %v1740 = vpack.c.b16 %v1629, %v1628
      %v1741 = vpack.c.b16 %v1631, %v1630
      %v1742 = vpack.c.b16 %v1633, %v1632
      %v1743 = vpack.c.b16 %v1635, %v1634
      %v1744 = vpack.c.b16 %v1637, %v1636
      %v1745 = vpack.c.b16 %v1639, %v1638
      %v1746 = vpack.c.b16 %v1641, %v1640
      %v1747 = vpack.c.b16 %v1643, %v1642
      %v1748 = vpack.c.b16 %v1645, %v1644
      %v1749 = vpack.c.b16 %v1647, %v1646
      %v1750 = vpack.c.b16 %v1649, %v1648
      %v1751 = vpack.c.b16 %v1651, %v1650
      %v1752 = vpack.c.b16 %v1653, %v1652
      %v1753 = vpack.c.b16 %v1655, %v1654
      %v1754 = vpack.c.b16 %v1657, %v1656
      %v1755 = vpack.c.b16 %v1659, %v1658
      %v1756 = vpack.c.b16 %v1661, %v1660
      %v1757 = vpack.c.b16 %v1663, %v1662
      %v1758 = vpack.c.b16 %v1665, %v1664
      %v1759 = vpack.c.b16 %v1667, %v1666
      %v1760 = vpack.c.b16 %v1669, %v1668
      %v1761 = vpack.c.b16 %v1671, %v1670
      %v1762 = vpack.c.b16 %v1673, %v1672
      %v1763 = vpack.c.b16 %v1675, %v1674
      %v1764 = vpack.c.b16 %v1677, %v1676
      %v1765 = vpack.c.b16 %v1679, %v1678
      %v1766 = vpack.c.b16 %v1681, %v1680
      %v1767 = vpack.c.b16 %v1683, %v1682
      %v1768 = vpack.c.b16 %v1685, %v1684
      %v1769 = vpack.c.b16 %v1687, %v1686
      %v1770 = vpack.c.b16 %v1689, %v1688
      %v1771 = vpack.c.b16 %v1691, %v1690
      %v1772 = vpack.c.b16 %v1693, %v1692
      %v1773 = vpack.c.b16 %v1695, %v1694
      %v1774 = vpack.c.b16 %v1697, %v1696
      %v1775 = vpack.c.b16 %v1699, %v1698
      %v1776 = vpack.c.b16 %v1701, %v1700
      %v1777 = vpack.c.b16 %v1703, %v1702
      %v1778 = vpack.c.b16 %v1705, %v1704
      %v1779 = vpack.c.b16 %v1707, %v1706
      %v1780 = vpack.c.b16 %v1709, %v1708
      %v1781 = vpack.c.b16 %v1711, %v1710
      %v1782 = vpack.c.b16 %v1713, %v1712
      %v1783 = vpack.c.b16 %v1715, %v1714
      %v1784 = vpack.c.b16 %v1717, %v1716
      %v1785 = vpack.c.b16 %v1719, %v1718
      %v1786 = vpack.c.b16 %v1721, %v1720
      %v1787 = vpack.c.b16 %v1723, %v1722
      %1852 = vmatprep.subr.bf16.mxu0 0
      %1853 = vmatpush1.bf16.msra.mxu0 %v1731
      %1854 = vmatprep.subr.bf16.mxu0 0
      %1855 = vmatpush1.bf16.msra.mxu0 %v1730
      %1856 = vmatprep.subr.bf16.mxu0 0
      %1857 = vmatpush1.bf16.msra.mxu0 %v1729
      %1858 = vmatprep.subr.bf16.mxu0 0
      %1859 = vmatpush1.bf16.msra.mxu0 %v1728
      %1860 = vmatprep.subr.bf16.mxu0 0
      %1861 = vmatpush1.bf16.msra.mxu0 %v1727
      %1862 = vmatprep.subr.bf16.mxu0 0
      %1863 = vmatpush1.bf16.msra.mxu0 %v1726
      %1864 = vmatprep.subr.bf16.mxu0 0
      %1865 = vmatpush1.bf16.msra.mxu0 %v1725
      %1866 = vmatprep.subr.bf16.mxu0 0
      %1867 = vmatpush1.bf16.msra.mxu0 %v1724
      %1868 = vmatprep.subr.bf16.mxu0 0
      %1869 = vmatpush2.bf16.msra.mxu0 %v1739
      %1870 = vmatprep.subr.bf16.mxu0 0
      %1871 = vmatpush2.bf16.msra.mxu0 %v1738
      %1872 = vmatprep.subr.bf16.mxu0 0
      %1873 = vmatpush2.bf16.msra.mxu0 %v1737
      %1874 = vmatprep.subr.bf16.mxu0 0
      %1875 = vmatpush2.bf16.msra.mxu0 %v1736
      %1876 = vmatprep.subr.bf16.mxu0 0
      %1877 = vmatpush2.bf16.msra.mxu0 %v1735
      %1878 = vmatprep.subr.bf16.mxu0 0
      %1879 = vmatpush2.bf16.msra.mxu0 %v1734
      %1880 = vmatprep.subr.bf16.mxu0 0
      %1881 = vmatpush2.bf16.msra.mxu0 %v1733
      %1882 = vmatprep.subr.bf16.mxu0 0
      %1883 = vmatpush2.bf16.msra.mxu0 %v1732
      %1884 = vmatprep.mubr.bf16.mxu0 %v1437
      %1885 = vmatmul.mubr.bf16.gmra.mxu0 %v1436
      %v1886 = vpop.f32.mrf.mxu0
      %v1887 = vadd.f32 %v1398, %v1886
      %v1888 = vpop.f32.mrf.mxu0
      %v1889 = vpop.f32.mrf.mxu0
      %v1890 = vadd.f32 %v1398, %v1889
      %v1891 = vpop.f32.mrf.mxu0
      %1892 = vmatprep.mubr.bf16.mxu0 %v1445
      %1893 = vmatmul.mubr.bf16.gmra.mxu0 %v1444
      %v1894 = vpop.f32.mrf.mxu0
      %v1895 = vadd.f32 %v1398, %v1894
      %v1896 = vpop.f32.mrf.mxu0
      %v1897 = vpop.f32.mrf.mxu0
      %v1898 = vpop.f32.mrf.mxu0
      %1899 = vdwg.mxu0
      %1900 = vmatprep.subr.bf16.mxu0 0
      %1901 = vmatpush1.bf16.msra.mxu0 %v1747
      %1902 = vmatprep.subr.bf16.mxu0 0
      %1903 = vmatpush1.bf16.msra.mxu0 %v1746
      %1904 = vmatprep.subr.bf16.mxu0 0
      %1905 = vmatpush1.bf16.msra.mxu0 %v1745
      %1906 = vmatprep.subr.bf16.mxu0 0
      %1907 = vmatpush1.bf16.msra.mxu0 %v1744
      %1908 = vmatprep.subr.bf16.mxu0 0
      %1909 = vmatpush1.bf16.msra.mxu0 %v1743
      %1910 = vmatprep.subr.bf16.mxu0 0
      %1911 = vmatpush1.bf16.msra.mxu0 %v1742
      %1912 = vmatprep.subr.bf16.mxu0 0
      %1913 = vmatpush1.bf16.msra.mxu0 %v1741
      %1914 = vmatprep.subr.bf16.mxu0 0
      %1915 = vmatpush1.bf16.msra.mxu0 %v1740
      %1916 = vmatprep.subr.bf16.mxu0 0
      %1917 = vmatpush2.bf16.msra.mxu0 %v1755
      %1918 = vmatprep.subr.bf16.mxu0 0
      %1919 = vmatpush2.bf16.msra.mxu0 %v1754
      %1920 = vmatprep.subr.bf16.mxu0 0
      %1921 = vmatpush2.bf16.msra.mxu0 %v1753
      %1922 = vmatprep.subr.bf16.mxu0 0
      %1923 = vmatpush2.bf16.msra.mxu0 %v1752
      %1924 = vmatprep.subr.bf16.mxu0 0
      %1925 = vmatpush2.bf16.msra.mxu0 %v1751
      %1926 = vmatprep.subr.bf16.mxu0 0
      %1927 = vmatpush2.bf16.msra.mxu0 %v1750
      %1928 = vmatprep.subr.bf16.mxu0 0
      %1929 = vmatpush2.bf16.msra.mxu0 %v1749
      %1930 = vmatprep.subr.bf16.mxu0 0
      %1931 = vmatpush2.bf16.msra.mxu0 %v1748
      %1932 = vmatprep.mubr.bf16.mxu0 %v1439
      %1933 = vmatmul.mubr.bf16.gmra.mxu0 %v1438
      %v1934 = vpop.f32.mrf.mxu0
      %v1935 = vadd.f32 %v1887, %v1934
      %v1936 = vpop.f32.mrf.mxu0
      %v1937 = vpop.f32.mrf.mxu0
      %v1938 = vadd.f32 %v1890, %v1937
      %v1939 = vpop.f32.mrf.mxu0
      %1940 = vmatprep.mubr.bf16.mxu0 %v1447
      %1941 = vmatmul.mubr.bf16.gmra.mxu0 %v1446
      %v1942 = vpop.f32.mrf.mxu0
      %v1943 = vadd.f32 %v1895, %v1942
      %v1944 = vpop.f32.mrf.mxu0
      %v1945 = vpop.f32.mrf.mxu0
      %v1946 = vpop.f32.mrf.mxu0
      %1947 = vdwg.mxu0
      %1948 = vmatprep.subr.bf16.mxu0 0
      %1949 = vmatpush1.bf16.msra.mxu0 %v1763
      %1950 = vmatprep.subr.bf16.mxu0 0
      %1951 = vmatpush1.bf16.msra.mxu0 %v1762
      %1952 = vmatprep.subr.bf16.mxu0 0
      %1953 = vmatpush1.bf16.msra.mxu0 %v1761
      %1954 = vmatprep.subr.bf16.mxu0 0
      %1955 = vmatpush1.bf16.msra.mxu0 %v1760
      %1956 = vmatprep.subr.bf16.mxu0 0
      %1957 = vmatpush1.bf16.msra.mxu0 %v1759
      %1958 = vmatprep.subr.bf16.mxu0 0
      %1959 = vmatpush1.bf16.msra.mxu0 %v1758
      %1960 = vmatprep.subr.bf16.mxu0 0
      %1961 = vmatpush1.bf16.msra.mxu0 %v1757
      %1962 = vmatprep.subr.bf16.mxu0 0
      %1963 = vmatpush1.bf16.msra.mxu0 %v1756
      %1964 = vmatprep.subr.bf16.mxu0 0
      %1965 = vmatpush2.bf16.msra.mxu0 %v1771
      %1966 = vmatprep.subr.bf16.mxu0 0
      %1967 = vmatpush2.bf16.msra.mxu0 %v1770
      %1968 = vmatprep.subr.bf16.mxu0 0
      %1969 = vmatpush2.bf16.msra.mxu0 %v1769
      %1970 = vmatprep.subr.bf16.mxu0 0
      %1971 = vmatpush2.bf16.msra.mxu0 %v1768
      %1972 = vmatprep.subr.bf16.mxu0 0
      %1973 = vmatpush2.bf16.msra.mxu0 %v1767
      %1974 = vmatprep.subr.bf16.mxu0 0
      %1975 = vmatpush2.bf16.msra.mxu0 %v1766
      %1976 = vmatprep.subr.bf16.mxu0 0
      %1977 = vmatpush2.bf16.msra.mxu0 %v1765
      %1978 = vmatprep.subr.bf16.mxu0 0
      %1979 = vmatpush2.bf16.msra.mxu0 %v1764
      %1980 = vmatprep.mubr.bf16.mxu0 %v1441
      %1981 = vmatmul.mubr.bf16.gmra.mxu0 %v1440
      %v1982 = vpop.f32.mrf.mxu0
      %v1983 = vadd.f32 %v1935, %v1982
      %v1984 = vpop.f32.mrf.mxu0
      %v1985 = vpop.f32.mrf.mxu0
      %v1986 = vadd.f32 %v1938, %v1985
      %v1987 = vpop.f32.mrf.mxu0
      %1988 = vmatprep.mubr.bf16.mxu0 %v1449
      %1989 = vmatmul.mubr.bf16.gmra.mxu0 %v1448
      %v1990 = vpop.f32.mrf.mxu0
      %v1991 = vadd.f32 %v1943, %v1990
      %v1992 = vpop.f32.mrf.mxu0
      %v1993 = vpop.f32.mrf.mxu0
      %v1994 = vpop.f32.mrf.mxu0
      %1995 = vdwg.mxu0
      %1996 = vmatprep.subr.bf16.mxu0 0
      %1997 = vmatpush1.bf16.msra.mxu0 %v1779
      %1998 = vmatprep.subr.bf16.mxu0 0
      %1999 = vmatpush1.bf16.msra.mxu0 %v1778
      %2000 = vmatprep.subr.bf16.mxu0 0
      %2001 = vmatpush1.bf16.msra.mxu0 %v1777
      %2002 = vmatprep.subr.bf16.mxu0 0
      %2003 = vmatpush1.bf16.msra.mxu0 %v1776
      %2004 = vmatprep.subr.bf16.mxu0 0
      %2005 = vmatpush1.bf16.msra.mxu0 %v1775
      %2006 = vmatprep.subr.bf16.mxu0 0
      %2007 = vmatpush1.bf16.msra.mxu0 %v1774
      %2008 = vmatprep.subr.bf16.mxu0 0
      %2009 = vmatpush1.bf16.msra.mxu0 %v1773
      %2010 = vmatprep.subr.bf16.mxu0 0
      %2011 = vmatpush1.bf16.msra.mxu0 %v1772
      %2012 = vmatprep.subr.bf16.mxu0 0
      %2013 = vmatpush2.bf16.msra.mxu0 %v1787
      %2014 = vmatprep.subr.bf16.mxu0 0
      %2015 = vmatpush2.bf16.msra.mxu0 %v1786
      %2016 = vmatprep.subr.bf16.mxu0 0
      %2017 = vmatpush2.bf16.msra.mxu0 %v1785
      %2018 = vmatprep.subr.bf16.mxu0 0
      %2019 = vmatpush2.bf16.msra.mxu0 %v1784
      %2020 = vmatprep.subr.bf16.mxu0 0
      %2021 = vmatpush2.bf16.msra.mxu0 %v1783
      %2022 = vmatprep.subr.bf16.mxu0 0
      %2023 = vmatpush2.bf16.msra.mxu0 %v1782
      %2024 = vmatprep.subr.bf16.mxu0 0
      %2025 = vmatpush2.bf16.msra.mxu0 %v1781
      %2026 = vmatprep.subr.bf16.mxu0 0
      %2027 = vmatpush2.bf16.msra.mxu0 %v1780
      %2028 = vmatprep.mubr.bf16.mxu0 %v1443
      %2029 = vmatmul.mubr.bf16.gmra.mxu0 %v1442
      %v2030 = vpop.f32.mrf.mxu0
      %v2031 = vadd.f32 %v1983, %v2030
      %v2032 = vpop.f32.mrf.mxu0
      %v2033 = vpop.f32.mrf.mxu0
      %v2034 = vadd.f32 %v1986, %v2033
      %v2035 = vpop.f32.mrf.mxu0
      %2036 = vmatprep.mubr.bf16.mxu0 %v1451
      %2037 = vmatmul.mubr.bf16.gmra.mxu0 %v1450
      %v2038 = vpop.f32.mrf.mxu0
      %v2039 = vadd.f32 %v1991, %v2038
      %v2040 = vpop.f32.mrf.mxu0
      %v2041 = vpop.f32.mrf.mxu0
      %v2042 = vpop.f32.mrf.mxu0
      %2043 = vdwg.mxu0
      %v2044 = vpack.c.bf16 %v2034, %v2031
      %v2045 = vpack.c.bf16 %v2039, %v2039
      %v2046 = vld [vmem:[%s488] sm:$0x1]
      %vm2047 = vcmask 146432
      %v2049 = vsel %vm2047, %v2046, 0
      %vm2051 = vcmask 1040384
      %v2053 = vsel %vm2051, %v2045, 0
      %2055 = vmatprep.subr.bf16.mxu0 0
      %2056 = vmatpush1.bf16.msra.mxu0 0
      %2057 = vmatprep.subr.bf16.mxu0 0
      %2058 = vmatpush1.bf16.msra.mxu0 0
      %2059 = vmatprep.subr.bf16.mxu0 0
      %2060 = vmatpush1.bf16.msra.mxu0 0
      %2061 = vmatprep.subr.bf16.mxu0 0
      %2062 = vmatpush1.bf16.msra.mxu0 0
      %2063 = vmatprep.subr.bf16.mxu0 0
      %2064 = vmatpush1.bf16.msra.mxu0 0
      %2065 = vmatprep.subr.bf16.mxu0 0
      %2066 = vmatpush1.bf16.msra.mxu0 0
      %2067 = vmatprep.subr.bf16.mxu0 0
      %2068 = vmatpush1.bf16.msra.mxu0 %v2053
      %2069 = vmatprep.subr.bf16.mxu0 0
      %2070 = vmatpush1.bf16.msra.mxu0 %v2044
      %2071 = vmatprep.subr.bf16.mxu0 0
      %2072 = vmatpush2.bf16.msra.mxu0 0
      %2073 = vmatprep.subr.bf16.mxu0 0
      %2074 = vmatpush2.bf16.msra.mxu0 0
      %2075 = vmatprep.subr.bf16.mxu0 0
      %2076 = vmatpush2.bf16.msra.mxu0 0
      %2077 = vmatprep.subr.bf16.mxu0 0
      %2078 = vmatpush2.bf16.msra.mxu0 0
      %2079 = vmatprep.subr.bf16.mxu0 0
      %2080 = vmatpush2.bf16.msra.mxu0 0
      %2081 = vmatprep.subr.bf16.mxu0 0
      %2082 = vmatpush2.bf16.msra.mxu0 0
      %2083 = vmatprep.subr.bf16.mxu0 0
      %2084 = vmatpush2.bf16.msra.mxu0 0
      %2085 = vmatprep.subr.bf16.mxu0 0
      %2086 = vmatpush2.bf16.msra.mxu0 0
      %2087 = vmatprep.mubr.bf16.mxu0 0
      %2088 = vmatmul.mubr.bf16.gmra.mxu0 %v2049
      %v2089 = vpop.f32.mrf.mxu0
      %v2090 = vadd.f32 0.0, %v2089
      %v2091 = vpop.f32.mrf.mxu0
      %v2092 = vpop.f32.mrf.mxu0
      %v2093 = vpop.f32.mrf.mxu0
      %2094 = vdwg.mxu0
      %s2095 = scalar_lea.vmem %s488, 1
      %v2096 = vld [vmem:[%s2095] sm:$0x1]
      %v2098 = vsel %vm2047, %v2096, 0
      %2100 = vmatprep.subr.bf16.mxu0 0
      %2101 = vmatpush1.bf16.msra.mxu0 0
      %2102 = vmatprep.subr.bf16.mxu0 0
      %2103 = vmatpush1.bf16.msra.mxu0 0
      %2104 = vmatprep.subr.bf16.mxu0 0
      %2105 = vmatpush1.bf16.msra.mxu0 0
      %2106 = vmatprep.subr.bf16.mxu0 0
      %2107 = vmatpush1.bf16.msra.mxu0 0
      %2108 = vmatprep.subr.bf16.mxu0 0
      %2109 = vmatpush1.bf16.msra.mxu0 0
      %2110 = vmatprep.subr.bf16.mxu0 0
      %2111 = vmatpush1.bf16.msra.mxu0 0
      %2112 = vmatprep.subr.bf16.mxu0 0
      %2113 = vmatpush1.bf16.msra.mxu0 %v2053
      %2114 = vmatprep.subr.bf16.mxu0 0
      %2115 = vmatpush1.bf16.msra.mxu0 %v2044
      %2116 = vmatprep.subr.bf16.mxu0 0
      %2117 = vmatpush2.bf16.msra.mxu0 0
      %2118 = vmatprep.subr.bf16.mxu0 0
      %2119 = vmatpush2.bf16.msra.mxu0 0
      %2120 = vmatprep.subr.bf16.mxu0 0
      %2121 = vmatpush2.bf16.msra.mxu0 0
      %2122 = vmatprep.subr.bf16.mxu0 0
      %2123 = vmatpush2.bf16.msra.mxu0 0
      %2124 = vmatprep.subr.bf16.mxu0 0
      %2125 = vmatpush2.bf16.msra.mxu0 0
      %2126 = vmatprep.subr.bf16.mxu0 0
      %2127 = vmatpush2.bf16.msra.mxu0 0
      %2128 = vmatprep.subr.bf16.mxu0 0
      %2129 = vmatpush2.bf16.msra.mxu0 0
      %2130 = vmatprep.subr.bf16.mxu0 0
      %2131 = vmatpush2.bf16.msra.mxu0 0
      %2132 = vmatprep.mubr.bf16.mxu0 0
      %2133 = vmatmul.mubr.bf16.gmra.mxu0 %v2098
      %v2134 = vpop.f32.mrf.mxu0
      %v2135 = vadd.f32 0.0, %v2134
      %v2136 = vpop.f32.mrf.mxu0
      %v2137 = vpop.f32.mrf.mxu0
      %v2138 = vpop.f32.mrf.mxu0
      %2139 = vdwg.mxu0
      %s2140 = scalar_lea.vmem %s488, 2
      %v2141 = vld [vmem:[%s2140] sm:$0x1]
      %v2143 = vsel %vm2047, %v2141, 0
      %2145 = vmatprep.subr.bf16.mxu0 0
      %2146 = vmatpush1.bf16.msra.mxu0 0
      %2147 = vmatprep.subr.bf16.mxu0 0
      %2148 = vmatpush1.bf16.msra.mxu0 0
      %2149 = vmatprep.subr.bf16.mxu0 0
      %2150 = vmatpush1.bf16.msra.mxu0 0
      %2151 = vmatprep.subr.bf16.mxu0 0
      %2152 = vmatpush1.bf16.msra.mxu0 0
      %2153 = vmatprep.subr.bf16.mxu0 0
      %2154 = vmatpush1.bf16.msra.mxu0 0
      %2155 = vmatprep.subr.bf16.mxu0 0
      %2156 = vmatpush1.bf16.msra.mxu0 0
      %2157 = vmatprep.subr.bf16.mxu0 0
      %2158 = vmatpush1.bf16.msra.mxu0 %v2053
      %2159 = vmatprep.subr.bf16.mxu0 0
      %2160 = vmatpush1.bf16.msra.mxu0 %v2044
      %2161 = vmatprep.subr.bf16.mxu0 0
      %2162 = vmatpush2.bf16.msra.mxu0 0
      %2163 = vmatprep.subr.bf16.mxu0 0
      %2164 = vmatpush2.bf16.msra.mxu0 0
      %2165 = vmatprep.subr.bf16.mxu0 0
      %2166 = vmatpush2.bf16.msra.mxu0 0
      %2167 = vmatprep.subr.bf16.mxu0 0
      %2168 = vmatpush2.bf16.msra.mxu0 0
      %2169 = vmatprep.subr.bf16.mxu0 0
      %2170 = vmatpush2.bf16.msra.mxu0 0
      %2171 = vmatprep.subr.bf16.mxu0 0
      %2172 = vmatpush2.bf16.msra.mxu0 0
      %2173 = vmatprep.subr.bf16.mxu0 0
      %2174 = vmatpush2.bf16.msra.mxu0 0
      %2175 = vmatprep.subr.bf16.mxu0 0
      %2176 = vmatpush2.bf16.msra.mxu0 0
      %2177 = vmatprep.mubr.bf16.mxu0 0
      %2178 = vmatmul.mubr.bf16.gmra.mxu0 %v2143
      %v2179 = vpop.f32.mrf.mxu0
      %v2180 = vadd.f32 0.0, %v2179
      %v2181 = vpop.f32.mrf.mxu0
      %v2182 = vpop.f32.mrf.mxu0
      %v2183 = vpop.f32.mrf.mxu0
      %2184 = vdwg.mxu0
      %s2185 = scalar_lea.vmem %s488, 3
      %v2186 = vld [vmem:[%s2185] sm:$0x1]
      %v2188 = vsel %vm2047, %v2186, 0
      %2190 = vmatprep.subr.bf16.mxu0 0
      %2191 = vmatpush1.bf16.msra.mxu0 0
      %2192 = vmatprep.subr.bf16.mxu0 0
      %2193 = vmatpush1.bf16.msra.mxu0 0
      %2194 = vmatprep.subr.bf16.mxu0 0
      %2195 = vmatpush1.bf16.msra.mxu0 0
      %2196 = vmatprep.subr.bf16.mxu0 0
      %2197 = vmatpush1.bf16.msra.mxu0 0
      %2198 = vmatprep.subr.bf16.mxu0 0
      %2199 = vmatpush1.bf16.msra.mxu0 0
      %2200 = vmatprep.subr.bf16.mxu0 0
      %2201 = vmatpush1.bf16.msra.mxu0 0
      %2202 = vmatprep.subr.bf16.mxu0 0
      %2203 = vmatpush1.bf16.msra.mxu0 %v2053
      %2204 = vmatprep.subr.bf16.mxu0 0
      %2205 = vmatpush1.bf16.msra.mxu0 %v2044
      %2206 = vmatprep.subr.bf16.mxu0 0
      %2207 = vmatpush2.bf16.msra.mxu0 0
      %2208 = vmatprep.subr.bf16.mxu0 0
      %2209 = vmatpush2.bf16.msra.mxu0 0
      %2210 = vmatprep.subr.bf16.mxu0 0
      %2211 = vmatpush2.bf16.msra.mxu0 0
      %2212 = vmatprep.subr.bf16.mxu0 0
      %2213 = vmatpush2.bf16.msra.mxu0 0
      %2214 = vmatprep.subr.bf16.mxu0 0
      %2215 = vmatpush2.bf16.msra.mxu0 0
      %2216 = vmatprep.subr.bf16.mxu0 0
      %2217 = vmatpush2.bf16.msra.mxu0 0
      %2218 = vmatprep.subr.bf16.mxu0 0
      %2219 = vmatpush2.bf16.msra.mxu0 0
      %2220 = vmatprep.subr.bf16.mxu0 0
      %2221 = vmatpush2.bf16.msra.mxu0 0
      %2222 = vmatprep.mubr.bf16.mxu0 0
      %2223 = vmatmul.mubr.bf16.gmra.mxu0 %v2188
      %v2224 = vpop.f32.mrf.mxu0
      %v2225 = vadd.f32 0.0, %v2224
      %v2226 = vpop.f32.mrf.mxu0
      %v2227 = vpop.f32.mrf.mxu0
      %v2228 = vpop.f32.mrf.mxu0
      %2229 = vdwg.mxu0
      %s2230 = scalar_lea.vmem %s488, 4
      %v2231 = vld [vmem:[%s2230] sm:$0x1]
      %v2233 = vsel %vm2047, %v2231, 0
      %2235 = vmatprep.subr.bf16.mxu0 0
      %2236 = vmatpush1.bf16.msra.mxu0 0
      %2237 = vmatprep.subr.bf16.mxu0 0
      %2238 = vmatpush1.bf16.msra.mxu0 0
      %2239 = vmatprep.subr.bf16.mxu0 0
      %2240 = vmatpush1.bf16.msra.mxu0 0
      %2241 = vmatprep.subr.bf16.mxu0 0
      %2242 = vmatpush1.bf16.msra.mxu0 0
      %2243 = vmatprep.subr.bf16.mxu0 0
      %2244 = vmatpush1.bf16.msra.mxu0 0
      %2245 = vmatprep.subr.bf16.mxu0 0
      %2246 = vmatpush1.bf16.msra.mxu0 0
      %2247 = vmatprep.subr.bf16.mxu0 0
      %2248 = vmatpush1.bf16.msra.mxu0 %v2053
      %2249 = vmatprep.subr.bf16.mxu0 0
      %2250 = vmatpush1.bf16.msra.mxu0 %v2044
      %2251 = vmatprep.subr.bf16.mxu0 0
      %2252 = vmatpush2.bf16.msra.mxu0 0
      %2253 = vmatprep.subr.bf16.mxu0 0
      %2254 = vmatpush2.bf16.msra.mxu0 0
      %2255 = vmatprep.subr.bf16.mxu0 0
      %2256 = vmatpush2.bf16.msra.mxu0 0
      %2257 = vmatprep.subr.bf16.mxu0 0
      %2258 = vmatpush2.bf16.msra.mxu0 0
      %2259 = vmatprep.subr.bf16.mxu0 0
      %2260 = vmatpush2.bf16.msra.mxu0 0
      %2261 = vmatprep.subr.bf16.mxu0 0
      %2262 = vmatpush2.bf16.msra.mxu0 0
      %2263 = vmatprep.subr.bf16.mxu0 0
      %2264 = vmatpush2.bf16.msra.mxu0 0
      %2265 = vmatprep.subr.bf16.mxu0 0
      %2266 = vmatpush2.bf16.msra.mxu0 0
      %2267 = vmatprep.mubr.bf16.mxu0 0
      %2268 = vmatmul.mubr.bf16.gmra.mxu0 %v2233
      %v2269 = vpop.f32.mrf.mxu0
      %v2270 = vadd.f32 0.0, %v2269
      %v2271 = vpop.f32.mrf.mxu0
      %v2272 = vpop.f32.mrf.mxu0
      %v2273 = vpop.f32.mrf.mxu0
      %2274 = vdwg.mxu0
      %s2275 = scalar_lea.vmem %s488, 5
      %v2276 = vld [vmem:[%s2275] sm:$0x1]
      %v2278 = vsel %vm2047, %v2276, 0
      %2280 = vmatprep.subr.bf16.mxu0 0
      %2281 = vmatpush1.bf16.msra.mxu0 0
      %2282 = vmatprep.subr.bf16.mxu0 0
      %2283 = vmatpush1.bf16.msra.mxu0 0
      %2284 = vmatprep.subr.bf16.mxu0 0
      %2285 = vmatpush1.bf16.msra.mxu0 0
      %2286 = vmatprep.subr.bf16.mxu0 0
      %2287 = vmatpush1.bf16.msra.mxu0 0
      %2288 = vmatprep.subr.bf16.mxu0 0
      %2289 = vmatpush1.bf16.msra.mxu0 0
      %2290 = vmatprep.subr.bf16.mxu0 0
      %2291 = vmatpush1.bf16.msra.mxu0 0
      %2292 = vmatprep.subr.bf16.mxu0 0
      %2293 = vmatpush1.bf16.msra.mxu0 %v2053
      %2294 = vmatprep.subr.bf16.mxu0 0
      %2295 = vmatpush1.bf16.msra.mxu0 %v2044
      %2296 = vmatprep.subr.bf16.mxu0 0
      %2297 = vmatpush2.bf16.msra.mxu0 0
      %2298 = vmatprep.subr.bf16.mxu0 0
      %2299 = vmatpush2.bf16.msra.mxu0 0
      %2300 = vmatprep.subr.bf16.mxu0 0
      %2301 = vmatpush2.bf16.msra.mxu0 0
      %2302 = vmatprep.subr.bf16.mxu0 0
      %2303 = vmatpush2.bf16.msra.mxu0 0
      %2304 = vmatprep.subr.bf16.mxu0 0
      %2305 = vmatpush2.bf16.msra.mxu0 0
      %2306 = vmatprep.subr.bf16.mxu0 0
      %2307 = vmatpush2.bf16.msra.mxu0 0
      %2308 = vmatprep.subr.bf16.mxu0 0
      %2309 = vmatpush2.bf16.msra.mxu0 0
      %2310 = vmatprep.subr.bf16.mxu0 0
      %2311 = vmatpush2.bf16.msra.mxu0 0
      %2312 = vmatprep.mubr.bf16.mxu0 0
      %2313 = vmatmul.mubr.bf16.gmra.mxu0 %v2278
      %v2314 = vpop.f32.mrf.mxu0
      %v2315 = vadd.f32 0.0, %v2314
      %v2316 = vpop.f32.mrf.mxu0
      %v2317 = vpop.f32.mrf.mxu0
      %v2318 = vpop.f32.mrf.mxu0
      %2319 = vdwg.mxu0
      %s2320 = scalar_lea.vmem %s488, 6
      %v2321 = vld [vmem:[%s2320] sm:$0x1]
      %v2323 = vsel %vm2047, %v2321, 0
      %2325 = vmatprep.subr.bf16.mxu0 0
      %2326 = vmatpush1.bf16.msra.mxu0 0
      %2327 = vmatprep.subr.bf16.mxu0 0
      %2328 = vmatpush1.bf16.msra.mxu0 0
      %2329 = vmatprep.subr.bf16.mxu0 0
      %2330 = vmatpush1.bf16.msra.mxu0 0
      %2331 = vmatprep.subr.bf16.mxu0 0
      %2332 = vmatpush1.bf16.msra.mxu0 0
      %2333 = vmatprep.subr.bf16.mxu0 0
      %2334 = vmatpush1.bf16.msra.mxu0 0
      %2335 = vmatprep.subr.bf16.mxu0 0
      %2336 = vmatpush1.bf16.msra.mxu0 0
      %2337 = vmatprep.subr.bf16.mxu0 0
      %2338 = vmatpush1.bf16.msra.mxu0 %v2053
      %2339 = vmatprep.subr.bf16.mxu0 0
      %2340 = vmatpush1.bf16.msra.mxu0 %v2044
      %2341 = vmatprep.subr.bf16.mxu0 0
      %2342 = vmatpush2.bf16.msra.mxu0 0
      %2343 = vmatprep.subr.bf16.mxu0 0
      %2344 = vmatpush2.bf16.msra.mxu0 0
      %2345 = vmatprep.subr.bf16.mxu0 0
      %2346 = vmatpush2.bf16.msra.mxu0 0
      %2347 = vmatprep.subr.bf16.mxu0 0
      %2348 = vmatpush2.bf16.msra.mxu0 0
      %2349 = vmatprep.subr.bf16.mxu0 0
      %2350 = vmatpush2.bf16.msra.mxu0 0
      %2351 = vmatprep.subr.bf16.mxu0 0
      %2352 = vmatpush2.bf16.msra.mxu0 0
      %2353 = vmatprep.subr.bf16.mxu0 0
      %2354 = vmatpush2.bf16.msra.mxu0 0
      %2355 = vmatprep.subr.bf16.mxu0 0
      %2356 = vmatpush2.bf16.msra.mxu0 0
      %2357 = vmatprep.mubr.bf16.mxu0 0
      %2358 = vmatmul.mubr.bf16.gmra.mxu0 %v2323
      %v2359 = vpop.f32.mrf.mxu0
      %v2360 = vadd.f32 0.0, %v2359
      %v2361 = vpop.f32.mrf.mxu0
      %v2362 = vpop.f32.mrf.mxu0
      %v2363 = vpop.f32.mrf.mxu0
      %2364 = vdwg.mxu0
      %s2365 = scalar_lea.vmem %s488, 7
      %v2366 = vld [vmem:[%s2365] sm:$0x1]
      %v2368 = vsel %vm2047, %v2366, 0
      %2370 = vmatprep.subr.bf16.mxu0 0
      %2371 = vmatpush1.bf16.msra.mxu0 0
      %2372 = vmatprep.subr.bf16.mxu0 0
      %2373 = vmatpush1.bf16.msra.mxu0 0
      %2374 = vmatprep.subr.bf16.mxu0 0
      %2375 = vmatpush1.bf16.msra.mxu0 0
      %2376 = vmatprep.subr.bf16.mxu0 0
      %2377 = vmatpush1.bf16.msra.mxu0 0
      %2378 = vmatprep.subr.bf16.mxu0 0
      %2379 = vmatpush1.bf16.msra.mxu0 0
      %2380 = vmatprep.subr.bf16.mxu0 0
      %2381 = vmatpush1.bf16.msra.mxu0 0
      %2382 = vmatprep.subr.bf16.mxu0 0
      %2383 = vmatpush1.bf16.msra.mxu0 %v2053
      %2384 = vmatprep.subr.bf16.mxu0 0
      %2385 = vmatpush1.bf16.msra.mxu0 %v2044
      %2386 = vmatprep.subr.bf16.mxu0 0
      %2387 = vmatpush2.bf16.msra.mxu0 0
      %2388 = vmatprep.subr.bf16.mxu0 0
      %2389 = vmatpush2.bf16.msra.mxu0 0
      %2390 = vmatprep.subr.bf16.mxu0 0
      %2391 = vmatpush2.bf16.msra.mxu0 0
      %2392 = vmatprep.subr.bf16.mxu0 0
      %2393 = vmatpush2.bf16.msra.mxu0 0
      %2394 = vmatprep.subr.bf16.mxu0 0
      %2395 = vmatpush2.bf16.msra.mxu0 0
      %2396 = vmatprep.subr.bf16.mxu0 0
      %2397 = vmatpush2.bf16.msra.mxu0 0
      %2398 = vmatprep.subr.bf16.mxu0 0
      %2399 = vmatpush2.bf16.msra.mxu0 0
      %2400 = vmatprep.subr.bf16.mxu0 0
      %2401 = vmatpush2.bf16.msra.mxu0 0
      %2402 = vmatprep.mubr.bf16.mxu0 0
      %2403 = vmatmul.mubr.bf16.gmra.mxu0 %v2368
      %v2404 = vpop.f32.mrf.mxu0
      %v2405 = vadd.f32 0.0, %v2404
      %v2406 = vpop.f32.mrf.mxu0
      %v2407 = vpop.f32.mrf.mxu0
      %v2408 = vpop.f32.mrf.mxu0
      %2409 = vdwg.mxu0
      %s2410 = scalar_lea.vmem %s488, 8
      %v2411 = vld [vmem:[%s2410] sm:$0x1]
      %v2413 = vsel %vm2047, %v2411, 0
      %2415 = vmatprep.subr.bf16.mxu0 0
      %2416 = vmatpush1.bf16.msra.mxu0 0
      %2417 = vmatprep.subr.bf16.mxu0 0
      %2418 = vmatpush1.bf16.msra.mxu0 0
      %2419 = vmatprep.subr.bf16.mxu0 0
      %2420 = vmatpush1.bf16.msra.mxu0 0
      %2421 = vmatprep.subr.bf16.mxu0 0
      %2422 = vmatpush1.bf16.msra.mxu0 0
      %2423 = vmatprep.subr.bf16.mxu0 0
      %2424 = vmatpush1.bf16.msra.mxu0 0
      %2425 = vmatprep.subr.bf16.mxu0 0
      %2426 = vmatpush1.bf16.msra.mxu0 0
      %2427 = vmatprep.subr.bf16.mxu0 0
      %2428 = vmatpush1.bf16.msra.mxu0 %v2053
      %2429 = vmatprep.subr.bf16.mxu0 0
      %2430 = vmatpush1.bf16.msra.mxu0 %v2044
      %2431 = vmatprep.subr.bf16.mxu0 0
      %2432 = vmatpush2.bf16.msra.mxu0 0
      %2433 = vmatprep.subr.bf16.mxu0 0
      %2434 = vmatpush2.bf16.msra.mxu0 0
      %2435 = vmatprep.subr.bf16.mxu0 0
      %2436 = vmatpush2.bf16.msra.mxu0 0
      %2437 = vmatprep.subr.bf16.mxu0 0
      %2438 = vmatpush2.bf16.msra.mxu0 0
      %2439 = vmatprep.subr.bf16.mxu0 0
      %2440 = vmatpush2.bf16.msra.mxu0 0
      %2441 = vmatprep.subr.bf16.mxu0 0
      %2442 = vmatpush2.bf16.msra.mxu0 0
      %2443 = vmatprep.subr.bf16.mxu0 0
      %2444 = vmatpush2.bf16.msra.mxu0 0
      %2445 = vmatprep.subr.bf16.mxu0 0
      %2446 = vmatpush2.bf16.msra.mxu0 0
      %2447 = vmatprep.mubr.bf16.mxu0 0
      %2448 = vmatmul.mubr.bf16.gmra.mxu0 %v2413
      %v2449 = vpop.f32.mrf.mxu0
      %v2450 = vadd.f32 0.0, %v2449
      %v2451 = vpop.f32.mrf.mxu0
      %v2452 = vpop.f32.mrf.mxu0
      %v2453 = vpop.f32.mrf.mxu0
      %2454 = vdwg.mxu0
      %v2455 = vpack.c.bf16 %v2090, %v2090
      %v2456 = vpack.c.bf16 %v2135, %v2135
      %v2457 = vpack.c.bf16 %v2180, %v2180
      %v2458 = vpack.c.bf16 %v2225, %v2225
      %v2459 = vpack.c.bf16 %v2270, %v2270
      %v2460 = vpack.c.bf16 %v2315, %v2315
      %v2461 = vpack.c.bf16 %v2360, %v2360
      %v2462 = vpack.c.bf16 %v2405, %v2405
      %v2463 = vpack.c.bf16 %v2450, %v2450
      %v2464 = vld [vmem:[%s493] sm:$0xf]
      %v2465 = vld [vmem:[%s493 + $0x4] sm:$0xf]
      %v2466 = vld [vmem:[%s493 + $0x8] sm:$0xf]
      %v2467 = vld [vmem:[%s493 + $0xc] sm:$0xf]
      %v2468 = vld [vmem:[%s493 + $0x10] sm:$0xf]
      %v2469 = vld [vmem:[%s493 + $0x14] sm:$0xf]
      %v2470 = vld [vmem:[%s493 + $0x18] sm:$0xf]
      %v2471 = vld [vmem:[%s493 + $0x1c] sm:$0xf]
      %v2472 = vld [vmem:[%s493 + $0x20] sm:$0xf]
      %v2473 = vld [vmem:[%s493 + $0x24] sm:$0xf]
      %v2474 = vld [vmem:[%s493 + $0x28] sm:$0xf]
      %v2475 = vld [vmem:[%s493 + $0x2c] sm:$0xf]
      %v2476 = vld [vmem:[%s493 + $0x30] sm:$0xf]
      %v2477 = vld [vmem:[%s493 + $0x34] sm:$0xf]
      %v2478 = vld [vmem:[%s493 + $0x38] sm:$0xf]
      %v2479 = vld [vmem:[%s493 + $0x3c] sm:$0xf]
      %v2480 = vld [vmem:[%s493 + $0x40] sm:$0xf]
      %v2481 = vld [vmem:[%s493 + $0x44] sm:$0xf]
      %v2482 = vld [vmem:[%s493 + $0x48] sm:$0xf]
      %v2483 = vld [vmem:[%s493 + $0x4c] sm:$0xf]
      %v2484 = vld [vmem:[%s493 + $0x50] sm:$0xf]
      %v2485 = vld [vmem:[%s493 + $0x54] sm:$0xf]
      %v2486 = vld [vmem:[%s493 + $0x58] sm:$0xf]
      %v2487 = vld [vmem:[%s493 + $0x5c] sm:$0xf]
      %v2488 = vld [vmem:[%s493 + $0x60] sm:$0xf]
      %v2489 = vld [vmem:[%s493 + $0x64] sm:$0xf]
      %v2490 = vld [vmem:[%s493 + $0x68] sm:$0xf]
      %v2491 = vld [vmem:[%s493 + $0x6c] sm:$0xf]
      %v2492 = vld [vmem:[%s493 + $0x70] sm:$0xf]
      %v2493 = vld [vmem:[%s493 + $0x74] sm:$0xf]
      %v2494 = vld [vmem:[%s493 + $0x78] sm:$0xf]
      %v2495 = vld [vmem:[%s493 + $0x7c] sm:$0xf]
      %v2496 = vld [vmem:[%s493 + $0x80] sm:$0xf]
      %v2497 = vld [vmem:[%s493 + $0x84] sm:$0xf]
      %v2498 = vld [vmem:[%s493 + $0x88] sm:$0xf]
      %v2499 = vld [vmem:[%s493 + $0x8c] sm:$0xf]
      %v2500 = vld [vmem:[%s493 + $0x90] sm:$0xf]
      %v2501 = vld [vmem:[%s493 + $0x94] sm:$0xf]
      %v2502 = vld [vmem:[%s493 + $0x98] sm:$0xf]
      %v2503 = vld [vmem:[%s493 + $0x9c] sm:$0xf]
      %v2504 = vld [vmem:[%s493 + $0xa0] sm:$0xf]
      %v2505 = vld [vmem:[%s493 + $0xa4] sm:$0xf]
      %v2506 = vld [vmem:[%s493 + $0xa8] sm:$0xf]
      %v2507 = vld [vmem:[%s493 + $0xac] sm:$0xf]
      %v2508 = vld [vmem:[%s493 + $0xb0] sm:$0xf]
      %v2509 = vld [vmem:[%s493 + $0xb4] sm:$0xf]
      %v2510 = vld [vmem:[%s493 + $0xb8] sm:$0xf]
      %v2511 = vld [vmem:[%s493 + $0xbc] sm:$0xf]
      %v2512 = vld [vmem:[%s493 + $0xc0] sm:$0xf]
      %v2513 = vld [vmem:[%s493 + $0xc4] sm:$0xf]
      %v2514 = vld [vmem:[%s493 + $0xc8] sm:$0xf]
      %v2515 = vld [vmem:[%s493 + $0xcc] sm:$0xf]
      %v2516 = vld [vmem:[%s493 + $0xd0] sm:$0xf]
      %v2517 = vld [vmem:[%s493 + $0xd4] sm:$0xf]
      %v2518 = vld [vmem:[%s493 + $0xd8] sm:$0xf]
      %v2519 = vld [vmem:[%s493 + $0xdc] sm:$0xf]
      %v2520 = vld [vmem:[%s493 + $0xe0] sm:$0xf]
      %v2521 = vld [vmem:[%s493 + $0xe4] sm:$0xf]
      %v2522 = vld [vmem:[%s493 + $0xe8] sm:$0xf]
      %v2523 = vld [vmem:[%s493 + $0xec] sm:$0xf]
      %v2524 = vld [vmem:[%s493 + $0xf0] sm:$0xf]
      %v2525 = vld [vmem:[%s493 + $0xf4] sm:$0xf]
      %v2526 = vld [vmem:[%s493 + $0xf8] sm:$0xf]
      %v2527 = vld [vmem:[%s493 + $0xfc] sm:$0xf]
      %v2528 = vld [vmem:[%s493 + $0x100] sm:$0xf]
      %v2529 = vld [vmem:[%s493 + $0x104] sm:$0xf]
      %v2530 = vld [vmem:[%s493 + $0x108] sm:$0xf]
      %v2531 = vld [vmem:[%s493 + $0x10c] sm:$0xf]
      %v2532 = vld [vmem:[%s493 + $0x110] sm:$0xf]
      %v2533 = vld [vmem:[%s493 + $0x114] sm:$0xf]
      %v2534 = vld [vmem:[%s493 + $0x118] sm:$0xf]
      %v2535 = vld [vmem:[%s493 + $0x11c] sm:$0xf]
      %v2536 = vld [vmem:[%s493 + $0x120] sm:$0xf]
      %v2537 = vld [vmem:[%s493 + $0x124] sm:$0xf]
      %v2538 = vld [vmem:[%s493 + $0x128] sm:$0xf]
      %v2539 = vld [vmem:[%s493 + $0x12c] sm:$0xf]
      %v2540 = vld [vmem:[%s493 + $0x130] sm:$0xf]
      %v2541 = vld [vmem:[%s493 + $0x134] sm:$0xf]
      %v2542 = vld [vmem:[%s493 + $0x138] sm:$0xf]
      %v2543 = vld [vmem:[%s493 + $0x13c] sm:$0xf]
      %v2544 = vld [vmem:[%s493 + $0x140] sm:$0xf]
      %v2545 = vld [vmem:[%s493 + $0x144] sm:$0xf]
      %v2546 = vld [vmem:[%s493 + $0x148] sm:$0xf]
      %v2547 = vld [vmem:[%s493 + $0x14c] sm:$0xf]
      %v2548 = vld [vmem:[%s493 + $0x150] sm:$0xf]
      %v2549 = vld [vmem:[%s493 + $0x154] sm:$0xf]
      %v2550 = vld [vmem:[%s493 + $0x158] sm:$0xf]
      %v2551 = vld [vmem:[%s493 + $0x15c] sm:$0xf]
      %v2552 = vld [vmem:[%s493 + $0x160] sm:$0xf]
      %v2553 = vld [vmem:[%s493 + $0x164] sm:$0xf]
      %v2554 = vld [vmem:[%s493 + $0x168] sm:$0xf]
      %v2555 = vld [vmem:[%s493 + $0x16c] sm:$0xf]
      %v2556 = vld [vmem:[%s493 + $0x170] sm:$0xf]
      %v2557 = vld [vmem:[%s493 + $0x174] sm:$0xf]
      %v2558 = vld [vmem:[%s493 + $0x178] sm:$0xf]
      %v2559 = vld [vmem:[%s493 + $0x17c] sm:$0xf]
      %v2560 = vld [vmem:[%s493 + $0x180] sm:$0xf]
      %v2561 = vld [vmem:[%s493 + $0x184] sm:$0xf]
      %v2562 = vld [vmem:[%s493 + $0x188] sm:$0xf]
      %v2563 = vld [vmem:[%s493 + $0x18c] sm:$0xf]
      %v2564 = vld [vmem:[%s493 + $0x190] sm:$0xf]
      %v2565 = vld [vmem:[%s493 + $0x194] sm:$0xf]
      %v2566 = vld [vmem:[%s493 + $0x198] sm:$0xf]
      %v2567 = vld [vmem:[%s493 + $0x19c] sm:$0xf]
      %v2568 = vld [vmem:[%s493 + $0x1a0] sm:$0xf]
      %v2569 = vld [vmem:[%s493 + $0x1a4] sm:$0xf]
      %v2570 = vld [vmem:[%s493 + $0x1a8] sm:$0xf]
      %v2571 = vld [vmem:[%s493 + $0x1ac] sm:$0xf]
      %v2572 = vld [vmem:[%s493 + $0x1b0] sm:$0xf]
      %v2573 = vld [vmem:[%s493 + $0x1b4] sm:$0xf]
      %v2574 = vld [vmem:[%s493 + $0x1b8] sm:$0xf]
      %v2575 = vld [vmem:[%s493 + $0x1bc] sm:$0xf]
      %v2576 = vld [vmem:[%s493 + $0x1c0] sm:$0xf]
      %v2577 = vld [vmem:[%s493 + $0x1c4] sm:$0xf]
      %v2578 = vld [vmem:[%s493 + $0x1c8] sm:$0xf]
      %v2579 = vld [vmem:[%s493 + $0x1cc] sm:$0xf]
      %v2580 = vld [vmem:[%s493 + $0x1d0] sm:$0xf]
      %v2581 = vld [vmem:[%s493 + $0x1d4] sm:$0xf]
      %v2582 = vld [vmem:[%s493 + $0x1d8] sm:$0xf]
      %v2583 = vld [vmem:[%s493 + $0x1dc] sm:$0xf]
      %v2584 = vld [vmem:[%s493 + $0x1e0] sm:$0xf]
      %v2585 = vld [vmem:[%s493 + $0x1e4] sm:$0xf]
      %v2586 = vld [vmem:[%s493 + $0x1e8] sm:$0xf]
      %v2587 = vld [vmem:[%s493 + $0x1ec] sm:$0xf]
      %v2588 = vld [vmem:[%s493 + $0x1f0] sm:$0xf]
      %v2589 = vld [vmem:[%s493 + $0x1f4] sm:$0xf]
      %v2590 = vld [vmem:[%s493 + $0x1f8] sm:$0xf]
      %v2591 = vld [vmem:[%s493 + $0x1fc] sm:$0xf]
      %v2592 = vld [vmem:[%s493 + $0x200] sm:$0xf]
      %v2593 = vld [vmem:[%s493 + $0x204] sm:$0xf]
      %v2594 = vld [vmem:[%s493 + $0x208] sm:$0xf]
      %v2595 = vld [vmem:[%s493 + $0x20c] sm:$0xf]
      %v2596 = vld [vmem:[%s493 + $0x210] sm:$0xf]
      %v2597 = vld [vmem:[%s493 + $0x214] sm:$0xf]
      %v2598 = vld [vmem:[%s493 + $0x218] sm:$0xf]
      %v2599 = vld [vmem:[%s493 + $0x21c] sm:$0xf]
      %v2600 = vld [vmem:[%s493 + $0x220] sm:$0xf]
      %v2601 = vld [vmem:[%s493 + $0x224] sm:$0xf]
      %v2602 = vld [vmem:[%s493 + $0x228] sm:$0xf]
      %v2603 = vld [vmem:[%s493 + $0x22c] sm:$0xf]
      %v2604 = vld [vmem:[%s493 + $0x230] sm:$0xf]
      %v2605 = vld [vmem:[%s493 + $0x234] sm:$0xf]
      %v2606 = vld [vmem:[%s493 + $0x238] sm:$0xf]
      %v2607 = vld [vmem:[%s493 + $0x23c] sm:$0xf]
      %v2608 = vld [vmem:[%s496] sm:$0x1]
      %v2610 = vlaneseq
      %v2611 = vshrl.u32 %v2610, 7
      %v2612 = vsub.s32 0, %v2611
      %v2613 = vrot.slane %v2608, %v2612
      %v2759 = vunpack.c.l.b16 %v2464
      %v2760 = vunpack.c.l.b16 %v2465
      %v2761 = vunpack.c.l.b16 %v2466
      %v2762 = vunpack.c.l.b16 %v2467
      %v2763 = vunpack.c.l.b16 %v2468
      %v2764 = vunpack.c.l.b16 %v2469
      %v2765 = vunpack.c.l.b16 %v2470
      %v2766 = vunpack.c.l.b16 %v2471
      %v2767 = vunpack.c.l.b16 %v2472
      %v2768 = vunpack.c.l.b16 %v2473
      %v2769 = vunpack.c.l.b16 %v2474
      %v2770 = vunpack.c.l.b16 %v2475
      %v2771 = vunpack.c.l.b16 %v2476
      %v2772 = vunpack.c.l.b16 %v2477
      %v2773 = vunpack.c.l.b16 %v2478
      %v2774 = vunpack.c.l.b16 %v2479
      %v2775 = vunpack.c.l.b16 %v2480
      %v2776 = vunpack.c.l.b16 %v2481
      %v2777 = vunpack.c.l.b16 %v2482
      %v2778 = vunpack.c.l.b16 %v2483
      %v2779 = vunpack.c.l.b16 %v2484
      %v2780 = vunpack.c.l.b16 %v2485
      %v2781 = vunpack.c.l.b16 %v2486
      %v2782 = vunpack.c.l.b16 %v2487
      %v2783 = vunpack.c.l.b16 %v2488
      %v2784 = vunpack.c.l.b16 %v2489
      %v2785 = vunpack.c.l.b16 %v2490
      %v2786 = vunpack.c.l.b16 %v2491
      %v2787 = vunpack.c.l.b16 %v2492
      %v2788 = vunpack.c.l.b16 %v2493
      %v2789 = vunpack.c.l.b16 %v2494
      %v2790 = vunpack.c.l.b16 %v2495
      %v2791 = vunpack.c.l.b16 %v2496
      %v2792 = vunpack.c.l.b16 %v2497
      %v2793 = vunpack.c.l.b16 %v2498
      %v2794 = vunpack.c.l.b16 %v2499
      %v2795 = vunpack.c.l.b16 %v2500
      %v2796 = vunpack.c.l.b16 %v2501
      %v2797 = vunpack.c.l.b16 %v2502
      %v2798 = vunpack.c.l.b16 %v2503
      %v2799 = vunpack.c.l.b16 %v2504
      %v2800 = vunpack.c.l.b16 %v2505
      %v2801 = vunpack.c.l.b16 %v2506
      %v2802 = vunpack.c.l.b16 %v2507
      %v2803 = vunpack.c.l.b16 %v2508
      %v2804 = vunpack.c.l.b16 %v2509
      %v2805 = vunpack.c.l.b16 %v2510
      %v2806 = vunpack.c.l.b16 %v2511
      %v2807 = vunpack.c.l.b16 %v2512
      %v2808 = vunpack.c.l.b16 %v2513
      %v2809 = vunpack.c.l.b16 %v2514
      %v2810 = vunpack.c.l.b16 %v2515
      %v2811 = vunpack.c.l.b16 %v2516
      %v2812 = vunpack.c.l.b16 %v2517
      %v2813 = vunpack.c.l.b16 %v2518
      %v2814 = vunpack.c.l.b16 %v2519
      %v2815 = vunpack.c.l.b16 %v2520
      %v2816 = vunpack.c.l.b16 %v2521
      %v2817 = vunpack.c.l.b16 %v2522
      %v2818 = vunpack.c.l.b16 %v2523
      %v2819 = vunpack.c.l.b16 %v2524
      %v2820 = vunpack.c.l.b16 %v2525
      %v2821 = vunpack.c.l.b16 %v2526
      %v2822 = vunpack.c.l.b16 %v2527
      %v2823 = vunpack.c.l.b16 %v2528
      %v2824 = vunpack.c.l.b16 %v2529
      %v2825 = vunpack.c.l.b16 %v2530
      %v2826 = vunpack.c.l.b16 %v2531
      %v2827 = vunpack.c.l.b16 %v2532
      %v2828 = vunpack.c.l.b16 %v2533
      %v2829 = vunpack.c.l.b16 %v2534
      %v2830 = vunpack.c.l.b16 %v2535
      %v2831 = vunpack.c.l.b16 %v2536
      %v2832 = vunpack.c.l.b16 %v2537
      %v2833 = vunpack.c.l.b16 %v2538
      %v2834 = vunpack.c.l.b16 %v2539
      %v2835 = vunpack.c.l.b16 %v2540
      %v2836 = vunpack.c.l.b16 %v2541
      %v2837 = vunpack.c.l.b16 %v2542
      %v2838 = vunpack.c.l.b16 %v2543
      %v2839 = vunpack.c.l.b16 %v2544
      %v2840 = vunpack.c.l.b16 %v2545
      %v2841 = vunpack.c.l.b16 %v2546
      %v2842 = vunpack.c.l.b16 %v2547
      %v2843 = vunpack.c.l.b16 %v2548
      %v2844 = vunpack.c.l.b16 %v2549
      %v2845 = vunpack.c.l.b16 %v2550
      %v2846 = vunpack.c.l.b16 %v2551
      %v2847 = vunpack.c.l.b16 %v2552
      %v2848 = vunpack.c.l.b16 %v2553
      %v2849 = vunpack.c.l.b16 %v2554
      %v2850 = vunpack.c.l.b16 %v2555
      %v2851 = vunpack.c.l.b16 %v2556
      %v2852 = vunpack.c.l.b16 %v2557
      %v2853 = vunpack.c.l.b16 %v2558
      %v2854 = vunpack.c.l.b16 %v2559
      %v2855 = vunpack.c.l.b16 %v2560
      %v2856 = vunpack.c.l.b16 %v2561
      %v2857 = vunpack.c.l.b16 %v2562
      %v2858 = vunpack.c.l.b16 %v2563
      %v2859 = vunpack.c.l.b16 %v2564
      %v2860 = vunpack.c.l.b16 %v2565
      %v2861 = vunpack.c.l.b16 %v2566
      %v2862 = vunpack.c.l.b16 %v2567
      %v2863 = vunpack.c.l.b16 %v2568
      %v2864 = vunpack.c.l.b16 %v2569
      %v2865 = vunpack.c.l.b16 %v2570
      %v2866 = vunpack.c.l.b16 %v2571
      %v2867 = vunpack.c.l.b16 %v2572
      %v2868 = vunpack.c.l.b16 %v2573
      %v2869 = vunpack.c.l.b16 %v2574
      %v2870 = vunpack.c.l.b16 %v2575
      %v2871 = vunpack.c.l.b16 %v2576
      %v2872 = vunpack.c.l.b16 %v2577
      %v2873 = vunpack.c.l.b16 %v2578
      %v2874 = vunpack.c.l.b16 %v2579
      %v2875 = vunpack.c.l.b16 %v2580
      %v2876 = vunpack.c.l.b16 %v2581
      %v2877 = vunpack.c.l.b16 %v2582
      %v2878 = vunpack.c.l.b16 %v2583
      %v2879 = vunpack.c.l.b16 %v2584
      %v2880 = vunpack.c.l.b16 %v2585
      %v2881 = vunpack.c.l.b16 %v2586
      %v2882 = vunpack.c.l.b16 %v2587
      %v2883 = vunpack.c.l.b16 %v2588
      %v2884 = vunpack.c.l.b16 %v2589
      %v2885 = vunpack.c.l.b16 %v2590
      %v2886 = vunpack.c.l.b16 %v2591
      %v2887 = vunpack.c.l.b16 %v2592
      %v2888 = vunpack.c.l.b16 %v2593
      %v2889 = vunpack.c.l.b16 %v2594
      %v2890 = vunpack.c.l.b16 %v2595
      %v2891 = vunpack.c.l.b16 %v2596
      %v2892 = vunpack.c.l.b16 %v2597
      %v2893 = vunpack.c.l.b16 %v2598
      %v2894 = vunpack.c.l.b16 %v2599
      %v2895 = vunpack.c.l.b16 %v2600
      %v2896 = vunpack.c.l.b16 %v2601
      %v2897 = vunpack.c.l.b16 %v2602
      %v2898 = vunpack.c.l.b16 %v2603
      %v2899 = vunpack.c.l.b16 %v2604
      %v2900 = vunpack.c.l.b16 %v2605
      %v2901 = vunpack.c.l.b16 %v2606
      %v2902 = vunpack.c.l.b16 %v2607
      %v2903 = vpack.c.b16 %v2760, %v2759
      %v2904 = vpack.c.b16 %v2762, %v2761
      %v2905 = vpack.c.b16 %v2764, %v2763
      %v2906 = vpack.c.b16 %v2766, %v2765
      %v2907 = vpack.c.b16 %v2768, %v2767
      %v2908 = vpack.c.b16 %v2770, %v2769
      %v2909 = vpack.c.b16 %v2772, %v2771
      %v2910 = vpack.c.b16 %v2774, %v2773
      %v2911 = vpack.c.b16 %v2776, %v2775
      %v2912 = vpack.c.b16 %v2778, %v2777
      %v2913 = vpack.c.b16 %v2780, %v2779
      %v2914 = vpack.c.b16 %v2782, %v2781
      %v2915 = vpack.c.b16 %v2784, %v2783
      %v2916 = vpack.c.b16 %v2786, %v2785
      %v2917 = vpack.c.b16 %v2788, %v2787
      %v2918 = vpack.c.b16 %v2790, %v2789
      %v2919 = vpack.c.b16 %v2792, %v2791
      %v2920 = vpack.c.b16 %v2794, %v2793
      %v2921 = vpack.c.b16 %v2796, %v2795
      %v2922 = vpack.c.b16 %v2798, %v2797
      %v2923 = vpack.c.b16 %v2800, %v2799
      %v2924 = vpack.c.b16 %v2802, %v2801
      %v2925 = vpack.c.b16 %v2804, %v2803
      %v2926 = vpack.c.b16 %v2806, %v2805
      %v2927 = vpack.c.b16 %v2808, %v2807
      %v2928 = vpack.c.b16 %v2810, %v2809
      %v2929 = vpack.c.b16 %v2812, %v2811
      %v2930 = vpack.c.b16 %v2814, %v2813
      %v2931 = vpack.c.b16 %v2816, %v2815
      %v2932 = vpack.c.b16 %v2818, %v2817
      %v2933 = vpack.c.b16 %v2820, %v2819
      %v2934 = vpack.c.b16 %v2822, %v2821
      %v2935 = vpack.c.b16 %v2824, %v2823
      %v2936 = vpack.c.b16 %v2826, %v2825
      %v2937 = vpack.c.b16 %v2828, %v2827
      %v2938 = vpack.c.b16 %v2830, %v2829
      %v2939 = vpack.c.b16 %v2832, %v2831
      %v2940 = vpack.c.b16 %v2834, %v2833
      %v2941 = vpack.c.b16 %v2836, %v2835
      %v2942 = vpack.c.b16 %v2838, %v2837
      %v2943 = vpack.c.b16 %v2840, %v2839
      %v2944 = vpack.c.b16 %v2842, %v2841
      %v2945 = vpack.c.b16 %v2844, %v2843
      %v2946 = vpack.c.b16 %v2846, %v2845
      %v2947 = vpack.c.b16 %v2848, %v2847
      %v2948 = vpack.c.b16 %v2850, %v2849
      %v2949 = vpack.c.b16 %v2852, %v2851
      %v2950 = vpack.c.b16 %v2854, %v2853
      %v2951 = vpack.c.b16 %v2856, %v2855
      %v2952 = vpack.c.b16 %v2858, %v2857
      %v2953 = vpack.c.b16 %v2860, %v2859
      %v2954 = vpack.c.b16 %v2862, %v2861
      %v2955 = vpack.c.b16 %v2864, %v2863
      %v2956 = vpack.c.b16 %v2866, %v2865
      %v2957 = vpack.c.b16 %v2868, %v2867
      %v2958 = vpack.c.b16 %v2870, %v2869
      %v2959 = vpack.c.b16 %v2872, %v2871
      %v2960 = vpack.c.b16 %v2874, %v2873
      %v2961 = vpack.c.b16 %v2876, %v2875
      %v2962 = vpack.c.b16 %v2878, %v2877
      %v2963 = vpack.c.b16 %v2880, %v2879
      %v2964 = vpack.c.b16 %v2882, %v2881
      %v2965 = vpack.c.b16 %v2884, %v2883
      %v2966 = vpack.c.b16 %v2886, %v2885
      %v2967 = vpack.c.b16 %v2888, %v2887
      %v2968 = vpack.c.b16 %v2890, %v2889
      %v2969 = vpack.c.b16 %v2892, %v2891
      %v2970 = vpack.c.b16 %v2894, %v2893
      %v2971 = vpack.c.b16 %v2896, %v2895
      %v2972 = vpack.c.b16 %v2898, %v2897
      %v2973 = vpack.c.b16 %v2900, %v2899
      %v2974 = vpack.c.b16 %v2902, %v2901
      %3047 = vmatprep.subr.bf16.mxu0 0
      %3048 = vmatpush1.bf16.msra.mxu0 %v2910
      %3049 = vmatprep.subr.bf16.mxu0 0
      %3050 = vmatpush1.bf16.msra.mxu0 %v2909
      %3051 = vmatprep.subr.bf16.mxu0 0
      %3052 = vmatpush1.bf16.msra.mxu0 %v2908
      %3053 = vmatprep.subr.bf16.mxu0 0
      %3054 = vmatpush1.bf16.msra.mxu0 %v2907
      %3055 = vmatprep.subr.bf16.mxu0 0
      %3056 = vmatpush1.bf16.msra.mxu0 %v2906
      %3057 = vmatprep.subr.bf16.mxu0 0
      %3058 = vmatpush1.bf16.msra.mxu0 %v2905
      %3059 = vmatprep.subr.bf16.mxu0 0
      %3060 = vmatpush1.bf16.msra.mxu0 %v2904
      %3061 = vmatprep.subr.bf16.mxu0 0
      %3062 = vmatpush1.bf16.msra.mxu0 %v2903
      %3063 = vmatprep.subr.bf16.mxu0 0
      %3064 = vmatpush2.bf16.msra.mxu0 %v2918
      %3065 = vmatprep.subr.bf16.mxu0 0
      %3066 = vmatpush2.bf16.msra.mxu0 %v2917
      %3067 = vmatprep.subr.bf16.mxu0 0
      %3068 = vmatpush2.bf16.msra.mxu0 %v2916
      %3069 = vmatprep.subr.bf16.mxu0 0
      %3070 = vmatpush2.bf16.msra.mxu0 %v2915
      %3071 = vmatprep.subr.bf16.mxu0 0
      %3072 = vmatpush2.bf16.msra.mxu0 %v2914
      %3073 = vmatprep.subr.bf16.mxu0 0
      %3074 = vmatpush2.bf16.msra.mxu0 %v2913
      %3075 = vmatprep.subr.bf16.mxu0 0
      %3076 = vmatpush2.bf16.msra.mxu0 %v2912
      %3077 = vmatprep.subr.bf16.mxu0 0
      %3078 = vmatpush2.bf16.msra.mxu0 %v2911
      %3079 = vmatprep.mubr.bf16.mxu0 %v2456
      %3080 = vmatmul.mubr.bf16.gmra.mxu0 %v2455
      %v3081 = vpop.f32.mrf.mxu0
      %v3082 = vadd.f32 %v2613, %v3081
      %v3083 = vpop.f32.mrf.mxu0
      %v3084 = vpop.f32.mrf.mxu0
      %v3085 = vpop.f32.mrf.mxu0
      %3086 = vdwg.mxu0
      %3087 = vmatprep.subr.bf16.mxu0 0
      %3088 = vmatpush1.bf16.msra.mxu0 %v2926
      %3089 = vmatprep.subr.bf16.mxu0 0
      %3090 = vmatpush1.bf16.msra.mxu0 %v2925
      %3091 = vmatprep.subr.bf16.mxu0 0
      %3092 = vmatpush1.bf16.msra.mxu0 %v2924
      %3093 = vmatprep.subr.bf16.mxu0 0
      %3094 = vmatpush1.bf16.msra.mxu0 %v2923
      %3095 = vmatprep.subr.bf16.mxu0 0
      %3096 = vmatpush1.bf16.msra.mxu0 %v2922
      %3097 = vmatprep.subr.bf16.mxu0 0
      %3098 = vmatpush1.bf16.msra.mxu0 %v2921
      %3099 = vmatprep.subr.bf16.mxu0 0
      %3100 = vmatpush1.bf16.msra.mxu0 %v2920
      %3101 = vmatprep.subr.bf16.mxu0 0
      %3102 = vmatpush1.bf16.msra.mxu0 %v2919
      %3103 = vmatprep.subr.bf16.mxu0 0
      %3104 = vmatpush2.bf16.msra.mxu0 %v2934
      %3105 = vmatprep.subr.bf16.mxu0 0
      %3106 = vmatpush2.bf16.msra.mxu0 %v2933
      %3107 = vmatprep.subr.bf16.mxu0 0
      %3108 = vmatpush2.bf16.msra.mxu0 %v2932
      %3109 = vmatprep.subr.bf16.mxu0 0
      %3110 = vmatpush2.bf16.msra.mxu0 %v2931
      %3111 = vmatprep.subr.bf16.mxu0 0
      %3112 = vmatpush2.bf16.msra.mxu0 %v2930
      %3113 = vmatprep.subr.bf16.mxu0 0
      %3114 = vmatpush2.bf16.msra.mxu0 %v2929
      %3115 = vmatprep.subr.bf16.mxu0 0
      %3116 = vmatpush2.bf16.msra.mxu0 %v2928
      %3117 = vmatprep.subr.bf16.mxu0 0
      %3118 = vmatpush2.bf16.msra.mxu0 %v2927
      %3119 = vmatprep.mubr.bf16.mxu0 %v2458
      %3120 = vmatmul.mubr.bf16.gmra.mxu0 %v2457
      %v3121 = vpop.f32.mrf.mxu0
      %v3122 = vadd.f32 %v3082, %v3121
      %v3123 = vpop.f32.mrf.mxu0
      %v3124 = vpop.f32.mrf.mxu0
      %v3125 = vpop.f32.mrf.mxu0
      %3126 = vdwg.mxu0
      %3127 = vmatprep.subr.bf16.mxu0 0
      %3128 = vmatpush1.bf16.msra.mxu0 %v2942
      %3129 = vmatprep.subr.bf16.mxu0 0
      %3130 = vmatpush1.bf16.msra.mxu0 %v2941
      %3131 = vmatprep.subr.bf16.mxu0 0
      %3132 = vmatpush1.bf16.msra.mxu0 %v2940
      %3133 = vmatprep.subr.bf16.mxu0 0
      %3134 = vmatpush1.bf16.msra.mxu0 %v2939
      %3135 = vmatprep.subr.bf16.mxu0 0
      %3136 = vmatpush1.bf16.msra.mxu0 %v2938
      %3137 = vmatprep.subr.bf16.mxu0 0
      %3138 = vmatpush1.bf16.msra.mxu0 %v2937
      %3139 = vmatprep.subr.bf16.mxu0 0
      %3140 = vmatpush1.bf16.msra.mxu0 %v2936
      %3141 = vmatprep.subr.bf16.mxu0 0
      %3142 = vmatpush1.bf16.msra.mxu0 %v2935
      %3143 = vmatprep.subr.bf16.mxu0 0
      %3144 = vmatpush2.bf16.msra.mxu0 %v2950
      %3145 = vmatprep.subr.bf16.mxu0 0
      %3146 = vmatpush2.bf16.msra.mxu0 %v2949
      %3147 = vmatprep.subr.bf16.mxu0 0
      %3148 = vmatpush2.bf16.msra.mxu0 %v2948
      %3149 = vmatprep.subr.bf16.mxu0 0
      %3150 = vmatpush2.bf16.msra.mxu0 %v2947
      %3151 = vmatprep.subr.bf16.mxu0 0
      %3152 = vmatpush2.bf16.msra.mxu0 %v2946
      %3153 = vmatprep.subr.bf16.mxu0 0
      %3154 = vmatpush2.bf16.msra.mxu0 %v2945
      %3155 = vmatprep.subr.bf16.mxu0 0
      %3156 = vmatpush2.bf16.msra.mxu0 %v2944
      %3157 = vmatprep.subr.bf16.mxu0 0
      %3158 = vmatpush2.bf16.msra.mxu0 %v2943
      %3159 = vmatprep.mubr.bf16.mxu0 %v2460
      %3160 = vmatmul.mubr.bf16.gmra.mxu0 %v2459
      %v3161 = vpop.f32.mrf.mxu0
      %v3162 = vadd.f32 %v3122, %v3161
      %v3163 = vpop.f32.mrf.mxu0
      %v3164 = vpop.f32.mrf.mxu0
      %v3165 = vpop.f32.mrf.mxu0
      %3166 = vdwg.mxu0
      %3167 = vmatprep.subr.bf16.mxu0 0
      %3168 = vmatpush1.bf16.msra.mxu0 %v2958
      %3169 = vmatprep.subr.bf16.mxu0 0
      %3170 = vmatpush1.bf16.msra.mxu0 %v2957
      %3171 = vmatprep.subr.bf16.mxu0 0
      %3172 = vmatpush1.bf16.msra.mxu0 %v2956
      %3173 = vmatprep.subr.bf16.mxu0 0
      %3174 = vmatpush1.bf16.msra.mxu0 %v2955
      %3175 = vmatprep.subr.bf16.mxu0 0
      %3176 = vmatpush1.bf16.msra.mxu0 %v2954
      %3177 = vmatprep.subr.bf16.mxu0 0
      %3178 = vmatpush1.bf16.msra.mxu0 %v2953
      %3179 = vmatprep.subr.bf16.mxu0 0
      %3180 = vmatpush1.bf16.msra.mxu0 %v2952
      %3181 = vmatprep.subr.bf16.mxu0 0
      %3182 = vmatpush1.bf16.msra.mxu0 %v2951
      %3183 = vmatprep.subr.bf16.mxu0 0
      %3184 = vmatpush2.bf16.msra.mxu0 %v2966
      %3185 = vmatprep.subr.bf16.mxu0 0
      %3186 = vmatpush2.bf16.msra.mxu0 %v2965
      %3187 = vmatprep.subr.bf16.mxu0 0
      %3188 = vmatpush2.bf16.msra.mxu0 %v2964
      %3189 = vmatprep.subr.bf16.mxu0 0
      %3190 = vmatpush2.bf16.msra.mxu0 %v2963
      %3191 = vmatprep.subr.bf16.mxu0 0
      %3192 = vmatpush2.bf16.msra.mxu0 %v2962
      %3193 = vmatprep.subr.bf16.mxu0 0
      %3194 = vmatpush2.bf16.msra.mxu0 %v2961
      %3195 = vmatprep.subr.bf16.mxu0 0
      %3196 = vmatpush2.bf16.msra.mxu0 %v2960
      %3197 = vmatprep.subr.bf16.mxu0 0
      %3198 = vmatpush2.bf16.msra.mxu0 %v2959
      %3199 = vmatprep.mubr.bf16.mxu0 %v2462
      %3200 = vmatmul.mubr.bf16.gmra.mxu0 %v2461
      %v3201 = vpop.f32.mrf.mxu0
      %v3202 = vadd.f32 %v3162, %v3201
      %v3203 = vpop.f32.mrf.mxu0
      %v3204 = vpop.f32.mrf.mxu0
      %v3205 = vpop.f32.mrf.mxu0
      %3206 = vdwg.mxu0
      %3207 = vmatprep.subr.bf16.mxu0 0
      %3208 = vmatpush1.bf16.msra.mxu0 %v2974
      %3209 = vmatprep.subr.bf16.mxu0 0
      %3210 = vmatpush1.bf16.msra.mxu0 %v2973
      %3211 = vmatprep.subr.bf16.mxu0 0
      %3212 = vmatpush1.bf16.msra.mxu0 %v2972
      %3213 = vmatprep.subr.bf16.mxu0 0
      %3214 = vmatpush1.bf16.msra.mxu0 %v2971
      %3215 = vmatprep.subr.bf16.mxu0 0
      %3216 = vmatpush1.bf16.msra.mxu0 %v2970
      %3217 = vmatprep.subr.bf16.mxu0 0
      %3218 = vmatpush1.bf16.msra.mxu0 %v2969
      %3219 = vmatprep.subr.bf16.mxu0 0
      %3220 = vmatpush1.bf16.msra.mxu0 %v2968
      %3221 = vmatprep.subr.bf16.mxu0 0
      %3222 = vmatpush1.bf16.msra.mxu0 %v2967
      %3223 = vmatprep.subr.bf16.mxu0 0
      %3224 = vmatpush2.bf16.msra.mxu0 0
      %3225 = vmatprep.subr.bf16.mxu0 0
      %3226 = vmatpush2.bf16.msra.mxu0 0
      %3227 = vmatprep.subr.bf16.mxu0 0
      %3228 = vmatpush2.bf16.msra.mxu0 0
      %3229 = vmatprep.subr.bf16.mxu0 0
      %3230 = vmatpush2.bf16.msra.mxu0 0
      %3231 = vmatprep.subr.bf16.mxu0 0
      %3232 = vmatpush2.bf16.msra.mxu0 0
      %3233 = vmatprep.subr.bf16.mxu0 0
      %3234 = vmatpush2.bf16.msra.mxu0 0
      %3235 = vmatprep.subr.bf16.mxu0 0
      %3236 = vmatpush2.bf16.msra.mxu0 0
      %3237 = vmatprep.subr.bf16.mxu0 0
      %3238 = vmatpush2.bf16.msra.mxu0 0
      %3239 = vmatprep.mubr.bf16.mxu0 0
      %3240 = vmatmul.mubr.bf16.gmra.mxu0 %v2463
      %v3241 = vpop.f32.mrf.mxu0
      %v3242 = vadd.f32 %v3202, %v3241
      %v3243 = vpop.f32.mrf.mxu0
      %v3244 = vpop.f32.mrf.mxu0
      %v3245 = vpop.f32.mrf.mxu0
      %3246 = vdwg.mxu0
      %v3247 = vmul.f32 %v3242, %v3242
      %v3248 = vsel %vm1245, %v3247, 0.0
      %3249 = vadd.xlane.f32.xlu0 %v3248
      %v3250 = vpop.xlane.xlu0 %3249
      %v3251 = vmax.f32 %v3250, 1e-24
      %v3252 = vrsqrt.pop %v3251
      %v3253 = vmul.f32 %v3242, %v3252
      %3254 = vst [vmem:[%s504] sm:$0x3] %v3253
      %p3255 = scmp.lt.s32.totalorder %s22, 1
      %s3256 = scalar_select %p3255, %s22, 1
      %s3257 = smul.addr %s3256, 2
      %s3258 = scalar_lea.vmem %s9, %s3257
      %p3259 = scmp.lt.s32.totalorder %s22, 1
      %s3260 = scalar_select %p3259, %s22, 1
      %s3261 = smul.addr %s3260, 2
      %s3262 = scalar_lea.vmem %s10, %s3261
      // Predicated region
      $region57: #{cmc_multiheads_forward.3} parent=55 // pred_check
        %p3263 = pneg %p274
      $region58: #{cmc_multiheads_forward.3} parent=55 // pred_check_branch
        %3265 = sbr.rel (%p3263) target = $region60
      $region59: #{cmc_multiheads_forward.3} parent=55 // pred_region
        _
      $region60: #{cmc_multiheads_forward.3} parent=55 // pred_fallthru
        _
      // Predicated region
      $region61: #{cmc_multiheads_forward.3} parent=55 // pred_check
        %p3266 = pneg %p300
      $region62: #{cmc_multiheads_forward.3} parent=55 // pred_check_branch
        %3268 = sbr.rel (%p3266) target = $region64
      $region63: #{cmc_multiheads_forward.3} parent=55 // pred_region
        _
      $region64: #{cmc_multiheads_forward.3} parent=55 // pred_fallthru
        _
    $region56: #{cmc_multiheads_forward.3} parent=5 // pred_fallthru
      _
    %p3269 = scmp.le.s32.totalorder 2, %s17
    // Predicated region
    $region65: #{cmc_multiheads_forward.3} parent=5 // pred_check
      %p3270 = pneg %p3269
    $region66: #{cmc_multiheads_forward.3} parent=5 // pred_check_branch
      %3272 = sbr.rel (%p3270) target = $region68
    $region67: #{cmc_multiheads_forward.3} parent=5 // pred_region
      %s3273 = ssub.s32 %s17, 2
      // Predicated region
      $region69: #{cmc_multiheads_forward.3} parent=67 // pred_check
        %p3274 = pneg %p280
      $region70: #{cmc_multiheads_forward.3} parent=67 // pred_check_branch
        %3276 = sbr.rel (%p3274) target = $region72
      $region71: #{cmc_multiheads_forward.3} parent=67 // pred_region
        %p3277 = scmp.lt.s32.totalorder %s23, 1
        %s3278 = scalar_select %p3277, %s23, 1
        %s3279 = smul.addr %s3278, 2
        %s3280 = scalar_lea.vmem %s9, %s3279
      $region72: #{cmc_multiheads_forward.3} parent=67 // pred_fallthru
        _
      // Predicated region
      $region73: #{cmc_multiheads_forward.3} parent=67 // pred_check
        %p3281 = pneg %p306
      $region74: #{cmc_multiheads_forward.3} parent=67 // pred_check_branch
        %3283 = sbr.rel (%p3281) target = $region76
      $region75: #{cmc_multiheads_forward.3} parent=67 // pred_region
        %p3284 = scmp.lt.s32.totalorder %s23, 1
        %s3285 = scalar_select %p3284, %s23, 1
        %s3286 = smul.addr %s3285, 2
        %s3287 = scalar_lea.vmem %s10, %s3286
      $region76: #{cmc_multiheads_forward.3} parent=67 // pred_fallthru
        _
    $region68: #{cmc_multiheads_forward.3} parent=5 // pred_fallthru
      _
  $region6: #{cmc_multiheads_forward.3} parent=0 // loop_footer
    %s21 = sadd.s32 1, %s17
  $region7: #{cmc_multiheads_forward.3} parent=0 // loop_footer_branch
    %16 = sbr.rel target = $region3
  $region8: #{cmc_multiheads_forward.3} parent=0 // loop_exit
    _

</llo_original>
